<compile_context>
chip_gen: v6e
topology: v6e:2x2x1
jax: 0.10.0
libtpu: 0.0.40
codegen_flags: <defaults>
</compile_context>

<pallas_src>
import functools

import jax
import jax.numpy as jnp
from jax.experimental import pallas as pl
from jax.experimental.pallas import tpu as pltpu

EPS = 1e-5
LANE = 128                       # TPU lane width; channel dims are padded to this.
VMEM_LIMIT = 64 * 1024 * 1024    # raise scoped-VMEM cap (re-derive tiles for v7x's 64 MiB).


def _round_up(x, m):
    return (x + m - 1) // m * m


# ---------------------------------------------------------------------------
# Kernel 1: 3x3 conv (+bias) on a row tile, with (optionally) the *previous*
# stage's BatchNorm+ReLU fused into the input path, plus per-tile BatchNorm
# partial statistics (sum, sum_sq) of the raw conv output.
# ---------------------------------------------------------------------------
def conv_stats_kernel(xb_ref, xt_ref, xu_ref, w_ref, b_ref, sc_ref, sh_ref,
                      y_ref, st_ref, xs_ref, pt_ref, *, apply_input_act):
    """
    xb_ref : (1, TH, W, Ci)   body rows of the input tile (auto-pipelined)
    xt_ref : (1, 1,  W, Ci)   row above the tile (index clamped at the top border)
    xu_ref : (1, 1,  W, Ci)   row below the tile (index clamped at the bottom border)
    w_ref  : (9*Ci, Co)       3x3 weights folded for a single K = 9*Ci matmul
    b_ref  : (1, Co)          conv bias
    sc_ref, sh_ref : (1, Ci)  previous stage's BN scale/shift (used iff apply_input_act)
    y_ref  : (1, TH, W, Co)   raw conv output (pre-BN), lane-dense
    st_ref : (1, 1, 2, Co)    per-tile [sum, sum_sq] of the raw conv output
    xs_ref : (TH+2, W+2, Ci)  VMEM scratch: zero-padded input slab (in-kernel halo)
    pt_ref : (TH*W, 9*Ci)     VMEM scratch: im2col patch matrix
    """
    t = pl.program_id(1)
    num_t = pl.num_programs(1)
    th_p2, w_p2, ci = xs_ref.shape
    th, w = th_p2 - 2, w_p2 - 2
    co = y_ref.shape[-1]

    def act(v):
        # Previous stage's BatchNorm + ReLU, fused into this stage's input path.
        if apply_input_act:
            return jnp.maximum(v * sc_ref[...] + sh_ref[...], 0.0)
        return v

    # ---- assemble the zero-padded (TH+2, W+2, Ci) slab in VMEM (halo in-kernel) ----
    zero_col = jnp.zeros((th_p2, 1, ci), xs_ref.dtype)
    xs_ref[:, 0:1, :] = zero_col                     # left  pad column
    xs_ref[:, w + 1:w + 2, :] = zero_col             # right pad column
    xs_ref[1:th + 1, 1:w + 1, :] = act(xb_ref[0])    # body rows
    # Halo rows: real neighbour-tile data, zeros at the image border.
    xs_ref[0:1, 1:w + 1, :] = jnp.where(t > 0, act(xt_ref[0]), 0.0)
    xs_ref[th + 1:th + 2, 1:w + 1, :] = jnp.where(t < num_t - 1, act(xu_ref[0]), 0.0)

    # ---- im2col: fold the 9 taps into ONE K = 9*Ci MXU matmul ----
    for dy in range(3):
        for dx in range(3):
            k = dy * 3 + dx
            tap = xs_ref[dy:dy + th, dx:dx + w, :].reshape(th * w, ci)
            pt_ref[:, k * ci:(k + 1) * ci] = tap.astype(pt_ref.dtype)

    y = jnp.dot(pt_ref[...], w_ref[...], preferred_element_type=jnp.float32)
    y = y + b_ref[...].astype(jnp.float32)           # (TH*W, Co)

    # ---- per-tile BatchNorm partials (global reduction finished in the wrapper) ----
    s1 = jnp.sum(y, axis=0, keepdims=True)
    s2 = jnp.sum(y * y, axis=0, keepdims=True)
    st_ref[0:1, 0:1, 0:1, :] = s1.reshape(1, 1, 1, co)
    st_ref[0:1, 0:1, 1:2, :] = s2.reshape(1, 1, 1, co)

    y_ref[...] = y.reshape(1, th, w, co).astype(y_ref.dtype)


# ---------------------------------------------------------------------------
# Kernel 2: elementwise BatchNorm(scale, shift) + ReLU (final-stage epilogue).
# ---------------------------------------------------------------------------
def bn_relu_kernel(y_ref, sc_ref, sh_ref, o_ref):
    o_ref[...] = jnp.maximum(y_ref[...] * sc_ref[...] + sh_ref[...],
                             0.0).astype(o_ref.dtype)


# ---------------------------------------------------------------------------
# Per-stage drivers.
# ---------------------------------------------------------------------------
def _conv_stats(x, w2d, b, sc_in, sh_in, *, apply_input_act, row_tile):
    n, h, w, ci = x.shape
    co = w2d.shape[-1]
    th = row_tile
    num_t = h // th

    kernel = functools.partial(conv_stats_kernel, apply_input_act=apply_input_act)
    return pl.pallas_call(
        kernel,
        out_shape=(jax.ShapeDtypeStruct((n, h, w, co), jnp.float32),
                   jax.ShapeDtypeStruct((n, num_t, 2, co), jnp.float32)),
        grid_spec=pltpu.PrefetchScalarGridSpec(
            num_scalar_prefetch=0,
            grid=(n, num_t),
            in_specs=[
                # body rows of the tile
                pl.BlockSpec((1, th, w, ci), lambda i, t: (i, t, 0, 0)),
                # one-row halo above / below (clamped at the border; masked in-kernel)
                pl.BlockSpec((1, 1, w, ci),
                             lambda i, t: (i, jnp.maximum(t * th - 1, 0), 0, 0)),
                pl.BlockSpec((1, 1, w, ci),
                             lambda i, t: (i, jnp.minimum((t + 1) * th, h - 1), 0, 0)),
                # folded weights / bias / previous-stage BN scale+shift (resident)
                pl.BlockSpec((9 * ci, co), lambda i, t: (0, 0)),
                pl.BlockSpec((1, co), lambda i, t: (0, 0)),
                pl.BlockSpec((1, ci), lambda i, t: (0, 0)),
                pl.BlockSpec((1, ci), lambda i, t: (0, 0)),
            ],
            out_specs=[
                pl.BlockSpec((1, th, w, co), lambda i, t: (i, t, 0, 0)),
                pl.BlockSpec((1, 1, 2, co), lambda i, t: (i, t, 0, 0)),
            ],
            scratch_shapes=[
                pltpu.VMEM((th + 2, w + 2, ci), jnp.float32),   # padded input slab
                pltpu.VMEM((th * w, 9 * ci), w2d.dtype),        # im2col patches
            ],
        ),
        compiler_params=pltpu.CompilerParams(
            dimension_semantics=("parallel", "parallel"),
            vmem_limit_bytes=VMEM_LIMIT),
    )(x, x, x, w2d, b, sc_in, sh_in)


def _bn_relu(y, sc, sh, *, row_tile):
    n, h, w, c = y.shape
    th = row_tile
    num_t = h // th
    return pl.pallas_call(
        bn_relu_kernel,
        out_shape=jax.ShapeDtypeStruct((n, h, w, c), jnp.float32),
        grid_spec=pltpu.PrefetchScalarGridSpec(
            num_scalar_prefetch=0,
            grid=(n, num_t),
            in_specs=[
                pl.BlockSpec((1, th, w, c), lambda i, t: (i, t, 0, 0)),
                pl.BlockSpec((1, c), lambda i, t: (0, 0)),
                pl.BlockSpec((1, c), lambda i, t: (0, 0)),
            ],
            out_specs=pl.BlockSpec((1, th, w, c), lambda i, t: (i, t, 0, 0)),
        ),
        compiler_params=pltpu.CompilerParams(
            dimension_semantics=("parallel", "parallel"),
            vmem_limit_bytes=VMEM_LIMIT),
    )(y, sc, sh)


def _bn_scale_shift(stats, count, gamma_p, beta_p):
    """Finish the split BatchNorm reduction (tiny, wrapper-side, f32)."""
    s = jnp.sum(stats[:, :, 0, :], axis=(0, 1))
    ss = jnp.sum(stats[:, :, 1, :], axis=(0, 1))
    mean = s / count
    var = jnp.maximum(ss / count - mean * mean, 0.0)   # biased (training-mode) variance
    scale = gamma_p * jax.lax.rsqrt(var + EPS)          # (1, C)
    shift = beta_p - mean * scale                       # (1, C)
    return scale, shift


# ---------------------------------------------------------------------------
# Parameter plumbing (wrapper-side, tiny): HWIO -> (9*Ci_p, Co_p), lane padding.
# ---------------------------------------------------------------------------
def _prep_weight(w_hwio, ci_p, co_p, dtype):
    kh, kw, ci, co = w_hwio.shape
    wp = jnp.zeros((kh, kw, ci_p, co_p), jnp.float32)
    wp = wp.at[:, :, :ci, :co].set(w_hwio.astype(jnp.float32))
    # Row order matches the kernel's im2col: row = (dy*3 + dx) * Ci_p + c.
    return wp.reshape(kh * kw * ci_p, co_p).astype(dtype)


def _prep_vec(v, c_p):
    out = jnp.zeros((1, c_p), jnp.float32)
    return out.at[0, :v.shape[0]].set(v.astype(jnp.float32))


def conv_block_forward(x_nchw, params, *, row_tile=8, matmul_dtype=jnp.float32):
    """conv_block forward.  Input/output are NCHW like the PyTorch module.

    matmul_dtype: set to jnp.bfloat16 on v6e/v7x for the native MXU path
    (kept float32 by default so the self-test matches the f32 reference).
    """
    n, c_in, h, w = x_nchw.shape
    c_out = params["w1"].shape[-1]
    ci_p = _round_up(c_in, LANE)
    co_p = _round_up(c_out, LANE)
    th = row_tile if h % row_tile == 0 else h

    # Layout plumbing: NCHW -> NHWC, channels zero-padded to the 128-lane width so
    # every kernel block is lane-dense.  (No spatial jnp.pad: the conv halo is
    # assembled inside the kernel.)
    x = jnp.transpose(x_nchw, (0, 2, 3, 1)).astype(jnp.float32)
    x = jnp.pad(x, ((0, 0), (0, 0), (0, 0), (0, ci_p - c_in)))

    w1 = _prep_weight(params["w1"], ci_p, co_p, matmul_dtype)
    w2 = _prep_weight(params["w2"], co_p, co_p, matmul_dtype)
    b1, b2 = _prep_vec(params["b1"], co_p), _prep_vec(params["b2"], co_p)
    g1, g2 = _prep_vec(params["g1"], co_p), _prep_vec(params["g2"], co_p)
    be1, be2 = _prep_vec(params["be1"], co_p), _prep_vec(params["be2"], co_p)

    count = float(n * h * w)
    one_in = jnp.ones((1, ci_p), jnp.float32)
    zero_in = jnp.zeros((1, ci_p), jnp.float32)

    # Stage 1: conv1 (+bias) and its BatchNorm partial stats.
    y1, st1 = _conv_stats(x, w1, b1, one_in, zero_in,
                          apply_input_act=False, row_tile=th)
    sc1, sh1 = _bn_scale_shift(st1, count, g1, be1)

    # Stage 2: conv2 with stage-1's BN+ReLU fused into its input path
    # (no separate normalize pass / extra HBM round trip of y1).
    y2, st2 = _conv_stats(y1, w2, b2, sc1, sh1,
                          apply_input_act=True, row_tile=th)
    sc2, sh2 = _bn_scale_shift(st2, count, g2, be2)

    # Final BatchNorm + ReLU (lane-dense elementwise kernel).
    z = _bn_relu(y2, sc2, sh2, row_tile=th)

    # Strip the channel padding and go back to NCHW.
    return jnp.transpose(z[:, :, :, :c_out], (0, 3, 1, 2))


# ------------------------- pure-JAX reference ------------------------------
def _ref_stage(x_nhwc, w, b, gamma, beta):
    y = jax.lax.conv_general_dilated(
        x_nhwc, w, window_strides=(1, 1), padding="SAME",
        dimension_numbers=("NHWC", "HWIO", "NHWC"))
    y = y + b.reshape(1, 1, 1, -1)
    mean = jnp.mean(y, axis=(0, 1, 2), keepdims=True)
    var = jnp.mean((y - mean) ** 2, axis=(0, 1, 2), keepdims=True)
    y = (y - mean) * jax.lax.rsqrt(var + EPS)
    y = y * gamma.reshape(1, 1, 1, -1) + beta.reshape(1, 1, 1, -1)
    return jnp.maximum(y, 0.0)


def conv_block_ref(x_nchw, params):
    x = jnp.transpose(x_nchw, (0, 2, 3, 1))
    x = _ref_stage(x, params["w1"], params["b1"], params["g1"], params["be1"])
    x = _ref_stage(x, params["w2"], params["b2"], params["g2"], params["be2"])
    return jnp.transpose(x, (0, 3, 1, 2))


if __name__ == "__main__":
    N, C_IN, C_OUT, H, W = 2, 4, 8, 16, 16

    key = jax.random.PRNGKey(0)
    kx, kw1, kb1, kg1, kbe1, kw2, kb2, kg2, kbe2 = jax.random.split(key, 9)

    x = jax.random.normal(kx, (N, C_IN, H, W), dtype=jnp.float32)

    params = {
        # Conv weights stored HWIO (3,3,Cin,Cout); PyTorch equivalent is OIHW.
        "w1": jax.random.normal(kw1, (3, 3, C_IN, C_OUT), jnp.float32) * 0.1,
        "b1": jax.random.normal(kb1, (C_OUT,), jnp.float32) * 0.1,
        "g1": 1.0 + 0.1 * jax.random.normal(kg1, (C_OUT,), jnp.float32),
        "be1": 0.1 * jax.random.normal(kbe1, (C_OUT,), jnp.float32),
        "w2": jax.random.normal(kw2, (3, 3, C_OUT, C_OUT), jnp.float32) * 0.1,
        "b2": jax.random.normal(kb2, (C_OUT,), jnp.float32) * 0.1,
        "g2": 1.0 + 0.1 * jax.random.normal(kg2, (C_OUT,), jnp.float32),
        "be2": 0.1 * jax.random.normal(kbe2, (C_OUT,), jnp.float32),
    }

    fwd = jax.jit(conv_block_forward)
    out = jax.block_until_ready(fwd(x, params))
    ref = jax.block_until_ready(conv_block_ref(x, params))

    assert out.shape == (N, C_OUT, H, W), out.shape
    max_err = float(jnp.max(jnp.abs(out - ref)))
    assert jnp.allclose(out, ref, atol=2e-4, rtol=2e-4), max_err
    print("KERNEL_OK")
</pallas_src>

<mosaic_0001>
module attributes {stable_mosaic.version = 11 : i64} {
  func.func @conv_stats_kernel(%arg0: i32, %arg1: i32, %arg2: memref<1x8x16x128xf32, #tpu.memory_space<vmem>>, %arg3: memref<1x1x16x128xf32, #tpu.memory_space<vmem>>, %arg4: memref<1x1x16x128xf32, #tpu.memory_space<vmem>>, %arg5: memref<1152x128xf32, #tpu.memory_space<vmem>>, %arg6: memref<1x128xf32, #tpu.memory_space<vmem>>, %arg7: memref<1x128xf32, #tpu.memory_space<vmem>>, %arg8: memref<1x128xf32, #tpu.memory_space<vmem>>, %arg9: memref<1x8x16x128xf32, #tpu.memory_space<vmem>>, %arg10: memref<1x1x2x128xf32, #tpu.memory_space<vmem>>, %arg11: memref<10x18x128xf32, #tpu.memory_space<vmem>>, %arg12: memref<128x1152xf32, #tpu.memory_space<vmem>>) attributes {dimension_semantics = [#tpu.dimension_semantics<parallel>, #tpu.dimension_semantics<parallel>], iteration_bounds = array<i64: 2, 2>, scalar_prefetch = 0 : i64, scratch_operands = 2 : i64, tpu.core_type = #tpu.core_type<tc>, window_params = [{transform_indices = @transform_0, window_bounds = array<i64: 1, 8, 16, 128>}, {transform_indices = @transform_1, window_bounds = array<i64: 1, 1, 16, 128>}, {transform_indices = @transform_2, window_bounds = array<i64: 1, 1, 16, 128>}, {pipeline_mode = #tpu.pipeline_mode<synchronous>, transform_indices = @transform_3, window_bounds = array<i64: 1152, 128>}, {pipeline_mode = #tpu.pipeline_mode<synchronous>, transform_indices = @transform_4, window_bounds = array<i64: 1, 128>}, {pipeline_mode = #tpu.pipeline_mode<synchronous>, transform_indices = @transform_5, window_bounds = array<i64: 1, 128>}, {pipeline_mode = #tpu.pipeline_mode<synchronous>, transform_indices = @transform_6, window_bounds = array<i64: 1, 128>}, {transform_indices = @transform_7, window_bounds = array<i64: 1, 8, 16, 128>}, {transform_indices = @transform_8, window_bounds = array<i64: 1, 1, 2, 128>}]} {
    %cst = arith.constant 0.000000e+00 : f32
    %0 = vector.broadcast %cst : f32 to vector<10x1x128xf32>
    %c0 = arith.constant 0 : index
    %c0_0 = arith.constant 0 : index
    %c0_1 = arith.constant 0 : index
    %1 = vector.load %arg11[%c0, %c0_0, %c0_1] : memref<10x18x128xf32, #tpu.memory_space<vmem>>, vector<10x1x128xf32>
    tpu.vector_store %arg11[%c0, %c0_0, %c0_1], %0 {strides = array<i32>} : memref<10x18x128xf32, #tpu.memory_space<vmem>>, vector<10x1x128xf32>,
    %c0_2 = arith.constant 0 : index
    %c17 = arith.constant 17 : index
    %c0_3 = arith.constant 0 : index
    %2 = vector.load %arg11[%c0_2, %c17, %c0_3] : memref<10x18x128xf32, #tpu.memory_space<vmem>>, vector<10x1x128xf32>
    tpu.vector_store %arg11[%c0_2, %c17, %c0_3], %0 {strides = array<i32>} : memref<10x18x128xf32, #tpu.memory_space<vmem>>, vector<10x1x128xf32>,
    %c0_4 = arith.constant 0 : index
    %c0_5 = arith.constant 0 : index
    %c0_6 = arith.constant 0 : index
    %c0_7 = arith.constant 0 : index
    %3 = vector.load %arg2[%c0_4, %c0_5, %c0_6, %c0_7] : memref<1x8x16x128xf32, #tpu.memory_space<vmem>>, vector<1x8x16x128xf32>
    %4 = vector.shape_cast %3 : vector<1x8x16x128xf32> to vector<8x16x128xf32>
    %c1 = arith.constant 1 : index
    %c1_8 = arith.constant 1 : index
    %c0_9 = arith.constant 0 : index
    %5 = vector.load %arg11[%c1, %c1_8, %c0_9] : memref<10x18x128xf32, #tpu.memory_space<vmem>>, vector<8x16x128xf32>
    tpu.vector_store %arg11[%c1, %c1_8, %c0_9], %4 {strides = array<i32>} : memref<10x18x128xf32, #tpu.memory_space<vmem>>, vector<8x16x128xf32>,
    %c0_i32 = arith.constant 0 : i32
    %6 = arith.cmpi sgt, %arg1, %c0_i32 : i32
    %c0_10 = arith.constant 0 : index
    %c0_11 = arith.constant 0 : index
    %c0_12 = arith.constant 0 : index
    %c0_13 = arith.constant 0 : index
    %7 = vector.load %arg3[%c0_10, %c0_11, %c0_12, %c0_13] : memref<1x1x16x128xf32, #tpu.memory_space<vmem>>, vector<1x1x16x128xf32>
    %8 = vector.shape_cast %7 : vector<1x1x16x128xf32> to vector<1x16x128xf32>
    %cst_14 = arith.constant 0.000000e+00 : f32
    %9 = vector.broadcast %cst_14 : f32 to vector<1x16x128xf32>
    %10 = arith.select %6, %8, %9 : vector<1x16x128xf32>
    %c0_15 = arith.constant 0 : index
    %c1_16 = arith.constant 1 : index
    %c0_17 = arith.constant 0 : index
    %11 = vector.load %arg11[%c0_15, %c1_16, %c0_17] : memref<10x18x128xf32, #tpu.memory_space<vmem>>, vector<1x16x128xf32>
    tpu.vector_store %arg11[%c0_15, %c1_16, %c0_17], %10 {strides = array<i32>} : memref<10x18x128xf32, #tpu.memory_space<vmem>>, vector<1x16x128xf32>,
    %c1_i32 = arith.constant 1 : i32
    %12 = arith.cmpi slt, %arg1, %c1_i32 : i32
    %c0_18 = arith.constant 0 : index
    %c0_19 = arith.constant 0 : index
    %c0_20 = arith.constant 0 : index
    %c0_21 = arith.constant 0 : index
    %13 = vector.load %arg4[%c0_18, %c0_19, %c0_20, %c0_21] : memref<1x1x16x128xf32, #tpu.memory_space<vmem>>, vector<1x1x16x128xf32>
    %14 = vector.shape_cast %13 : vector<1x1x16x128xf32> to vector<1x16x128xf32>
    %cst_22 = arith.constant 0.000000e+00 : f32
    %15 = vector.broadcast %cst_22 : f32 to vector<1x16x128xf32>
    %16 = arith.select %12, %14, %15 : vector<1x16x128xf32>
    %c9 = arith.constant 9 : index
    %c1_23 = arith.constant 1 : index
    %c0_24 = arith.constant 0 : index
    %17 = vector.load %arg11[%c9, %c1_23, %c0_24] : memref<10x18x128xf32, #tpu.memory_space<vmem>>, vector<1x16x128xf32>
    tpu.vector_store %arg11[%c9, %c1_23, %c0_24], %16 {strides = array<i32>} : memref<10x18x128xf32, #tpu.memory_space<vmem>>, vector<1x16x128xf32>,
    %c0_25 = arith.constant 0 : index
    %c0_26 = arith.constant 0 : index
    %c0_27 = arith.constant 0 : index
    %18 = vector.load %arg11[%c0_25, %c0_26, %c0_27] : memref<10x18x128xf32, #tpu.memory_space<vmem>>, vector<8x16x128xf32>
    %19 = vector.shape_cast %18 : vector<8x16x128xf32> to vector<128x128xf32>
    %c0_28 = arith.constant 0 : index
    %c0_29 = arith.constant 0 : index
    %20 = vector.load %arg12[%c0_28, %c0_29] : memref<128x1152xf32, #tpu.memory_space<vmem>>, vector<128x128xf32>
    tpu.vector_store %arg12[%c0_28, %c0_29], %19 {strides = array<i32>} : memref<128x1152xf32, #tpu.memory_space<vmem>>, vector<128x128xf32>,
    %c0_30 = arith.constant 0 : index
    %c1_31 = arith.constant 1 : index
    %c0_32 = arith.constant 0 : index
    %21 = vector.load %arg11[%c0_30, %c1_31, %c0_32] : memref<10x18x128xf32, #tpu.memory_space<vmem>>, vector<8x16x128xf32>
    %22 = vector.shape_cast %21 : vector<8x16x128xf32> to vector<128x128xf32>
    %c0_33 = arith.constant 0 : index
    %c128 = arith.constant 128 : index
    %23 = vector.load %arg12[%c0_33, %c128] : memref<128x1152xf32, #tpu.memory_space<vmem>>, vector<128x128xf32>
    tpu.vector_store %arg12[%c0_33, %c128], %22 {strides = array<i32>} : memref<128x1152xf32, #tpu.memory_space<vmem>>, vector<128x128xf32>,
    %c0_34 = arith.constant 0 : index
    %c2 = arith.constant 2 : index
    %c0_35 = arith.constant 0 : index
    %24 = vector.load %arg11[%c0_34, %c2, %c0_35] : memref<10x18x128xf32, #tpu.memory_space<vmem>>, vector<8x16x128xf32>
    %25 = vector.shape_cast %24 : vector<8x16x128xf32> to vector<128x128xf32>
    %c0_36 = arith.constant 0 : index
    %c256 = arith.constant 256 : index
    %26 = vector.load %arg12[%c0_36, %c256] : memref<128x1152xf32, #tpu.memory_space<vmem>>, vector<128x128xf32>
    tpu.vector_store %arg12[%c0_36, %c256], %25 {strides = array<i32>} : memref<128x1152xf32, #tpu.memory_space<vmem>>, vector<128x128xf32>,
    %c1_37 = arith.constant 1 : index
    %c0_38 = arith.constant 0 : index
    %c0_39 = arith.constant 0 : index
    %27 = vector.load %arg11[%c1_37, %c0_38, %c0_39] : memref<10x18x128xf32, #tpu.memory_space<vmem>>, vector<8x16x128xf32>
    %28 = vector.shape_cast %27 : vector<8x16x128xf32> to vector<128x128xf32>
    %c0_40 = arith.constant 0 : index
    %c384 = arith.constant 384 : index
    %29 = vector.load %arg12[%c0_40, %c384] : memref<128x1152xf32, #tpu.memory_space<vmem>>, vector<128x128xf32>
    tpu.vector_store %arg12[%c0_40, %c384], %28 {strides = array<i32>} : memref<128x1152xf32, #tpu.memory_space<vmem>>, vector<128x128xf32>,
    %c1_41 = arith.constant 1 : index
    %c1_42 = arith.constant 1 : index
    %c0_43 = arith.constant 0 : index
    %30 = vector.load %arg11[%c1_41, %c1_42, %c0_43] : memref<10x18x128xf32, #tpu.memory_space<vmem>>, vector<8x16x128xf32>
    %31 = vector.shape_cast %30 : vector<8x16x128xf32> to vector<128x128xf32>
    %c0_44 = arith.constant 0 : index
    %c512 = arith.constant 512 : index
    %32 = vector.load %arg12[%c0_44, %c512] : memref<128x1152xf32, #tpu.memory_space<vmem>>, vector<128x128xf32>
    tpu.vector_store %arg12[%c0_44, %c512], %31 {strides = array<i32>} : memref<128x1152xf32, #tpu.memory_space<vmem>>, vector<128x128xf32>,
    %c1_45 = arith.constant 1 : index
    %c2_46 = arith.constant 2 : index
    %c0_47 = arith.constant 0 : index
    %33 = vector.load %arg11[%c1_45, %c2_46, %c0_47] : memref<10x18x128xf32, #tpu.memory_space<vmem>>, vector<8x16x128xf32>
    %34 = vector.shape_cast %33 : vector<8x16x128xf32> to vector<128x128xf32>
    %c0_48 = arith.constant 0 : index
    %c640 = arith.constant 640 : index
    %35 = vector.load %arg12[%c0_48, %c640] : memref<128x1152xf32, #tpu.memory_space<vmem>>, vector<128x128xf32>
    tpu.vector_store %arg12[%c0_48, %c640], %34 {strides = array<i32>} : memref<128x1152xf32, #tpu.memory_space<vmem>>, vector<128x128xf32>,
    %c2_49 = arith.constant 2 : index
    %c0_50 = arith.constant 0 : index
    %c0_51 = arith.constant 0 : index
    %36 = vector.load %arg11[%c2_49, %c0_50, %c0_51] : memref<10x18x128xf32, #tpu.memory_space<vmem>>, vector<8x16x128xf32>
    %37 = vector.shape_cast %36 : vector<8x16x128xf32> to vector<128x128xf32>
    %c0_52 = arith.constant 0 : index
    %c768 = arith.constant 768 : index
    %38 = vector.load %arg12[%c0_52, %c768] : memref<128x1152xf32, #tpu.memory_space<vmem>>, vector<128x128xf32>
    tpu.vector_store %arg12[%c0_52, %c768], %37 {strides = array<i32>} : memref<128x1152xf32, #tpu.memory_space<vmem>>, vector<128x128xf32>,
    %c2_53 = arith.constant 2 : index
    %c1_54 = arith.constant 1 : index
    %c0_55 = arith.constant 0 : index
    %39 = vector.load %arg11[%c2_53, %c1_54, %c0_55] : memref<10x18x128xf32, #tpu.memory_space<vmem>>, vector<8x16x128xf32>
    %40 = vector.shape_cast %39 : vector<8x16x128xf32> to vector<128x128xf32>
    %c0_56 = arith.constant 0 : index
    %c896 = arith.constant 896 : index
    %41 = vector.load %arg12[%c0_56, %c896] : memref<128x1152xf32, #tpu.memory_space<vmem>>, vector<128x128xf32>
    tpu.vector_store %arg12[%c0_56, %c896], %40 {strides = array<i32>} : memref<128x1152xf32, #tpu.memory_space<vmem>>, vector<128x128xf32>,
    %c2_57 = arith.constant 2 : index
    %c2_58 = arith.constant 2 : index
    %c0_59 = arith.constant 0 : index
    %42 = vector.load %arg11[%c2_57, %c2_58, %c0_59] : memref<10x18x128xf32, #tpu.memory_space<vmem>>, vector<8x16x128xf32>
    %43 = vector.shape_cast %42 : vector<8x16x128xf32> to vector<128x128xf32>
    %c0_60 = arith.constant 0 : index
    %c1024 = arith.constant 1024 : index
    %44 = vector.load %arg12[%c0_60, %c1024] : memref<128x1152xf32, #tpu.memory_space<vmem>>, vector<128x128xf32>
    tpu.vector_store %arg12[%c0_60, %c1024], %43 {strides = array<i32>} : memref<128x1152xf32, #tpu.memory_space<vmem>>, vector<128x128xf32>,
    %c0_61 = arith.constant 0 : index
    %c0_62 = arith.constant 0 : index
    %45 = vector.load %arg12[%c0_61, %c0_62] : memref<128x1152xf32, #tpu.memory_space<vmem>>, vector<128x1152xf32>
    %c0_63 = arith.constant 0 : index
    %c0_64 = arith.constant 0 : index
    %46 = vector.load %arg5[%c0_63, %c0_64] : memref<1152x128xf32, #tpu.memory_space<vmem>>, vector<1152x128xf32>
    %cst_65 = arith.constant dense<0.000000e+00> : vector<128x128xf32>
    %47 = tpu.matmul %45, %46, %cst_65 {dimension_numbers = #tpu.dot_dimension_numbers<[1], [0], [0], [1], [0, 0, 1, 1], [], []>} : vector<128x1152xf32>, vector<1152x128xf32>, vector<128x128xf32> -> vector<128x128xf32>
    %c0_66 = arith.constant 0 : index
    %c0_67 = arith.constant 0 : index
    %48 = vector.load %arg6[%c0_66, %c0_67] : memref<1x128xf32, #tpu.memory_space<vmem>>, vector<1x128xf32>
    %49 = vector.broadcast %48 : vector<1x128xf32> to vector<128x128xf32>
    %50 = arith.addf %47, %49 : vector<128x128xf32>
    %cst_68 = arith.constant dense<0.000000e+00> : vector<128xf32>
    %51 = vector.multi_reduction <add>, %50, %cst_68 [0] : vector<128x128xf32> to vector<128xf32>
    %52 = vector.shape_cast %51 : vector<128xf32> to vector<1x128xf32>
    %53 = arith.mulf %50, %50 : vector<128x128xf32>
    %cst_69 = arith.constant dense<0.000000e+00> : vector<128xf32>
    %54 = vector.multi_reduction <add>, %53, %cst_69 [0] : vector<128x128xf32> to vector<128xf32>
    %55 = vector.shape_cast %54 : vector<128xf32> to vector<1x128xf32>
    %56 = vector.shape_cast %52 : vector<1x128xf32> to vector<1x1x1x128xf32>
    %c0_70 = arith.constant 0 : index
    %c0_71 = arith.constant 0 : index
    %c0_72 = arith.constant 0 : index
    %c0_73 = arith.constant 0 : index
    %57 = vector.load %arg10[%c0_70, %c0_71, %c0_72, %c0_73] : memref<1x1x2x128xf32, #tpu.memory_space<vmem>>, vector<1x1x1x128xf32>
    tpu.vector_store %arg10[%c0_70, %c0_71, %c0_72, %c0_73], %56 {strides = array<i32>} : memref<1x1x2x128xf32, #tpu.memory_space<vmem>>, vector<1x1x1x128xf32>,
    %58 = vector.shape_cast %55 : vector<1x128xf32> to vector<1x1x1x128xf32>
    %c0_74 = arith.constant 0 : index
    %c0_75 = arith.constant 0 : index
    %c1_76 = arith.constant 1 : index
    %c0_77 = arith.constant 0 : index
    %59 = vector.load %arg10[%c0_74, %c0_75, %c1_76, %c0_77] : memref<1x1x2x128xf32, #tpu.memory_space<vmem>>, vector<1x1x1x128xf32>
    tpu.vector_store %arg10[%c0_74, %c0_75, %c1_76, %c0_77], %58 {strides = array<i32>} : memref<1x1x2x128xf32, #tpu.memory_space<vmem>>, vector<1x1x1x128xf32>,
    %60 = vector.shape_cast %50 : vector<128x128xf32> to vector<1x8x16x128xf32>
    %c0_78 = arith.constant 0 : index
    %c0_79 = arith.constant 0 : index
    %c0_80 = arith.constant 0 : index
    %c0_81 = arith.constant 0 : index
    %61 = vector.load %arg9[%c0_78, %c0_79, %c0_80, %c0_81] : memref<1x8x16x128xf32, #tpu.memory_space<vmem>>, vector<1x8x16x128xf32>
    tpu.vector_store %arg9[%c0_78, %c0_79, %c0_80, %c0_81], %60 {strides = array<i32>} : memref<1x8x16x128xf32, #tpu.memory_space<vmem>>, vector<1x8x16x128xf32>,
    return
  }
  func.func @transform_0(%arg0: i32, %arg1: i32) -> (i32, i32, i32, i32) {
    %c0_i32 = arith.constant 0 : i32
    %c0_i32_0 = arith.constant 0 : i32
    %c0_i32_1 = arith.constant 0 : i32
    return %arg0, %arg1, %c0_i32, %c0_i32_0 : i32, i32, i32, i32
  }
  func.func @transform_1(%arg0: i32, %arg1: i32) -> (i32, i32, i32, i32) {
    %c8_i32 = arith.constant 8 : i32
    %0 = arith.muli %arg1, %c8_i32 : i32
    %c1_i32 = arith.constant 1 : i32
    %1 = arith.subi %0, %c1_i32 : i32
    %c0_i32 = arith.constant 0 : i32
    %2 = arith.maxsi %1, %c0_i32 : i32
    %c0_i32_0 = arith.constant 0 : i32
    %c0_i32_1 = arith.constant 0 : i32
    %c0_i32_2 = arith.constant 0 : i32
    return %arg0, %2, %c0_i32_0, %c0_i32_1 : i32, i32, i32, i32
  }
  func.func @transform_2(%arg0: i32, %arg1: i32) -> (i32, i32, i32, i32) {
    %c1_i32 = arith.constant 1 : i32
    %0 = arith.addi %arg1, %c1_i32 : i32
    %c8_i32 = arith.constant 8 : i32
    %1 = arith.muli %0, %c8_i32 : i32
    %c15_i32 = arith.constant 15 : i32
    %2 = arith.minsi %1, %c15_i32 : i32
    %c0_i32 = arith.constant 0 : i32
    %c0_i32_0 = arith.constant 0 : i32
    %c0_i32_1 = arith.constant 0 : i32
    return %arg0, %2, %c0_i32, %c0_i32_0 : i32, i32, i32, i32
  }
  func.func @transform_3(%arg0: i32, %arg1: i32) -> (i32, i32) {
    %c0_i32 = arith.constant 0 : i32
    %c0_i32_0 = arith.constant 0 : i32
    %c0_i32_1 = arith.constant 0 : i32
    return %c0_i32, %c0_i32_0 : i32, i32
  }
  func.func @transform_4(%arg0: i32, %arg1: i32) -> (i32, i32) {
    %c0_i32 = arith.constant 0 : i32
    %c0_i32_0 = arith.constant 0 : i32
    %c0_i32_1 = arith.constant 0 : i32
    return %c0_i32, %c0_i32_0 : i32, i32
  }
  func.func @transform_5(%arg0: i32, %arg1: i32) -> (i32, i32) {
    %c0_i32 = arith.constant 0 : i32
    %c0_i32_0 = arith.constant 0 : i32
    %c0_i32_1 = arith.constant 0 : i32
    return %c0_i32, %c0_i32_0 : i32, i32
  }
  func.func @transform_6(%arg0: i32, %arg1: i32) -> (i32, i32) {
    %c0_i32 = arith.constant 0 : i32
    %c0_i32_0 = arith.constant 0 : i32
    %c0_i32_1 = arith.constant 0 : i32
    return %c0_i32, %c0_i32_0 : i32, i32
  }
  func.func @transform_7(%arg0: i32, %arg1: i32) -> (i32, i32, i32, i32) {
    %c0_i32 = arith.constant 0 : i32
    %c0_i32_0 = arith.constant 0 : i32
    %c0_i32_1 = arith.constant 0 : i32
    return %arg0, %arg1, %c0_i32, %c0_i32_0 : i32, i32, i32, i32
  }
  func.func @transform_8(%arg0: i32, %arg1: i32) -> (i32, i32, i32, i32) {
    %c0_i32 = arith.constant 0 : i32
    %c0_i32_0 = arith.constant 0 : i32
    %c0_i32_1 = arith.constant 0 : i32
    return %arg0, %arg1, %c0_i32, %c0_i32_0 : i32, i32, i32, i32
  }
}

module attributes {stable_mosaic.version = 11 : i64} {
  func.func @conv_stats_kernel(%arg0: i32, %arg1: i32, %arg2: memref<1x8x16x128xf32, #tpu.memory_space<vmem>>, %arg3: memref<1x1x16x128xf32, #tpu.memory_space<vmem>>, %arg4: memref<1x1x16x128xf32, #tpu.memory_space<vmem>>, %arg5: memref<1152x128xf32, #tpu.memory_space<vmem>>, %arg6: memref<1x128xf32, #tpu.memory_space<vmem>>, %arg7: memref<1x128xf32, #tpu.memory_space<vmem>>, %arg8: memref<1x128xf32, #tpu.memory_space<vmem>>, %arg9: memref<1x8x16x128xf32, #tpu.memory_space<vmem>>, %arg10: memref<1x1x2x128xf32, #tpu.memory_space<vmem>>, %arg11: memref<10x18x128xf32, #tpu.memory_space<vmem>>, %arg12: memref<128x1152xf32, #tpu.memory_space<vmem>>) attributes {dimension_semantics = [#tpu.dimension_semantics<parallel>, #tpu.dimension_semantics<parallel>], iteration_bounds = array<i64: 2, 2>, scalar_prefetch = 0 : i64, scratch_operands = 2 : i64, tpu.core_type = #tpu.core_type<tc>, window_params = [{transform_indices = @transform_0, window_bounds = array<i64: 1, 8, 16, 128>}, {transform_indices = @transform_1, window_bounds = array<i64: 1, 1, 16, 128>}, {transform_indices = @transform_2, window_bounds = array<i64: 1, 1, 16, 128>}, {pipeline_mode = #tpu.pipeline_mode<synchronous>, transform_indices = @transform_3, window_bounds = array<i64: 1152, 128>}, {pipeline_mode = #tpu.pipeline_mode<synchronous>, transform_indices = @transform_4, window_bounds = array<i64: 1, 128>}, {pipeline_mode = #tpu.pipeline_mode<synchronous>, transform_indices = @transform_5, window_bounds = array<i64: 1, 128>}, {pipeline_mode = #tpu.pipeline_mode<synchronous>, transform_indices = @transform_6, window_bounds = array<i64: 1, 128>}, {transform_indices = @transform_7, window_bounds = array<i64: 1, 8, 16, 128>}, {transform_indices = @transform_8, window_bounds = array<i64: 1, 1, 2, 128>}]} {
    %cst = arith.constant 0.000000e+00 : f32
    %0 = vector.broadcast %cst : f32 to vector<10x1x128xf32>
    %c0 = arith.constant 0 : index
    %c0_0 = arith.constant 0 : index
    %c0_1 = arith.constant 0 : index
    %1 = vector.load %arg11[%c0, %c0_0, %c0_1] : memref<10x18x128xf32, #tpu.memory_space<vmem>>, vector<10x1x128xf32>
    tpu.vector_store %arg11[%c0, %c0_0, %c0_1], %0 {strides = array<i32>} : memref<10x18x128xf32, #tpu.memory_space<vmem>>, vector<10x1x128xf32>,
    %c0_2 = arith.constant 0 : index
    %c17 = arith.constant 17 : index
    %c0_3 = arith.constant 0 : index
    %2 = vector.load %arg11[%c0_2, %c17, %c0_3] : memref<10x18x128xf32, #tpu.memory_space<vmem>>, vector<10x1x128xf32>
    tpu.vector_store %arg11[%c0_2, %c17, %c0_3], %0 {strides = array<i32>} : memref<10x18x128xf32, #tpu.memory_space<vmem>>, vector<10x1x128xf32>,
    %c0_4 = arith.constant 0 : index
    %c0_5 = arith.constant 0 : index
    %c0_6 = arith.constant 0 : index
    %c0_7 = arith.constant 0 : index
    %3 = vector.load %arg2[%c0_4, %c0_5, %c0_6, %c0_7] : memref<1x8x16x128xf32, #tpu.memory_space<vmem>>, vector<1x8x16x128xf32>
    %4 = vector.shape_cast %3 : vector<1x8x16x128xf32> to vector<8x16x128xf32>
    %c0_8 = arith.constant 0 : index
    %c0_9 = arith.constant 0 : index
    %5 = vector.load %arg7[%c0_8, %c0_9] : memref<1x128xf32, #tpu.memory_space<vmem>>, vector<1x128xf32>
    %6 = vector.shape_cast %5 : vector<1x128xf32> to vector<1x1x128xf32>
    %7 = vector.broadcast %6 : vector<1x1x128xf32> to vector<8x16x128xf32>
    %8 = arith.mulf %4, %7 : vector<8x16x128xf32>
    %c0_10 = arith.constant 0 : index
    %c0_11 = arith.constant 0 : index
    %9 = vector.load %arg8[%c0_10, %c0_11] : memref<1x128xf32, #tpu.memory_space<vmem>>, vector<1x128xf32>
    %10 = vector.shape_cast %9 : vector<1x128xf32> to vector<1x1x128xf32>
    %11 = vector.broadcast %10 : vector<1x1x128xf32> to vector<8x16x128xf32>
    %12 = arith.addf %8, %11 : vector<8x16x128xf32>
    %cst_12 = arith.constant 0.000000e+00 : f32
    %13 = vector.broadcast %cst_12 : f32 to vector<8x16x128xf32>
    %14 = arith.maximumf %12, %13 : vector<8x16x128xf32>
    %c1 = arith.constant 1 : index
    %c1_13 = arith.constant 1 : index
    %c0_14 = arith.constant 0 : index
    %15 = vector.load %arg11[%c1, %c1_13, %c0_14] : memref<10x18x128xf32, #tpu.memory_space<vmem>>, vector<8x16x128xf32>
    tpu.vector_store %arg11[%c1, %c1_13, %c0_14], %14 {strides = array<i32>} : memref<10x18x128xf32, #tpu.memory_space<vmem>>, vector<8x16x128xf32>,
    %c0_i32 = arith.constant 0 : i32
    %16 = arith.cmpi sgt, %arg1, %c0_i32 : i32
    %c0_15 = arith.constant 0 : index
    %c0_16 = arith.constant 0 : index
    %c0_17 = arith.constant 0 : index
    %c0_18 = arith.constant 0 : index
    %17 = vector.load %arg3[%c0_15, %c0_16, %c0_17, %c0_18] : memref<1x1x16x128xf32, #tpu.memory_space<vmem>>, vector<1x1x16x128xf32>
    %18 = vector.shape_cast %17 : vector<1x1x16x128xf32> to vector<1x16x128xf32>
    %c0_19 = arith.constant 0 : index
    %c0_20 = arith.constant 0 : index
    %19 = vector.load %arg7[%c0_19, %c0_20] : memref<1x128xf32, #tpu.memory_space<vmem>>, vector<1x128xf32>
    %20 = vector.shape_cast %19 : vector<1x128xf32> to vector<1x1x128xf32>
    %21 = vector.broadcast %20 : vector<1x1x128xf32> to vector<1x16x128xf32>
    %22 = arith.mulf %18, %21 : vector<1x16x128xf32>
    %c0_21 = arith.constant 0 : index
    %c0_22 = arith.constant 0 : index
    %23 = vector.load %arg8[%c0_21, %c0_22] : memref<1x128xf32, #tpu.memory_space<vmem>>, vector<1x128xf32>
    %24 = vector.shape_cast %23 : vector<1x128xf32> to vector<1x1x128xf32>
    %25 = vector.broadcast %24 : vector<1x1x128xf32> to vector<1x16x128xf32>
    %26 = arith.addf %22, %25 : vector<1x16x128xf32>
    %cst_23 = arith.constant 0.000000e+00 : f32
    %27 = vector.broadcast %cst_23 : f32 to vector<1x16x128xf32>
    %28 = arith.maximumf %26, %27 : vector<1x16x128xf32>
    %cst_24 = arith.constant 0.000000e+00 : f32
    %29 = vector.broadcast %cst_24 : f32 to vector<1x16x128xf32>
    %30 = arith.select %16, %28, %29 : vector<1x16x128xf32>
    %c0_25 = arith.constant 0 : index
    %c1_26 = arith.constant 1 : index
    %c0_27 = arith.constant 0 : index
    %31 = vector.load %arg11[%c0_25, %c1_26, %c0_27] : memref<10x18x128xf32, #tpu.memory_space<vmem>>, vector<1x16x128xf32>
    tpu.vector_store %arg11[%c0_25, %c1_26, %c0_27], %30 {strides = array<i32>} : memref<10x18x128xf32, #tpu.memory_space<vmem>>, vector<1x16x128xf32>,
    %c1_i32 = arith.constant 1 : i32
    %32 = arith.cmpi slt, %arg1, %c1_i32 : i32
    %c0_28 = arith.constant 0 : index
    %c0_29 = arith.constant 0 : index
    %c0_30 = arith.constant 0 : index
    %c0_31 = arith.constant 0 : index
    %33 = vector.load %arg4[%c0_28, %c0_29, %c0_30, %c0_31] : memref<1x1x16x128xf32, #tpu.memory_space<vmem>>, vector<1x1x16x128xf32>
    %34 = vector.shape_cast %33 : vector<1x1x16x128xf32> to vector<1x16x128xf32>
    %c0_32 = arith.constant 0 : index
    %c0_33 = arith.constant 0 : index
    %35 = vector.load %arg7[%c0_32, %c0_33] : memref<1x128xf32, #tpu.memory_space<vmem>>, vector<1x128xf32>
    %36 = vector.shape_cast %35 : vector<1x128xf32> to vector<1x1x128xf32>
    %37 = vector.broadcast %36 : vector<1x1x128xf32> to vector<1x16x128xf32>
    %38 = arith.mulf %34, %37 : vector<1x16x128xf32>
    %c0_34 = arith.constant 0 : index
    %c0_35 = arith.constant 0 : index
    %39 = vector.load %arg8[%c0_34, %c0_35] : memref<1x128xf32, #tpu.memory_space<vmem>>, vector<1x128xf32>
    %40 = vector.shape_cast %39 : vector<1x128xf32> to vector<1x1x128xf32>
    %41 = vector.broadcast %40 : vector<1x1x128xf32> to vector<1x16x128xf32>
    %42 = arith.addf %38, %41 : vector<1x16x128xf32>
    %cst_36 = arith.constant 0.000000e+00 : f32
    %43 = vector.broadcast %cst_36 : f32 to vector<1x16x128xf32>
    %44 = arith.maximumf %42, %43 : vector<1x16x128xf32>
    %cst_37 = arith.constant 0.000000e+00 : f32
    %45 = vector.broadcast %cst_37 : f32 to vector<1x16x128xf32>
    %46 = arith.select %32, %44, %45 : vector<1x16x128xf32>
    %c9 = arith.constant 9 : index
    %c1_38 = arith.constant 1 : index
    %c0_39 = arith.constant 0 : index
    %47 = vector.load %arg11[%c9, %c1_38, %c0_39] : memref<10x18x128xf32, #tpu.memory_space<vmem>>, vector<1x16x128xf32>
    tpu.vector_store %arg11[%c9, %c1_38, %c0_39], %46 {strides = array<i32>} : memref<10x18x128xf32, #tpu.memory_space<vmem>>, vector<1x16x128xf32>,
    %c0_40 = arith.constant 0 : index
    %c0_41 = arith.constant 0 : index
    %c0_42 = arith.constant 0 : index
    %48 = vector.load %arg11[%c0_40, %c0_41, %c0_42] : memref<10x18x128xf32, #tpu.memory_space<vmem>>, vector<8x16x128xf32>
    %49 = vector.shape_cast %48 : vector<8x16x128xf32> to vector<128x128xf32>
    %c0_43 = arith.constant 0 : index
    %c0_44 = arith.constant 0 : index
    %50 = vector.load %arg12[%c0_43, %c0_44] : memref<128x1152xf32, #tpu.memory_space<vmem>>, vector<128x128xf32>
    tpu.vector_store %arg12[%c0_43, %c0_44], %49 {strides = array<i32>} : memref<128x1152xf32, #tpu.memory_space<vmem>>, vector<128x128xf32>,
    %c0_45 = arith.constant 0 : index
    %c1_46 = arith.constant 1 : index
    %c0_47 = arith.constant 0 : index
    %51 = vector.load %arg11[%c0_45, %c1_46, %c0_47] : memref<10x18x128xf32, #tpu.memory_space<vmem>>, vector<8x16x128xf32>
    %52 = vector.shape_cast %51 : vector<8x16x128xf32> to vector<128x128xf32>
    %c0_48 = arith.constant 0 : index
    %c128 = arith.constant 128 : index
    %53 = vector.load %arg12[%c0_48, %c128] : memref<128x1152xf32, #tpu.memory_space<vmem>>, vector<128x128xf32>
    tpu.vector_store %arg12[%c0_48, %c128], %52 {strides = array<i32>} : memref<128x1152xf32, #tpu.memory_space<vmem>>, vector<128x128xf32>,
    %c0_49 = arith.constant 0 : index
    %c2 = arith.constant 2 : index
    %c0_50 = arith.constant 0 : index
    %54 = vector.load %arg11[%c0_49, %c2, %c0_50] : memref<10x18x128xf32, #tpu.memory_space<vmem>>, vector<8x16x128xf32>
    %55 = vector.shape_cast %54 : vector<8x16x128xf32> to vector<128x128xf32>
    %c0_51 = arith.constant 0 : index
    %c256 = arith.constant 256 : index
    %56 = vector.load %arg12[%c0_51, %c256] : memref<128x1152xf32, #tpu.memory_space<vmem>>, vector<128x128xf32>
    tpu.vector_store %arg12[%c0_51, %c256], %55 {strides = array<i32>} : memref<128x1152xf32, #tpu.memory_space<vmem>>, vector<128x128xf32>,
    %c1_52 = arith.constant 1 : index
    %c0_53 = arith.constant 0 : index
    %c0_54 = arith.constant 0 : index
    %57 = vector.load %arg11[%c1_52, %c0_53, %c0_54] : memref<10x18x128xf32, #tpu.memory_space<vmem>>, vector<8x16x128xf32>
    %58 = vector.shape_cast %57 : vector<8x16x128xf32> to vector<128x128xf32>
    %c0_55 = arith.constant 0 : index
    %c384 = arith.constant 384 : index
    %59 = vector.load %arg12[%c0_55, %c384] : memref<128x1152xf32, #tpu.memory_space<vmem>>, vector<128x128xf32>
    tpu.vector_store %arg12[%c0_55, %c384], %58 {strides = array<i32>} : memref<128x1152xf32, #tpu.memory_space<vmem>>, vector<128x128xf32>,
    %c1_56 = arith.constant 1 : index
    %c1_57 = arith.constant 1 : index
    %c0_58 = arith.constant 0 : index
    %60 = vector.load %arg11[%c1_56, %c1_57, %c0_58] : memref<10x18x128xf32, #tpu.memory_space<vmem>>, vector<8x16x128xf32>
    %61 = vector.shape_cast %60 : vector<8x16x128xf32> to vector<128x128xf32>
    %c0_59 = arith.constant 0 : index
    %c512 = arith.constant 512 : index
    %62 = vector.load %arg12[%c0_59, %c512] : memref<128x1152xf32, #tpu.memory_space<vmem>>, vector<128x128xf32>
    tpu.vector_store %arg12[%c0_59, %c512], %61 {strides = array<i32>} : memref<128x1152xf32, #tpu.memory_space<vmem>>, vector<128x128xf32>,
    %c1_60 = arith.constant 1 : index
    %c2_61 = arith.constant 2 : index
    %c0_62 = arith.constant 0 : index
    %63 = vector.load %arg11[%c1_60, %c2_61, %c0_62] : memref<10x18x128xf32, #tpu.memory_space<vmem>>, vector<8x16x128xf32>
    %64 = vector.shape_cast %63 : vector<8x16x128xf32> to vector<128x128xf32>
    %c0_63 = arith.constant 0 : index
    %c640 = arith.constant 640 : index
    %65 = vector.load %arg12[%c0_63, %c640] : memref<128x1152xf32, #tpu.memory_space<vmem>>, vector<128x128xf32>
    tpu.vector_store %arg12[%c0_63, %c640], %64 {strides = array<i32>} : memref<128x1152xf32, #tpu.memory_space<vmem>>, vector<128x128xf32>,
    %c2_64 = arith.constant 2 : index
    %c0_65 = arith.constant 0 : index
    %c0_66 = arith.constant 0 : index
    %66 = vector.load %arg11[%c2_64, %c0_65, %c0_66] : memref<10x18x128xf32, #tpu.memory_space<vmem>>, vector<8x16x128xf32>
    %67 = vector.shape_cast %66 : vector<8x16x128xf32> to vector<128x128xf32>
    %c0_67 = arith.constant 0 : index
    %c768 = arith.constant 768 : index
    %68 = vector.load %arg12[%c0_67, %c768] : memref<128x1152xf32, #tpu.memory_space<vmem>>, vector<128x128xf32>
    tpu.vector_store %arg12[%c0_67, %c768], %67 {strides = array<i32>} : memref<128x1152xf32, #tpu.memory_space<vmem>>, vector<128x128xf32>,
    %c2_68 = arith.constant 2 : index
    %c1_69 = arith.constant 1 : index
    %c0_70 = arith.constant 0 : index
    %69 = vector.load %arg11[%c2_68, %c1_69, %c0_70] : memref<10x18x128xf32, #tpu.memory_space<vmem>>, vector<8x16x128xf32>
    %70 = vector.shape_cast %69 : vector<8x16x128xf32> to vector<128x128xf32>
    %c0_71 = arith.constant 0 : index
    %c896 = arith.constant 896 : index
    %71 = vector.load %arg12[%c0_71, %c896] : memref<128x1152xf32, #tpu.memory_space<vmem>>, vector<128x128xf32>
    tpu.vector_store %arg12[%c0_71, %c896], %70 {strides = array<i32>} : memref<128x1152xf32, #tpu.memory_space<vmem>>, vector<128x128xf32>,
    %c2_72 = arith.constant 2 : index
    %c2_73 = arith.constant 2 : index
    %c0_74 = arith.constant 0 : index
    %72 = vector.load %arg11[%c2_72, %c2_73, %c0_74] : memref<10x18x128xf32, #tpu.memory_space<vmem>>, vector<8x16x128xf32>
    %73 = vector.shape_cast %72 : vector<8x16x128xf32> to vector<128x128xf32>
    %c0_75 = arith.constant 0 : index
    %c1024 = arith.constant 1024 : index
    %74 = vector.load %arg12[%c0_75, %c1024] : memref<128x1152xf32, #tpu.memory_space<vmem>>, vector<128x128xf32>
    tpu.vector_store %arg12[%c0_75, %c1024], %73 {strides = array<i32>} : memref<128x1152xf32, #tpu.memory_space<vmem>>, vector<128x128xf32>,
    %c0_76 = arith.constant 0 : index
    %c0_77 = arith.constant 0 : index
    %75 = vector.load %arg12[%c0_76, %c0_77] : memref<128x1152xf32, #tpu.memory_space<vmem>>, vector<128x1152xf32>
    %c0_78 = arith.constant 0 : index
    %c0_79 = arith.constant 0 : index
    %76 = vector.load %arg5[%c0_78, %c0_79] : memref<1152x128xf32, #tpu.memory_space<vmem>>, vector<1152x128xf32>
    %cst_80 = arith.constant dense<0.000000e+00> : vector<128x128xf32>
    %77 = tpu.matmul %75, %76, %cst_80 {dimension_numbers = #tpu.dot_dimension_numbers<[1], [0], [0], [1], [0, 0, 1, 1], [], []>} : vector<128x1152xf32>, vector<1152x128xf32>, vector<128x128xf32> -> vector<128x128xf32>
    %c0_81 = arith.constant 0 : index
    %c0_82 = arith.constant 0 : index
    %78 = vector.load %arg6[%c0_81, %c0_82] : memref<1x128xf32, #tpu.memory_space<vmem>>, vector<1x128xf32>
    %79 = vector.broadcast %78 : vector<1x128xf32> to vector<128x128xf32>
    %80 = arith.addf %77, %79 : vector<128x128xf32>
    %cst_83 = arith.constant dense<0.000000e+00> : vector<128xf32>
    %81 = vector.multi_reduction <add>, %80, %cst_83 [0] : vector<128x128xf32> to vector<128xf32>
    %82 = vector.shape_cast %81 : vector<128xf32> to vector<1x128xf32>
    %83 = arith.mulf %80, %80 : vector<128x128xf32>
    %cst_84 = arith.constant dense<0.000000e+00> : vector<128xf32>
    %84 = vector.multi_reduction <add>, %83, %cst_84 [0] : vector<128x128xf32> to vector<128xf32>
    %85 = vector.shape_cast %84 : vector<128xf32> to vector<1x128xf32>
    %86 = vector.shape_cast %82 : vector<1x128xf32> to vector<1x1x1x128xf32>
    %c0_85 = arith.constant 0 : index
    %c0_86 = arith.constant 0 : index
    %c0_87 = arith.constant 0 : index
    %c0_88 = arith.constant 0 : index
    %87 = vector.load %arg10[%c0_85, %c0_86, %c0_87, %c0_88] : memref<1x1x2x128xf32, #tpu.memory_space<vmem>>, vector<1x1x1x128xf32>
    tpu.vector_store %arg10[%c0_85, %c0_86, %c0_87, %c0_88], %86 {strides = array<i32>} : memref<1x1x2x128xf32, #tpu.memory_space<vmem>>, vector<1x1x1x128xf32>,
    %88 = vector.shape_cast %85 : vector<1x128xf32> to vector<1x1x1x128xf32>
    %c0_89 = arith.constant 0 : index
    %c0_90 = arith.constant 0 : index
    %c1_91 = arith.constant 1 : index
    %c0_92 = arith.constant 0 : index
    %89 = vector.load %arg10[%c0_89, %c0_90, %c1_91, %c0_92] : memref<1x1x2x128xf32, #tpu.memory_space<vmem>>, vector<1x1x1x128xf32>
    tpu.vector_store %arg10[%c0_89, %c0_90, %c1_91, %c0_92], %88 {strides = array<i32>} : memref<1x1x2x128xf32, #tpu.memory_space<vmem>>, vector<1x1x1x128xf32>,
    %90 = vector.shape_cast %80 : vector<128x128xf32> to vector<1x8x16x128xf32>
    %c0_93 = arith.constant 0 : index
    %c0_94 = arith.constant 0 : index
    %c0_95 = arith.constant 0 : index
    %c0_96 = arith.constant 0 : index
    %91 = vector.load %arg9[%c0_93, %c0_94, %c0_95, %c0_96] : memref<1x8x16x128xf32, #tpu.memory_space<vmem>>, vector<1x8x16x128xf32>
    tpu.vector_store %arg9[%c0_93, %c0_94, %c0_95, %c0_96], %90 {strides = array<i32>} : memref<1x8x16x128xf32, #tpu.memory_space<vmem>>, vector<1x8x16x128xf32>,
    return
  }
  func.func @transform_0(%arg0: i32, %arg1: i32) -> (i32, i32, i32, i32) {
    %c0_i32 = arith.constant 0 : i32
    %c0_i32_0 = arith.constant 0 : i32
    %c0_i32_1 = arith.constant 0 : i32
    return %arg0, %arg1, %c0_i32, %c0_i32_0 : i32, i32, i32, i32
  }
  func.func @transform_1(%arg0: i32, %arg1: i32) -> (i32, i32, i32, i32) {
    %c8_i32 = arith.constant 8 : i32
    %0 = arith.muli %arg1, %c8_i32 : i32
    %c1_i32 = arith.constant 1 : i32
    %1 = arith.subi %0, %c1_i32 : i32
    %c0_i32 = arith.constant 0 : i32
    %2 = arith.maxsi %1, %c0_i32 : i32
    %c0_i32_0 = arith.constant 0 : i32
    %c0_i32_1 = arith.constant 0 : i32
    %c0_i32_2 = arith.constant 0 : i32
    return %arg0, %2, %c0_i32_0, %c0_i32_1 : i32, i32, i32, i32
  }
  func.func @transform_2(%arg0: i32, %arg1: i32) -> (i32, i32, i32, i32) {
    %c1_i32 = arith.constant 1 : i32
    %0 = arith.addi %arg1, %c1_i32 : i32
    %c8_i32 = arith.constant 8 : i32
    %1 = arith.muli %0, %c8_i32 : i32
    %c15_i32 = arith.constant 15 : i32
    %2 = arith.minsi %1, %c15_i32 : i32
    %c0_i32 = arith.constant 0 : i32
    %c0_i32_0 = arith.constant 0 : i32
    %c0_i32_1 = arith.constant 0 : i32
    return %arg0, %2, %c0_i32, %c0_i32_0 : i32, i32, i32, i32
  }
  func.func @transform_3(%arg0: i32, %arg1: i32) -> (i32, i32) {
    %c0_i32 = arith.constant 0 : i32
    %c0_i32_0 = arith.constant 0 : i32
    %c0_i32_1 = arith.constant 0 : i32
    return %c0_i32, %c0_i32_0 : i32, i32
  }
  func.func @transform_4(%arg0: i32, %arg1: i32) -> (i32, i32) {
    %c0_i32 = arith.constant 0 : i32
    %c0_i32_0 = arith.constant 0 : i32
    %c0_i32_1 = arith.constant 0 : i32
    return %c0_i32, %c0_i32_0 : i32, i32
  }
  func.func @transform_5(%arg0: i32, %arg1: i32) -> (i32, i32) {
    %c0_i32 = arith.constant 0 : i32
    %c0_i32_0 = arith.constant 0 : i32
    %c0_i32_1 = arith.constant 0 : i32
    return %c0_i32, %c0_i32_0 : i32, i32
  }
  func.func @transform_6(%arg0: i32, %arg1: i32) -> (i32, i32) {
    %c0_i32 = arith.constant 0 : i32
    %c0_i32_0 = arith.constant 0 : i32
    %c0_i32_1 = arith.constant 0 : i32
    return %c0_i32, %c0_i32_0 : i32, i32
  }
  func.func @transform_7(%arg0: i32, %arg1: i32) -> (i32, i32, i32, i32) {
    %c0_i32 = arith.constant 0 : i32
    %c0_i32_0 = arith.constant 0 : i32
    %c0_i32_1 = arith.constant 0 : i32
    return %arg0, %arg1, %c0_i32, %c0_i32_0 : i32, i32, i32, i32
  }
  func.func @transform_8(%arg0: i32, %arg1: i32) -> (i32, i32, i32, i32) {
    %c0_i32 = arith.constant 0 : i32
    %c0_i32_0 = arith.constant 0 : i32
    %c0_i32_1 = arith.constant 0 : i32
    return %arg0, %arg1, %c0_i32, %c0_i32_0 : i32, i32, i32, i32
  }
}

module attributes {stable_mosaic.version = 11 : i64} {
  func.func @bn_relu_kernel(%arg0: i32, %arg1: i32, %arg2: memref<1x8x16x128xf32, #tpu.memory_space<vmem>>, %arg3: memref<1x128xf32, #tpu.memory_space<vmem>>, %arg4: memref<1x128xf32, #tpu.memory_space<vmem>>, %arg5: memref<1x8x16x128xf32, #tpu.memory_space<vmem>>) attributes {dimension_semantics = [#tpu.dimension_semantics<parallel>, #tpu.dimension_semantics<parallel>], iteration_bounds = array<i64: 2, 2>, scalar_prefetch = 0 : i64, scratch_operands = 0 : i64, tpu.core_type = #tpu.core_type<tc>, window_params = [{transform_indices = @transform_0, window_bounds = array<i64: 1, 8, 16, 128>}, {pipeline_mode = #tpu.pipeline_mode<synchronous>, transform_indices = @transform_1, window_bounds = array<i64: 1, 128>}, {pipeline_mode = #tpu.pipeline_mode<synchronous>, transform_indices = @transform_2, window_bounds = array<i64: 1, 128>}, {transform_indices = @transform_3, window_bounds = array<i64: 1, 8, 16, 128>}]} {
    %c0 = arith.constant 0 : index
    %c0_0 = arith.constant 0 : index
    %c0_1 = arith.constant 0 : index
    %c0_2 = arith.constant 0 : index
    %0 = vector.load %arg2[%c0, %c0_0, %c0_1, %c0_2] : memref<1x8x16x128xf32, #tpu.memory_space<vmem>>, vector<1x8x16x128xf32>
    %c0_3 = arith.constant 0 : index
    %c0_4 = arith.constant 0 : index
    %1 = vector.load %arg3[%c0_3, %c0_4] : memref<1x128xf32, #tpu.memory_space<vmem>>, vector<1x128xf32>
    %2 = vector.shape_cast %1 : vector<1x128xf32> to vector<1x1x1x128xf32>
    %3 = vector.broadcast %2 : vector<1x1x1x128xf32> to vector<1x8x16x128xf32>
    %4 = arith.mulf %0, %3 : vector<1x8x16x128xf32>
    %c0_5 = arith.constant 0 : index
    %c0_6 = arith.constant 0 : index
    %5 = vector.load %arg4[%c0_5, %c0_6] : memref<1x128xf32, #tpu.memory_space<vmem>>, vector<1x128xf32>
    %6 = vector.shape_cast %5 : vector<1x128xf32> to vector<1x1x1x128xf32>
    %7 = vector.broadcast %6 : vector<1x1x1x128xf32> to vector<1x8x16x128xf32>
    %8 = arith.addf %4, %7 : vector<1x8x16x128xf32>
    %cst = arith.constant 0.000000e+00 : f32
    %9 = vector.broadcast %cst : f32 to vector<1x8x16x128xf32>
    %10 = arith.maximumf %8, %9 : vector<1x8x16x128xf32>
    %c0_7 = arith.constant 0 : index
    %c0_8 = arith.constant 0 : index
    %c0_9 = arith.constant 0 : index
    %c0_10 = arith.constant 0 : index
    %11 = vector.load %arg5[%c0_7, %c0_8, %c0_9, %c0_10] : memref<1x8x16x128xf32, #tpu.memory_space<vmem>>, vector<1x8x16x128xf32>
    tpu.vector_store %arg5[%c0_7, %c0_8, %c0_9, %c0_10], %10 {strides = array<i32>} : memref<1x8x16x128xf32, #tpu.memory_space<vmem>>, vector<1x8x16x128xf32>,
    return
  }
  func.func @transform_0(%arg0: i32, %arg1: i32) -> (i32, i32, i32, i32) {
    %c0_i32 = arith.constant 0 : i32
    %c0_i32_0 = arith.constant 0 : i32
    %c0_i32_1 = arith.constant 0 : i32
    return %arg0, %arg1, %c0_i32, %c0_i32_0 : i32, i32, i32, i32
  }
  func.func @transform_1(%arg0: i32, %arg1: i32) -> (i32, i32) {
    %c0_i32 = arith.constant 0 : i32
    %c0_i32_0 = arith.constant 0 : i32
    %c0_i32_1 = arith.constant 0 : i32
    return %c0_i32, %c0_i32_0 : i32, i32
  }
  func.func @transform_2(%arg0: i32, %arg1: i32) -> (i32, i32) {
    %c0_i32 = arith.constant 0 : i32
    %c0_i32_0 = arith.constant 0 : i32
    %c0_i32_1 = arith.constant 0 : i32
    return %c0_i32, %c0_i32_0 : i32, i32
  }
  func.func @transform_3(%arg0: i32, %arg1: i32) -> (i32, i32, i32, i32) {
    %c0_i32 = arith.constant 0 : i32
    %c0_i32_0 = arith.constant 0 : i32
    %c0_i32_1 = arith.constant 0 : i32
    return %arg0, %arg1, %c0_i32, %c0_i32_0 : i32, i32, i32, i32
  }
}

</mosaic_0001>

<llo_original>
// kernel: conv_block_forward.5
$region0: #{conv_block_forward.5}
  #allocation0 [shape = 'u32[]', space=smem, size = 0x4, offset = 0x4, fixed_abs, tag = 'smem constant byte address 0x4 - core index']
  #allocation1 [shape = 'u32[144,128]{1,0:T(1,128)}', space=vmem, size = 0x12000, scoped, tag = 'internal scratch']
  %s0 = inlined_call_operand.vmem [shape: f32[2,16,16,128], index: 0, kind: input, shape index: {}]
  %s1 = inlined_call_operand.vmem [shape: f32[1,128], index: 1, kind: input, shape index: {}]
  %s2 = inlined_call_operand.vmem [shape: f32[1,128], index: 2, kind: input, shape index: {}]
  %s3 = inlined_call_operand.vmem [shape: f32[2,16,16,128], index: 3, kind: output, shape index: {}]
  %s4 = sld [smem:[#allocation0]]
  $region45: #{conv_block_forward.5} parent=0
    _
  %s6 = ssub.s32 1, %s4
  %s7 = scalar_select 0, %s6, %s4
  loop: start=0, step=1, limit=6
  $region2: #{conv_block_forward.5} parent=0 // loop_pre_header
    _
  $region3: #{conv_block_forward.5} parent=0 // loop_header
    %s9 = sphi 0, %s13
    %p10 = scmp.ge.s32.totalorder %s9, 6
    %s16 = sphi 0, %s28
    %s17 = sphi 0, %s24
    %s18 = sphi 0, %s16
    %s19 = sphi 0, %s17
    %s20 = sphi 0, %s18
    %s21 = sphi 0, %s19
    %s33 = sphi 0, %s35
    %s36 = sphi 0, %s33
    %s37 = sphi 0, %s36
    %s53 = sphi 0, %s37
    %s57 = sphi 0, %s57
    %s59 = sphi 0, %s57
    %s60 = sphi 0, %s59
    %s74 = sphi 0, %s60
    %s78 = sphi 0, %s78
    %s80 = sphi 0, %s78
    %s81 = sphi 0, %s80
    %s95 = sphi 0, %s81
    %s103 = sphi 0, %s105
    %s106 = sphi 0, %s103
    %s107 = sphi 0, %s106
    %s123 = sphi 0, %s107
  $region4: #{conv_block_forward.5} parent=0 // loop_header_branch
    %12 = sbr.rel (%p10) target = $region8
  $region5: #{conv_block_forward.5} parent=0 // loop_body
    %s14 = ssub.s32 %s9, 1
    %s15 = ssub.s32 %s9, 2
    %s22 = sadd.s32 1, %s17
    %p23 = scmp.ge.s32.totalorder %s22, 2
    %s24 = scalar_select %p23, 0, %s22
    %s25 = sadd.s32 1, %s16
    %s26 = scalar_select %p23, %s25, %s16
    %p27 = scmp.ge.s32.totalorder %s26, 2
    %s28 = scalar_select %p27, 0, %s26
    %s29 = ssub.s32 %s16, %s28
    %s30 = ssub.s32 %s17, %s24
    %s31 = sor.u32 %s29, %s30
    %p32 = scmp.eq.s32.totalorder %s31, 0
    %s34 = sadd.s32 %s33, 1
    %s35 = scalar_select %p32, %s33, %s34
    %p38 = pneg %p32
    %p39 = scmp.eq.s32.totalorder %s9, 3
    %p40 = por %p38, %p39
    %p41 = scmp.ne.s32.totalorder %s33, %s36
    %p42 = scmp.eq.s32.totalorder %s9, 0
    %p43 = por %p41, %p42
    %p44 = scmp.ne.s32.totalorder %s33, %s36
    %p45 = scmp.eq.s32.totalorder %s14, 3
    %p46 = por %p44, %p45
    %p47 = scmp.ne.s32.totalorder %s36, %s37
    %p48 = scmp.eq.s32.totalorder %s14, 0
    %p49 = por %p47, %p48
    %p50 = scmp.ne.s32.totalorder %s36, %s37
    %p51 = scmp.eq.s32.totalorder %s15, 3
    %p52 = por %p50, %p51
    %p54 = scmp.ne.s32.totalorder %s37, %s53
    %p55 = scmp.eq.s32.totalorder %s15, 0
    %p56 = por %p54, %p55
    %s58 = sadd.s32 %s57, 1
    %p61 = scmp.eq.s32.totalorder %s9, 3
    %p62 = scmp.ne.s32.totalorder %s57, %s59
    %p63 = scmp.eq.s32.totalorder %s9, 0
    %p64 = por %p62, %p63
    %p65 = scmp.ne.s32.totalorder %s57, %s59
    %p66 = scmp.eq.s32.totalorder %s14, 3
    %p67 = por %p65, %p66
    %p68 = scmp.ne.s32.totalorder %s59, %s60
    %p69 = scmp.eq.s32.totalorder %s14, 0
    %p70 = por %p68, %p69
    %p71 = scmp.ne.s32.totalorder %s59, %s60
    %p72 = scmp.eq.s32.totalorder %s15, 3
    %p73 = por %p71, %p72
    %p75 = scmp.ne.s32.totalorder %s60, %s74
    %p76 = scmp.eq.s32.totalorder %s15, 0
    %p77 = por %p75, %p76
    %s79 = sadd.s32 %s78, 1
    %p82 = scmp.eq.s32.totalorder %s9, 3
    %p83 = scmp.ne.s32.totalorder %s78, %s80
    %p84 = scmp.eq.s32.totalorder %s9, 0
    %p85 = por %p83, %p84
    %p86 = scmp.ne.s32.totalorder %s78, %s80
    %p87 = scmp.eq.s32.totalorder %s14, 3
    %p88 = por %p86, %p87
    %p89 = scmp.ne.s32.totalorder %s80, %s81
    %p90 = scmp.eq.s32.totalorder %s14, 0
    %p91 = por %p89, %p90
    %p92 = scmp.ne.s32.totalorder %s80, %s81
    %p93 = scmp.eq.s32.totalorder %s15, 3
    %p94 = por %p92, %p93
    %p96 = scmp.ne.s32.totalorder %s81, %s95
    %p97 = scmp.eq.s32.totalorder %s15, 0
    %p98 = por %p96, %p97
    %s99 = ssub.s32 %s16, %s28
    %s100 = ssub.s32 %s17, %s24
    %s101 = sor.u32 %s99, %s100
    %p102 = scmp.eq.s32.totalorder %s101, 0
    %s104 = sadd.s32 %s103, 1
    %s105 = scalar_select %p102, %s103, %s104
    %p108 = pneg %p102
    %p109 = scmp.eq.s32.totalorder %s9, 3
    %p110 = por %p108, %p109
    %p111 = scmp.ne.s32.totalorder %s103, %s106
    %p112 = scmp.eq.s32.totalorder %s9, 0
    %p113 = por %p111, %p112
    %p114 = scmp.ne.s32.totalorder %s103, %s106
    %p115 = scmp.eq.s32.totalorder %s14, 3
    %p116 = por %p114, %p115
    %p117 = scmp.ne.s32.totalorder %s106, %s107
    %p118 = scmp.eq.s32.totalorder %s14, 0
    %p119 = por %p117, %p118
    %p120 = scmp.ne.s32.totalorder %s106, %s107
    %p121 = scmp.eq.s32.totalorder %s15, 3
    %p122 = por %p120, %p121
    %p124 = scmp.ne.s32.totalorder %s107, %s123
    %p125 = scmp.eq.s32.totalorder %s15, 0
    %p126 = por %p124, %p125
    %p127 = scmp.le.s32.totalorder 1, %s9
    %p128 = scmp.lt.s32.totalorder %s9, 5
    %p129 = pnand %p127, %p128
    %p130 = pneg %p129
    // Predicated region
    $region9: #{conv_block_forward.5} parent=5 // pred_check
      _
    $region10: #{conv_block_forward.5} parent=5 // pred_check_branch
      %132 = sbr.rel (%p129) target = $region12
    $region11: #{conv_block_forward.5} parent=5 // pred_region
      %s133 = ssub.s32 %s9, 1
      // Predicated region
      $region13: #{conv_block_forward.5} parent=11 // pred_check
        %p134 = pneg %p70
      $region14: #{conv_block_forward.5} parent=11 // pred_check_branch
        %136 = sbr.rel (%p134) target = $region16
      $region15: #{conv_block_forward.5} parent=11 // pred_region
        _
      $region16: #{conv_block_forward.5} parent=11 // pred_fallthru
        _
      // Predicated region
      $region17: #{conv_block_forward.5} parent=11 // pred_check
        %p137 = pneg %p91
      $region18: #{conv_block_forward.5} parent=11 // pred_check_branch
        %139 = sbr.rel (%p137) target = $region20
      $region19: #{conv_block_forward.5} parent=11 // pred_region
        _
      $region20: #{conv_block_forward.5} parent=11 // pred_fallthru
        _
    $region12: #{conv_block_forward.5} parent=5 // pred_fallthru
      _
    %p140 = scmp.lt.s32.totalorder %s9, 4
    // Predicated region
    $region21: #{conv_block_forward.5} parent=5 // pred_check
      %p141 = pneg %p140
    $region22: #{conv_block_forward.5} parent=5 // pred_check_branch
      %143 = sbr.rel (%p141) target = $region24
    $region23: #{conv_block_forward.5} parent=5 // pred_region
      // Predicated region
      $region25: #{conv_block_forward.5} parent=23 // pred_check
        %p144 = pneg %p43
      $region26: #{conv_block_forward.5} parent=23 // pred_check_branch
        %146 = sbr.rel (%p144) target = $region28
      $region27: #{conv_block_forward.5} parent=23 // pred_region
        %s147 = smul.u32 8, %s17
        %p148 = scmp.lt.s32.totalorder %s16, 1
        %s149 = scalar_select %p148, %s16, 1
        %p150 = scmp.lt.s32.totalorder %s147, 15
        %s151 = scalar_select %p150, %s147, 15
        %s152 = smul.addr %s151, 2
        %s153 = smul.addr %s149, 32
        %s154 = sadd.s32 %s152, %s153
        %s155 = smul.addr %s154, 8
        %s156 = scalar_lea.vmem %s0, %s155
        %s157 = smul.u32 8, %s17
      $region28: #{conv_block_forward.5} parent=23 // pred_fallthru
        _
    $region24: #{conv_block_forward.5} parent=5 // pred_fallthru
      _
    %p158 = scmp.le.s32.totalorder 1, %s9
    %p159 = scmp.lt.s32.totalorder %s9, 5
    %p160 = pnand %p158, %p159
    %p161 = pneg %p160
    // Predicated region
    $region29: #{conv_block_forward.5} parent=5 // pred_check
      _
    $region30: #{conv_block_forward.5} parent=5 // pred_check_branch
      %163 = sbr.rel (%p160) target = $region32
    $region31: #{conv_block_forward.5} parent=5 // pred_region
      %s164 = ssub.s32 %s9, 1
      %s165 = smul.u32 8, %s19
      %p166 = scmp.lt.s32.totalorder %s18, 1
      %s167 = scalar_select %p166, %s18, 1
      %p168 = scmp.lt.s32.totalorder %s165, 15
      %s169 = scalar_select %p168, %s165, 15
      %s170 = smul.addr %s169, 2
      %s171 = smul.addr %s167, 32
      %s172 = sadd.s32 %s170, %s171
      %s173 = smul.addr %s172, 8
      %s174 = scalar_lea.vmem %s0, %s173
      %p175 = pneg %p49
      %p176 = pneg %p46
      %p177 = pneg %p70
      %p178 = pneg %p67
      %p179 = pneg %p91
      %p180 = pneg %p88
      %p181 = pneg %p119
      %p182 = pneg %p116
      %s183 = smul.u32 8, %s19
      %p184 = scmp.lt.s32.totalorder %s18, 1
      %s185 = scalar_select %p184, %s18, 1
      %p186 = scmp.lt.s32.totalorder %s183, 15
      %s187 = scalar_select %p186, %s183, 15
      %s188 = smul.addr %s187, 2
      %s189 = smul.addr %s185, 32
      %s190 = sadd.s32 %s188, %s189
      %s191 = smul.addr %s190, 8
      %s192 = scalar_lea.vmem %s3, %s191
      %s193 = smul.u32 8, %s19
      %p194 = scmp.lt.s32.totalorder %s18, 1
      %s195 = scalar_select %p194, %s18, 1
      %p196 = scmp.lt.s32.totalorder %s193, 15
      %s197 = scalar_select %p196, %s193, 15
      %s198 = smul.addr %s197, 2
      %s199 = smul.addr %s195, 32
      %s200 = sadd.s32 %s198, %s199
      %s201 = smul.addr %s200, 8
      %s202 = scalar_lea.vmem %s0, %s201
      %s203 = smul.u32 8, %s19
      %s204 = smul.u32 8, %s19
      %p205 = scmp.lt.s32.totalorder %s18, 1
      %s206 = scalar_select %p205, %s18, 1
      %p207 = scmp.lt.s32.totalorder %s204, 15
      %s208 = scalar_select %p207, %s204, 15
      %s209 = smul.addr %s208, 2
      %s210 = smul.addr %s206, 32
      %s211 = sadd.s32 %s209, %s210
      %s212 = smul.addr %s211, 8
      %s213 = scalar_lea.vmem %s3, %s212
      %s214 = smul.u32 8, %s19
      %v215 = vld [vmem:[%s202] sm:$0xff]
      %v216 = vld [vmem:[%s202 + $0x8] sm:$0xff]
      %v217 = vld [vmem:[%s202 + $0x10] sm:$0xff]
      %v218 = vld [vmem:[%s202 + $0x18] sm:$0xff]
      %v219 = vld [vmem:[%s202 + $0x20] sm:$0xff]
      %v220 = vld [vmem:[%s202 + $0x28] sm:$0xff]
      %v221 = vld [vmem:[%s202 + $0x30] sm:$0xff]
      %v222 = vld [vmem:[%s202 + $0x38] sm:$0xff]
      %v223 = vld [vmem:[%s202 + $0x40] sm:$0xff]
      %v224 = vld [vmem:[%s202 + $0x48] sm:$0xff]
      %v225 = vld [vmem:[%s202 + $0x50] sm:$0xff]
      %v226 = vld [vmem:[%s202 + $0x58] sm:$0xff]
      %v227 = vld [vmem:[%s202 + $0x60] sm:$0xff]
      %v228 = vld [vmem:[%s202 + $0x68] sm:$0xff]
      %v229 = vld [vmem:[%s202 + $0x70] sm:$0xff]
      %v230 = vld [vmem:[%s202 + $0x78] sm:$0xff]
      %v231 = vld [vmem:[%s1] sm:$0x1]
      %v233 = vlaneseq
      %v234 = vshrl.u32 %v233, 7
      %v235 = vsub.s32 0, %v234
      %v236 = vrot.slane %v231, %v235
      %v238 = vmul.f32 %v215, %v236
      %v239 = vmul.f32 %v216, %v236
      %v240 = vmul.f32 %v217, %v236
      %v241 = vmul.f32 %v218, %v236
      %v242 = vmul.f32 %v219, %v236
      %v243 = vmul.f32 %v220, %v236
      %v244 = vmul.f32 %v221, %v236
      %v245 = vmul.f32 %v222, %v236
      %v246 = vmul.f32 %v223, %v236
      %v247 = vmul.f32 %v224, %v236
      %v248 = vmul.f32 %v225, %v236
      %v249 = vmul.f32 %v226, %v236
      %v250 = vmul.f32 %v227, %v236
      %v251 = vmul.f32 %v228, %v236
      %v252 = vmul.f32 %v229, %v236
      %v253 = vmul.f32 %v230, %v236
      %v254 = vld [vmem:[%s2] sm:$0x1]
      %v256 = vlaneseq
      %v257 = vshrl.u32 %v256, 7
      %v258 = vsub.s32 0, %v257
      %v259 = vrot.slane %v254, %v258
      %v261 = vadd.f32 %v238, %v259
      %v262 = vadd.f32 %v239, %v259
      %v263 = vadd.f32 %v240, %v259
      %v264 = vadd.f32 %v241, %v259
      %v265 = vadd.f32 %v242, %v259
      %v266 = vadd.f32 %v243, %v259
      %v267 = vadd.f32 %v244, %v259
      %v268 = vadd.f32 %v245, %v259
      %v269 = vadd.f32 %v246, %v259
      %v270 = vadd.f32 %v247, %v259
      %v271 = vadd.f32 %v248, %v259
      %v272 = vadd.f32 %v249, %v259
      %v273 = vadd.f32 %v250, %v259
      %v274 = vadd.f32 %v251, %v259
      %v275 = vadd.f32 %v252, %v259
      %v276 = vadd.f32 %v253, %v259
      %v277 = vmax.f32 %v261, 0.0
      %v278 = vmax.f32 %v262, 0.0
      %v279 = vmax.f32 %v263, 0.0
      %v280 = vmax.f32 %v264, 0.0
      %v281 = vmax.f32 %v265, 0.0
      %v282 = vmax.f32 %v266, 0.0
      %v283 = vmax.f32 %v267, 0.0
      %v284 = vmax.f32 %v268, 0.0
      %v285 = vmax.f32 %v269, 0.0
      %v286 = vmax.f32 %v270, 0.0
      %v287 = vmax.f32 %v271, 0.0
      %v288 = vmax.f32 %v272, 0.0
      %v289 = vmax.f32 %v273, 0.0
      %v290 = vmax.f32 %v274, 0.0
      %v291 = vmax.f32 %v275, 0.0
      %v292 = vmax.f32 %v276, 0.0
      %293 = vst [vmem:[%s213] sm:$0xff] %v277
      %294 = vst [vmem:[%s213 + $0x8] sm:$0xff] %v278
      %295 = vst [vmem:[%s213 + $0x10] sm:$0xff] %v279
      %296 = vst [vmem:[%s213 + $0x18] sm:$0xff] %v280
      %297 = vst [vmem:[%s213 + $0x20] sm:$0xff] %v281
      %298 = vst [vmem:[%s213 + $0x28] sm:$0xff] %v282
      %299 = vst [vmem:[%s213 + $0x30] sm:$0xff] %v283
      %300 = vst [vmem:[%s213 + $0x38] sm:$0xff] %v284
      %301 = vst [vmem:[%s213 + $0x40] sm:$0xff] %v285
      %302 = vst [vmem:[%s213 + $0x48] sm:$0xff] %v286
      %303 = vst [vmem:[%s213 + $0x50] sm:$0xff] %v287
      %304 = vst [vmem:[%s213 + $0x58] sm:$0xff] %v288
      %305 = vst [vmem:[%s213 + $0x60] sm:$0xff] %v289
      %306 = vst [vmem:[%s213 + $0x68] sm:$0xff] %v290
      %307 = vst [vmem:[%s213 + $0x70] sm:$0xff] %v291
      %308 = vst [vmem:[%s213 + $0x78] sm:$0xff] %v292
      %s309 = smul.u32 8, %s19
      %p310 = scmp.lt.s32.totalorder %s18, 1
      %s311 = scalar_select %p310, %s18, 1
      %p312 = scmp.lt.s32.totalorder %s309, 15
      %s313 = scalar_select %p312, %s309, 15
      %s314 = smul.addr %s313, 2
      %s315 = smul.addr %s311, 32
      %s316 = sadd.s32 %s314, %s315
      %s317 = smul.addr %s316, 8
      %s318 = scalar_lea.vmem %s3, %s317
      // Predicated region
      $region33: #{conv_block_forward.5} parent=31 // pred_check
        %p319 = pneg %p116
      $region34: #{conv_block_forward.5} parent=31 // pred_check_branch
        %321 = sbr.rel (%p319) target = $region36
      $region35: #{conv_block_forward.5} parent=31 // pred_region
        %s322 = smul.u32 8, %s19
      $region36: #{conv_block_forward.5} parent=31 // pred_fallthru
        _
    $region32: #{conv_block_forward.5} parent=5 // pred_fallthru
      _
    %p323 = scmp.le.s32.totalorder 2, %s9
    // Predicated region
    $region37: #{conv_block_forward.5} parent=5 // pred_check
      %p324 = pneg %p323
    $region38: #{conv_block_forward.5} parent=5 // pred_check_branch
      %326 = sbr.rel (%p324) target = $region40
    $region39: #{conv_block_forward.5} parent=5 // pred_region
      %s327 = ssub.s32 %s9, 2
      // Predicated region
      $region41: #{conv_block_forward.5} parent=39 // pred_check
        %p328 = pneg %p122
      $region42: #{conv_block_forward.5} parent=39 // pred_check_branch
        %330 = sbr.rel (%p328) target = $region44
      $region43: #{conv_block_forward.5} parent=39 // pred_region
        %s331 = smul.u32 8, %s21
        %p332 = scmp.lt.s32.totalorder %s20, 1
        %s333 = scalar_select %p332, %s20, 1
        %p334 = scmp.lt.s32.totalorder %s331, 15
        %s335 = scalar_select %p334, %s331, 15
        %s336 = smul.addr %s335, 2
        %s337 = smul.addr %s333, 32
        %s338 = sadd.s32 %s336, %s337
        %s339 = smul.addr %s338, 8
        %s340 = scalar_lea.vmem %s3, %s339
      $region44: #{conv_block_forward.5} parent=39 // pred_fallthru
        _
    $region40: #{conv_block_forward.5} parent=5 // pred_fallthru
      _
  $region6: #{conv_block_forward.5} parent=0 // loop_footer
    %s13 = sadd.s32 1, %s9
  $region7: #{conv_block_forward.5} parent=0 // loop_footer_branch
    %8 = sbr.rel target = $region3
  $region8: #{conv_block_forward.5} parent=0 // loop_exit
    _

// kernel: conv_block_forward.3
$region0: #{conv_block_forward.3}
  #allocation0 [shape = 'u32[]', space=smem, size = 0x4, offset = 0x4, fixed_abs, tag = 'smem constant byte address 0x4 - core index']
  #allocation1 [shape = 'u32[144,128]{1,0:T(1,128)}', space=vmem, size = 0x12000, scoped, tag = 'internal scratch']
  #allocation2 [shape = 'f32[10,18,128]{2,1,0:T(8,128)}', space=vmem, size = 0x1e000, scoped, tag = 'scratch operand']
  #allocation3 [shape = 'f32[128,1152]{1,0:T(8,128)}', space=vmem, size = 0x90000, scoped, tag = 'scratch operand']
  %s0 = inlined_call_operand.vmem [shape: f32[2,16,16,128], index: 0, kind: input, shape index: {}, may-alias: {0,1,2}]
  %s1 = inlined_call_operand.vmem [shape: f32[2,16,16,128], index: 1, kind: input, shape index: {}, may-alias: {0,1,2}]
  %s2 = inlined_call_operand.vmem [shape: f32[2,16,16,128], index: 2, kind: input, shape index: {}, may-alias: {0,1,2}]
  %s3 = inlined_call_operand.vmem [shape: f32[1152,128], index: 3, kind: input, shape index: {}]
  %s4 = inlined_call_operand.vmem [shape: f32[1,128], index: 4, kind: input, shape index: {}]
  %s5 = inlined_call_operand.vmem [shape: f32[1,128], index: 5, kind: input, shape index: {}]
  %s6 = inlined_call_operand.vmem [shape: f32[1,128], index: 6, kind: input, shape index: {}]
  %s7 = inlined_call_operand.vmem [shape: f32[2,16,16,128], index: 7, kind: output, shape index: {0}]
  %s8 = inlined_call_operand.vmem [shape: f32[2,2,2,128], index: 8, kind: output, shape index: {1}]
  %9 = xla_tuple %s7, %s8
  %s10 = sld [smem:[#allocation0]]
  $region69: #{conv_block_forward.3} parent=0
    _
  %s12 = ssub.s32 1, %s10
  %s13 = scalar_select 0, %s12, %s10
  loop: start=0, step=1, limit=6
  $region2: #{conv_block_forward.3} parent=0 // loop_pre_header
    _
  $region3: #{conv_block_forward.3} parent=0 // loop_header
    %s15 = sphi 0, %s19
    %p16 = scmp.ge.s32.totalorder %s15, 6
    %s22 = sphi 0, %s34
    %s23 = sphi 0, %s30
    %s24 = sphi 0, %s22
    %s25 = sphi 0, %s23
    %s26 = sphi 0, %s24
    %s27 = sphi 0, %s25
    %s39 = sphi 0, %s41
    %s42 = sphi 0, %s39
    %s43 = sphi 0, %s42
    %s59 = sphi 0, %s43
    %s75 = sphi 0, %s77
    %s78 = sphi 0, %s75
    %s79 = sphi 0, %s78
    %s95 = sphi 0, %s79
    %s111 = sphi 0, %s113
    %s114 = sphi 0, %s111
    %s115 = sphi 0, %s114
    %s131 = sphi 0, %s115
    %s135 = sphi 0, %s135
    %s137 = sphi 0, %s135
    %s138 = sphi 0, %s137
    %s152 = sphi 0, %s138
    %s156 = sphi 0, %s156
    %s158 = sphi 0, %s156
    %s159 = sphi 0, %s158
    %s173 = sphi 0, %s159
    %s177 = sphi 0, %s177
    %s179 = sphi 0, %s177
    %s180 = sphi 0, %s179
    %s194 = sphi 0, %s180
    %s198 = sphi 0, %s198
    %s200 = sphi 0, %s198
    %s201 = sphi 0, %s200
    %s215 = sphi 0, %s201
    %s223 = sphi 0, %s225
    %s226 = sphi 0, %s223
    %s227 = sphi 0, %s226
    %s243 = sphi 0, %s227
    %s251 = sphi 0, %s253
    %s254 = sphi 0, %s251
    %s255 = sphi 0, %s254
    %s271 = sphi 0, %s255
  $region4: #{conv_block_forward.3} parent=0 // loop_header_branch
    %18 = sbr.rel (%p16) target = $region8
  $region5: #{conv_block_forward.3} parent=0 // loop_body
    %s20 = ssub.s32 %s15, 1
    %s21 = ssub.s32 %s15, 2
    %s28 = sadd.s32 1, %s23
    %p29 = scmp.ge.s32.totalorder %s28, 2
    %s30 = scalar_select %p29, 0, %s28
    %s31 = sadd.s32 1, %s22
    %s32 = scalar_select %p29, %s31, %s22
    %p33 = scmp.ge.s32.totalorder %s32, 2
    %s34 = scalar_select %p33, 0, %s32
    %s35 = ssub.s32 %s22, %s34
    %s36 = ssub.s32 %s23, %s30
    %s37 = sor.u32 %s35, %s36
    %p38 = scmp.eq.s32.totalorder %s37, 0
    %s40 = sadd.s32 %s39, 1
    %s41 = scalar_select %p38, %s39, %s40
    %p44 = pneg %p38
    %p45 = scmp.eq.s32.totalorder %s15, 3
    %p46 = por %p44, %p45
    %p47 = scmp.ne.s32.totalorder %s39, %s42
    %p48 = scmp.eq.s32.totalorder %s15, 0
    %p49 = por %p47, %p48
    %p50 = scmp.ne.s32.totalorder %s39, %s42
    %p51 = scmp.eq.s32.totalorder %s20, 3
    %p52 = por %p50, %p51
    %p53 = scmp.ne.s32.totalorder %s42, %s43
    %p54 = scmp.eq.s32.totalorder %s20, 0
    %p55 = por %p53, %p54
    %p56 = scmp.ne.s32.totalorder %s42, %s43
    %p57 = scmp.eq.s32.totalorder %s21, 3
    %p58 = por %p56, %p57
    %p60 = scmp.ne.s32.totalorder %s43, %s59
    %p61 = scmp.eq.s32.totalorder %s21, 0
    %p62 = por %p60, %p61
    %s63 = smul.u32 %s23, 8
    %s64 = ssub.s32 %s63, 1
    %p65 = scmp.gt.s32.totalorder %s64, 0
    %s66 = scalar_select %p65, %s64, 0
    %s67 = smul.u32 %s30, 8
    %s68 = ssub.s32 %s67, 1
    %p69 = scmp.gt.s32.totalorder %s68, 0
    %s70 = scalar_select %p69, %s68, 0
    %s71 = ssub.s32 %s22, %s34
    %s72 = ssub.s32 %s66, %s70
    %s73 = sor.u32 %s71, %s72
    %p74 = scmp.eq.s32.totalorder %s73, 0
    %s76 = sadd.s32 %s75, 1
    %s77 = scalar_select %p74, %s75, %s76
    %p80 = pneg %p74
    %p81 = scmp.eq.s32.totalorder %s15, 3
    %p82 = por %p80, %p81
    %p83 = scmp.ne.s32.totalorder %s75, %s78
    %p84 = scmp.eq.s32.totalorder %s15, 0
    %p85 = por %p83, %p84
    %p86 = scmp.ne.s32.totalorder %s75, %s78
    %p87 = scmp.eq.s32.totalorder %s20, 3
    %p88 = por %p86, %p87
    %p89 = scmp.ne.s32.totalorder %s78, %s79
    %p90 = scmp.eq.s32.totalorder %s20, 0
    %p91 = por %p89, %p90
    %p92 = scmp.ne.s32.totalorder %s78, %s79
    %p93 = scmp.eq.s32.totalorder %s21, 3
    %p94 = por %p92, %p93
    %p96 = scmp.ne.s32.totalorder %s79, %s95
    %p97 = scmp.eq.s32.totalorder %s21, 0
    %p98 = por %p96, %p97
    %s99 = sadd.s32 %s23, 1
    %s100 = smul.u32 %s99, 8
    %p101 = scmp.lt.s32.totalorder %s100, 15
    %s102 = scalar_select %p101, %s100, 15
    %s103 = sadd.s32 %s30, 1
    %s104 = smul.u32 %s103, 8
    %p105 = scmp.lt.s32.totalorder %s104, 15
    %s106 = scalar_select %p105, %s104, 15
    %s107 = ssub.s32 %s22, %s34
    %s108 = ssub.s32 %s102, %s106
    %s109 = sor.u32 %s107, %s108
    %p110 = scmp.eq.s32.totalorder %s109, 0
    %s112 = sadd.s32 %s111, 1
    %s113 = scalar_select %p110, %s111, %s112
    %p116 = pneg %p110
    %p117 = scmp.eq.s32.totalorder %s15, 3
    %p118 = por %p116, %p117
    %p119 = scmp.ne.s32.totalorder %s111, %s114
    %p120 = scmp.eq.s32.totalorder %s15, 0
    %p121 = por %p119, %p120
    %p122 = scmp.ne.s32.totalorder %s111, %s114
    %p123 = scmp.eq.s32.totalorder %s20, 3
    %p124 = por %p122, %p123
    %p125 = scmp.ne.s32.totalorder %s114, %s115
    %p126 = scmp.eq.s32.totalorder %s20, 0
    %p127 = por %p125, %p126
    %p128 = scmp.ne.s32.totalorder %s114, %s115
    %p129 = scmp.eq.s32.totalorder %s21, 3
    %p130 = por %p128, %p129
    %p132 = scmp.ne.s32.totalorder %s115, %s131
    %p133 = scmp.eq.s32.totalorder %s21, 0
    %p134 = por %p132, %p133
    %s136 = sadd.s32 %s135, 1
    %p139 = scmp.eq.s32.totalorder %s15, 3
    %p140 = scmp.ne.s32.totalorder %s135, %s137
    %p141 = scmp.eq.s32.totalorder %s15, 0
    %p142 = por %p140, %p141
    %p143 = scmp.ne.s32.totalorder %s135, %s137
    %p144 = scmp.eq.s32.totalorder %s20, 3
    %p145 = por %p143, %p144
    %p146 = scmp.ne.s32.totalorder %s137, %s138
    %p147 = scmp.eq.s32.totalorder %s20, 0
    %p148 = por %p146, %p147
    %p149 = scmp.ne.s32.totalorder %s137, %s138
    %p150 = scmp.eq.s32.totalorder %s21, 3
    %p151 = por %p149, %p150
    %p153 = scmp.ne.s32.totalorder %s138, %s152
    %p154 = scmp.eq.s32.totalorder %s21, 0
    %p155 = por %p153, %p154
    %s157 = sadd.s32 %s156, 1
    %p160 = scmp.eq.s32.totalorder %s15, 3
    %p161 = scmp.ne.s32.totalorder %s156, %s158
    %p162 = scmp.eq.s32.totalorder %s15, 0
    %p163 = por %p161, %p162
    %p164 = scmp.ne.s32.totalorder %s156, %s158
    %p165 = scmp.eq.s32.totalorder %s20, 3
    %p166 = por %p164, %p165
    %p167 = scmp.ne.s32.totalorder %s158, %s159
    %p168 = scmp.eq.s32.totalorder %s20, 0
    %p169 = por %p167, %p168
    %p170 = scmp.ne.s32.totalorder %s158, %s159
    %p171 = scmp.eq.s32.totalorder %s21, 3
    %p172 = por %p170, %p171
    %p174 = scmp.ne.s32.totalorder %s159, %s173
    %p175 = scmp.eq.s32.totalorder %s21, 0
    %p176 = por %p174, %p175
    %s178 = sadd.s32 %s177, 1
    %p181 = scmp.eq.s32.totalorder %s15, 3
    %p182 = scmp.ne.s32.totalorder %s177, %s179
    %p183 = scmp.eq.s32.totalorder %s15, 0
    %p184 = por %p182, %p183
    %p185 = scmp.ne.s32.totalorder %s177, %s179
    %p186 = scmp.eq.s32.totalorder %s20, 3
    %p187 = por %p185, %p186
    %p188 = scmp.ne.s32.totalorder %s179, %s180
    %p189 = scmp.eq.s32.totalorder %s20, 0
    %p190 = por %p188, %p189
    %p191 = scmp.ne.s32.totalorder %s179, %s180
    %p192 = scmp.eq.s32.totalorder %s21, 3
    %p193 = por %p191, %p192
    %p195 = scmp.ne.s32.totalorder %s180, %s194
    %p196 = scmp.eq.s32.totalorder %s21, 0
    %p197 = por %p195, %p196
    %s199 = sadd.s32 %s198, 1
    %p202 = scmp.eq.s32.totalorder %s15, 3
    %p203 = scmp.ne.s32.totalorder %s198, %s200
    %p204 = scmp.eq.s32.totalorder %s15, 0
    %p205 = por %p203, %p204
    %p206 = scmp.ne.s32.totalorder %s198, %s200
    %p207 = scmp.eq.s32.totalorder %s20, 3
    %p208 = por %p206, %p207
    %p209 = scmp.ne.s32.totalorder %s200, %s201
    %p210 = scmp.eq.s32.totalorder %s20, 0
    %p211 = por %p209, %p210
    %p212 = scmp.ne.s32.totalorder %s200, %s201
    %p213 = scmp.eq.s32.totalorder %s21, 3
    %p214 = por %p212, %p213
    %p216 = scmp.ne.s32.totalorder %s201, %s215
    %p217 = scmp.eq.s32.totalorder %s21, 0
    %p218 = por %p216, %p217
    %s219 = ssub.s32 %s22, %s34
    %s220 = ssub.s32 %s23, %s30
    %s221 = sor.u32 %s219, %s220
    %p222 = scmp.eq.s32.totalorder %s221, 0
    %s224 = sadd.s32 %s223, 1
    %s225 = scalar_select %p222, %s223, %s224
    %p228 = pneg %p222
    %p229 = scmp.eq.s32.totalorder %s15, 3
    %p230 = por %p228, %p229
    %p231 = scmp.ne.s32.totalorder %s223, %s226
    %p232 = scmp.eq.s32.totalorder %s15, 0
    %p233 = por %p231, %p232
    %p234 = scmp.ne.s32.totalorder %s223, %s226
    %p235 = scmp.eq.s32.totalorder %s20, 3
    %p236 = por %p234, %p235
    %p237 = scmp.ne.s32.totalorder %s226, %s227
    %p238 = scmp.eq.s32.totalorder %s20, 0
    %p239 = por %p237, %p238
    %p240 = scmp.ne.s32.totalorder %s226, %s227
    %p241 = scmp.eq.s32.totalorder %s21, 3
    %p242 = por %p240, %p241
    %p244 = scmp.ne.s32.totalorder %s227, %s243
    %p245 = scmp.eq.s32.totalorder %s21, 0
    %p246 = por %p244, %p245
    %s247 = ssub.s32 %s22, %s34
    %s248 = ssub.s32 %s23, %s30
    %s249 = sor.u32 %s247, %s248
    %p250 = scmp.eq.s32.totalorder %s249, 0
    %s252 = sadd.s32 %s251, 1
    %s253 = scalar_select %p250, %s251, %s252
    %p256 = pneg %p250
    %p257 = scmp.eq.s32.totalorder %s15, 3
    %p258 = por %p256, %p257
    %p259 = scmp.ne.s32.totalorder %s251, %s254
    %p260 = scmp.eq.s32.totalorder %s15, 0
    %p261 = por %p259, %p260
    %p262 = scmp.ne.s32.totalorder %s251, %s254
    %p263 = scmp.eq.s32.totalorder %s20, 3
    %p264 = por %p262, %p263
    %p265 = scmp.ne.s32.totalorder %s254, %s255
    %p266 = scmp.eq.s32.totalorder %s20, 0
    %p267 = por %p265, %p266
    %p268 = scmp.ne.s32.totalorder %s254, %s255
    %p269 = scmp.eq.s32.totalorder %s21, 3
    %p270 = por %p268, %p269
    %p272 = scmp.ne.s32.totalorder %s255, %s271
    %p273 = scmp.eq.s32.totalorder %s21, 0
    %p274 = por %p272, %p273
    %p275 = scmp.le.s32.totalorder 1, %s15
    %p276 = scmp.lt.s32.totalorder %s15, 5
    %p277 = pnand %p275, %p276
    %p278 = pneg %p277
    // Predicated region
    $region9: #{conv_block_forward.3} parent=5 // pred_check
      _
    $region10: #{conv_block_forward.3} parent=5 // pred_check_branch
      %280 = sbr.rel (%p277) target = $region12
    $region11: #{conv_block_forward.3} parent=5 // pred_region
      %s281 = ssub.s32 %s15, 1
      // Predicated region
      $region13: #{conv_block_forward.3} parent=11 // pred_check
        %p282 = pneg %p148
      $region14: #{conv_block_forward.3} parent=11 // pred_check_branch
        %284 = sbr.rel (%p282) target = $region16
      $region15: #{conv_block_forward.3} parent=11 // pred_region
        _
      $region16: #{conv_block_forward.3} parent=11 // pred_fallthru
        _
      // Predicated region
      $region17: #{conv_block_forward.3} parent=11 // pred_check
        %p285 = pneg %p169
      $region18: #{conv_block_forward.3} parent=11 // pred_check_branch
        %287 = sbr.rel (%p285) target = $region20
      $region19: #{conv_block_forward.3} parent=11 // pred_region
        _
      $region20: #{conv_block_forward.3} parent=11 // pred_fallthru
        _
      // Predicated region
      $region21: #{conv_block_forward.3} parent=11 // pred_check
        %p288 = pneg %p190
      $region22: #{conv_block_forward.3} parent=11 // pred_check_branch
        %290 = sbr.rel (%p288) target = $region24
      $region23: #{conv_block_forward.3} parent=11 // pred_region
        _
      $region24: #{conv_block_forward.3} parent=11 // pred_fallthru
        _
      // Predicated region
      $region25: #{conv_block_forward.3} parent=11 // pred_check
        %p291 = pneg %p211
      $region26: #{conv_block_forward.3} parent=11 // pred_check_branch
        %293 = sbr.rel (%p291) target = $region28
      $region27: #{conv_block_forward.3} parent=11 // pred_region
        _
      $region28: #{conv_block_forward.3} parent=11 // pred_fallthru
        _
    $region12: #{conv_block_forward.3} parent=5 // pred_fallthru
      _
    %p294 = scmp.lt.s32.totalorder %s15, 4
    // Predicated region
    $region29: #{conv_block_forward.3} parent=5 // pred_check
      %p295 = pneg %p294
    $region30: #{conv_block_forward.3} parent=5 // pred_check_branch
      %297 = sbr.rel (%p295) target = $region32
    $region31: #{conv_block_forward.3} parent=5 // pred_region
      // Predicated region
      $region33: #{conv_block_forward.3} parent=31 // pred_check
        %p298 = pneg %p49
      $region34: #{conv_block_forward.3} parent=31 // pred_check_branch
        %300 = sbr.rel (%p298) target = $region36
      $region35: #{conv_block_forward.3} parent=31 // pred_region
        %s301 = smul.u32 8, %s23
        %p302 = scmp.lt.s32.totalorder %s22, 1
        %s303 = scalar_select %p302, %s22, 1
        %p304 = scmp.lt.s32.totalorder %s301, 15
        %s305 = scalar_select %p304, %s301, 15
        %s306 = smul.addr %s305, 2
        %s307 = smul.addr %s303, 32
        %s308 = sadd.s32 %s306, %s307
        %s309 = smul.addr %s308, 8
        %s310 = scalar_lea.vmem %s0, %s309
        %s311 = smul.u32 8, %s23
      $region36: #{conv_block_forward.3} parent=31 // pred_fallthru
        _
      // Predicated region
      $region37: #{conv_block_forward.3} parent=31 // pred_check
        %p312 = pneg %p85
      $region38: #{conv_block_forward.3} parent=31 // pred_check_branch
        %314 = sbr.rel (%p312) target = $region40
      $region39: #{conv_block_forward.3} parent=31 // pred_region
        %s315 = smul.u32 %s23, 8
        %s316 = ssub.s32 %s315, 1
        %p317 = scmp.gt.s32.totalorder %s316, 0
        %s318 = scalar_select %p317, %s316, 0
        %p319 = scmp.lt.s32.totalorder %s22, 1
        %s320 = scalar_select %p319, %s22, 1
        %p321 = scmp.lt.s32.totalorder %s318, 15
        %s322 = scalar_select %p321, %s318, 15
        %s323 = smul.addr %s322, 2
        %s324 = smul.addr %s320, 32
        %s325 = sadd.s32 %s323, %s324
        %s326 = smul.addr %s325, 8
        %s327 = scalar_lea.vmem %s1, %s326
        %s328 = smul.u32 %s23, 8
        %s329 = ssub.s32 %s328, 1
        %p330 = scmp.gt.s32.totalorder %s329, 0
        %s331 = scalar_select %p330, %s329, 0
      $region40: #{conv_block_forward.3} parent=31 // pred_fallthru
        _
      // Predicated region
      $region41: #{conv_block_forward.3} parent=31 // pred_check
        %p332 = pneg %p121
      $region42: #{conv_block_forward.3} parent=31 // pred_check_branch
        %334 = sbr.rel (%p332) target = $region44
      $region43: #{conv_block_forward.3} parent=31 // pred_region
        %s335 = sadd.s32 %s23, 1
        %s336 = smul.u32 %s335, 8
        %p337 = scmp.lt.s32.totalorder %s336, 15
        %s338 = scalar_select %p337, %s336, 15
        %p339 = scmp.lt.s32.totalorder %s22, 1
        %s340 = scalar_select %p339, %s22, 1
        %p341 = scmp.lt.s32.totalorder %s338, 15
        %s342 = scalar_select %p341, %s338, 15
        %s343 = smul.addr %s342, 2
        %s344 = smul.addr %s340, 32
        %s345 = sadd.s32 %s343, %s344
        %s346 = smul.addr %s345, 8
        %s347 = scalar_lea.vmem %s2, %s346
        %s348 = sadd.s32 %s23, 1
        %s349 = smul.u32 %s348, 8
        %p350 = scmp.lt.s32.totalorder %s349, 15
        %s351 = scalar_select %p350, %s349, 15
      $region44: #{conv_block_forward.3} parent=31 // pred_fallthru
        _
    $region32: #{conv_block_forward.3} parent=5 // pred_fallthru
      _
    %p352 = scmp.le.s32.totalorder 1, %s15
    %p353 = scmp.lt.s32.totalorder %s15, 5
    %p354 = pnand %p352, %p353
    %p355 = pneg %p354
    // Predicated region
    $region45: #{conv_block_forward.3} parent=5 // pred_check
      _
    $region46: #{conv_block_forward.3} parent=5 // pred_check_branch
      %357 = sbr.rel (%p354) target = $region48
    $region47: #{conv_block_forward.3} parent=5 // pred_region
      %s358 = ssub.s32 %s15, 1
      %s359 = smul.u32 8, %s25
      %p360 = scmp.lt.s32.totalorder %s24, 1
      %s361 = scalar_select %p360, %s24, 1
      %p362 = scmp.lt.s32.totalorder %s359, 15
      %s363 = scalar_select %p362, %s359, 15
      %s364 = smul.addr %s363, 2
      %s365 = smul.addr %s361, 32
      %s366 = sadd.s32 %s364, %s365
      %s367 = smul.addr %s366, 8
      %s368 = scalar_lea.vmem %s0, %s367
      %p369 = pneg %p55
      %p370 = pneg %p52
      %s371 = smul.u32 %s25, 8
      %s372 = ssub.s32 %s371, 1
      %p373 = scmp.gt.s32.totalorder %s372, 0
      %s374 = scalar_select %p373, %s372, 0
      %p375 = scmp.lt.s32.totalorder %s24, 1
      %s376 = scalar_select %p375, %s24, 1
      %p377 = scmp.lt.s32.totalorder %s374, 15
      %s378 = scalar_select %p377, %s374, 15
      %s379 = smul.addr %s378, 2
      %s380 = smul.addr %s376, 32
      %s381 = sadd.s32 %s379, %s380
      %s382 = smul.addr %s381, 8
      %s383 = scalar_lea.vmem %s1, %s382
      %p384 = pneg %p91
      %p385 = pneg %p88
      %s386 = sadd.s32 %s25, 1
      %s387 = smul.u32 %s386, 8
      %p388 = scmp.lt.s32.totalorder %s387, 15
      %s389 = scalar_select %p388, %s387, 15
      %p390 = scmp.lt.s32.totalorder %s24, 1
      %s391 = scalar_select %p390, %s24, 1
      %p392 = scmp.lt.s32.totalorder %s389, 15
      %s393 = scalar_select %p392, %s389, 15
      %s394 = smul.addr %s393, 2
      %s395 = smul.addr %s391, 32
      %s396 = sadd.s32 %s394, %s395
      %s397 = smul.addr %s396, 8
      %s398 = scalar_lea.vmem %s2, %s397
      %p399 = pneg %p127
      %p400 = pneg %p124
      %p401 = pneg %p148
      %p402 = pneg %p145
      %p403 = pneg %p169
      %p404 = pneg %p166
      %p405 = pneg %p190
      %p406 = pneg %p187
      %p407 = pneg %p211
      %p408 = pneg %p208
      %p409 = pneg %p239
      %p410 = pneg %p236
      %s411 = smul.u32 8, %s25
      %p412 = scmp.lt.s32.totalorder %s24, 1
      %s413 = scalar_select %p412, %s24, 1
      %p414 = scmp.lt.s32.totalorder %s411, 15
      %s415 = scalar_select %p414, %s411, 15
      %s416 = smul.addr %s415, 2
      %s417 = smul.addr %s413, 32
      %s418 = sadd.s32 %s416, %s417
      %s419 = smul.addr %s418, 8
      %s420 = scalar_lea.vmem %s7, %s419
      %p421 = pneg %p267
      %p422 = pneg %p264
      %p423 = scmp.lt.s32.totalorder %s24, 1
      %s424 = scalar_select %p423, %s24, 1
      %p425 = scmp.lt.s32.totalorder %s25, 1
      %s426 = scalar_select %p425, %s25, 1
      %s427 = smul.addr %s424, 2
      %s428 = sadd.s32 %s426, %s427
      %s429 = smul.addr %s428, 2
      %s430 = scalar_lea.vmem %s8, %s429
      %s431 = smul.u32 8, %s25
      %p432 = scmp.lt.s32.totalorder %s24, 1
      %s433 = scalar_select %p432, %s24, 1
      %p434 = scmp.lt.s32.totalorder %s431, 15
      %s435 = scalar_select %p434, %s431, 15
      %s436 = smul.addr %s435, 2
      %s437 = smul.addr %s433, 32
      %s438 = sadd.s32 %s436, %s437
      %s439 = smul.addr %s438, 8
      %s440 = scalar_lea.vmem %s0, %s439
      %s441 = smul.u32 8, %s25
      %s442 = smul.u32 %s25, 8
      %s443 = ssub.s32 %s442, 1
      %p444 = scmp.gt.s32.totalorder %s443, 0
      %s445 = scalar_select %p444, %s443, 0
      %p446 = scmp.lt.s32.totalorder %s24, 1
      %s447 = scalar_select %p446, %s24, 1
      %p448 = scmp.lt.s32.totalorder %s445, 15
      %s449 = scalar_select %p448, %s445, 15
      %s450 = smul.addr %s449, 2
      %s451 = smul.addr %s447, 32
      %s452 = sadd.s32 %s450, %s451
      %s453 = smul.addr %s452, 8
      %s454 = scalar_lea.vmem %s1, %s453
      %s455 = smul.u32 %s25, 8
      %s456 = ssub.s32 %s455, 1
      %p457 = scmp.gt.s32.totalorder %s456, 0
      %s458 = scalar_select %p457, %s456, 0
      %s459 = sadd.s32 %s25, 1
      %s460 = smul.u32 %s459, 8
      %p461 = scmp.lt.s32.totalorder %s460, 15
      %s462 = scalar_select %p461, %s460, 15
      %p463 = scmp.lt.s32.totalorder %s24, 1
      %s464 = scalar_select %p463, %s24, 1
      %p465 = scmp.lt.s32.totalorder %s462, 15
      %s466 = scalar_select %p465, %s462, 15
      %s467 = smul.addr %s466, 2
      %s468 = smul.addr %s464, 32
      %s469 = sadd.s32 %s467, %s468
      %s470 = smul.addr %s469, 8
      %s471 = scalar_lea.vmem %s2, %s470
      %s472 = sadd.s32 %s25, 1
      %s473 = smul.u32 %s472, 8
      %p474 = scmp.lt.s32.totalorder %s473, 15
      %s475 = scalar_select %p474, %s473, 15
      %s476 = smul.u32 8, %s25
      %p477 = scmp.lt.s32.totalorder %s24, 1
      %s478 = scalar_select %p477, %s24, 1
      %p479 = scmp.lt.s32.totalorder %s476, 15
      %s480 = scalar_select %p479, %s476, 15
      %s481 = smul.addr %s480, 2
      %s482 = smul.addr %s478, 32
      %s483 = sadd.s32 %s481, %s482
      %s484 = smul.addr %s483, 8
      %s485 = scalar_lea.vmem %s7, %s484
      %s486 = smul.u32 8, %s25
      %p487 = scmp.lt.s32.totalorder %s24, 1
      %s488 = scalar_select %p487, %s24, 1
      %p489 = scmp.lt.s32.totalorder %s25, 1
      %s490 = scalar_select %p489, %s25, 1
      %s491 = smul.addr %s488, 2
      %s492 = sadd.s32 %s490, %s491
      %s493 = smul.addr %s492, 2
      %s494 = scalar_lea.vmem %s8, %s493
      %495 = vst [vmem:[#allocation2] sm:$0x1] 0.0
      %496 = vst [vmem:[#allocation2 + $0x18] sm:$0x1] 0.0
      %497 = vst [vmem:[#allocation2 + $0x30] sm:$0x1] 0.0
      %498 = vst [vmem:[#allocation2 + $0x48] sm:$0x1] 0.0
      %499 = vst [vmem:[#allocation2 + $0x60] sm:$0x1] 0.0
      %500 = vst [vmem:[#allocation2 + $0x78] sm:$0x1] 0.0
      %501 = vst [vmem:[#allocation2 + $0x90] sm:$0x1] 0.0
      %502 = vst [vmem:[#allocation2 + $0xa8] sm:$0x1] 0.0
      %503 = vst [vmem:[#allocation2 + $0xc0] sm:$0x1] 0.0
      %504 = vst [vmem:[#allocation2 + $0xd8] sm:$0x1] 0.0
      %505 = vst [vmem:[#allocation2 + $0x11] sm:$0x1] 0.0
      %506 = vst [vmem:[#allocation2 + $0x29] sm:$0x1] 0.0
      %507 = vst [vmem:[#allocation2 + $0x41] sm:$0x1] 0.0
      %508 = vst [vmem:[#allocation2 + $0x59] sm:$0x1] 0.0
      %509 = vst [vmem:[#allocation2 + $0x71] sm:$0x1] 0.0
      %510 = vst [vmem:[#allocation2 + $0x89] sm:$0x1] 0.0
      %511 = vst [vmem:[#allocation2 + $0xa1] sm:$0x1] 0.0
      %512 = vst [vmem:[#allocation2 + $0xb9] sm:$0x1] 0.0
      %513 = vst [vmem:[#allocation2 + $0xd1] sm:$0x1] 0.0
      %514 = vst [vmem:[#allocation2 + $0xe9] sm:$0x1] 0.0
      %v515 = vld [vmem:[%s440] sm:$0xff]
      %v516 = vld [vmem:[%s440 + $0x8] sm:$0xff]
      %v517 = vld [vmem:[%s440 + $0x10] sm:$0xff]
      %v518 = vld [vmem:[%s440 + $0x18] sm:$0xff]
      %v519 = vld [vmem:[%s440 + $0x20] sm:$0xff]
      %v520 = vld [vmem:[%s440 + $0x28] sm:$0xff]
      %v521 = vld [vmem:[%s440 + $0x30] sm:$0xff]
      %v522 = vld [vmem:[%s440 + $0x38] sm:$0xff]
      %v523 = vld [vmem:[%s440 + $0x40] sm:$0xff]
      %v524 = vld [vmem:[%s440 + $0x48] sm:$0xff]
      %v525 = vld [vmem:[%s440 + $0x50] sm:$0xff]
      %v526 = vld [vmem:[%s440 + $0x58] sm:$0xff]
      %v527 = vld [vmem:[%s440 + $0x60] sm:$0xff]
      %v528 = vld [vmem:[%s440 + $0x68] sm:$0xff]
      %v529 = vld [vmem:[%s440 + $0x70] sm:$0xff]
      %v530 = vld [vmem:[%s440 + $0x78] sm:$0xff]
      %s531 = scalar_lea.vmem [#allocation2], 24
      %532 = vst [vmem:[%s531 + $0x1] sm:$0xff] %v515
      %533 = vst [vmem:[%s531 + $0x9] sm:$0xff] %v516
      %534 = vst [vmem:[%s531 + $0x19] sm:$0xff] %v517
      %535 = vst [vmem:[%s531 + $0x21] sm:$0xff] %v518
      %536 = vst [vmem:[%s531 + $0x31] sm:$0xff] %v519
      %537 = vst [vmem:[%s531 + $0x39] sm:$0xff] %v520
      %538 = vst [vmem:[%s531 + $0x49] sm:$0xff] %v521
      %539 = vst [vmem:[%s531 + $0x51] sm:$0xff] %v522
      %540 = vst [vmem:[%s531 + $0x61] sm:$0xff] %v523
      %541 = vst [vmem:[%s531 + $0x69] sm:$0xff] %v524
      %542 = vst [vmem:[%s531 + $0x79] sm:$0xff] %v525
      %543 = vst [vmem:[%s531 + $0x81] sm:$0xff] %v526
      %544 = vst [vmem:[%s531 + $0x91] sm:$0xff] %v527
      %545 = vst [vmem:[%s531 + $0x99] sm:$0xff] %v528
      %546 = vst [vmem:[%s531 + $0xa9] sm:$0xff] %v529
      %547 = vst [vmem:[%s531 + $0xb1] sm:$0xff] %v530
      %p548 = scmp.gt.s32.totalorder %s25, 0
      %v549 = vld [vmem:[%s454] sm:$0xff]
      %v550 = vld [vmem:[%s454 + $0x8] sm:$0xff]
      %s551 = scalar_select %p548, 1, 0
      %v552 = vstv %s551
      %vm553 = vcmp.eq.s32.totalorder %v552, 1
      %v554 = vsel %vm553, %v549, 0.0
      %v555 = vsel %vm553, %v550, 0.0
      %556 = vst [vmem:[#allocation2 + $0x1] sm:$0xff] %v554
      %557 = vst [vmem:[#allocation2 + $0x9] sm:$0xff] %v555
      %p558 = scmp.lt.s32.totalorder %s25, 1
      %v559 = vld [vmem:[%s471] sm:$0xff]
      %v560 = vld [vmem:[%s471 + $0x8] sm:$0xff]
      %s561 = scalar_select %p558, 1, 0
      %v562 = vstv %s561
      %vm563 = vcmp.eq.s32.totalorder %v562, 1
      %v564 = vsel %vm563, %v559, 0.0
      %v565 = vsel %vm563, %v560, 0.0
      %s566 = scalar_lea.vmem [#allocation2], 216
      %567 = vst [vmem:[%s566 + $0x1] sm:$0xff] %v564
      %568 = vst [vmem:[%s566 + $0x9] sm:$0xff] %v565
      %v569 = vld [vmem:[#allocation2] sm:$0xff]
      %v570 = vld [vmem:[#allocation2 + $0x8] sm:$0xff]
      %v571 = vld [vmem:[#allocation2 + $0x18] sm:$0xff]
      %v572 = vld [vmem:[#allocation2 + $0x20] sm:$0xff]
      %v573 = vld [vmem:[#allocation2 + $0x30] sm:$0xff]
      %v574 = vld [vmem:[#allocation2 + $0x38] sm:$0xff]
      %v575 = vld [vmem:[#allocation2 + $0x48] sm:$0xff]
      %v576 = vld [vmem:[#allocation2 + $0x50] sm:$0xff]
      %v577 = vld [vmem:[#allocation2 + $0x60] sm:$0xff]
      %v578 = vld [vmem:[#allocation2 + $0x68] sm:$0xff]
      %v579 = vld [vmem:[#allocation2 + $0x78] sm:$0xff]
      %v580 = vld [vmem:[#allocation2 + $0x80] sm:$0xff]
      %v581 = vld [vmem:[#allocation2 + $0x90] sm:$0xff]
      %v582 = vld [vmem:[#allocation2 + $0x98] sm:$0xff]
      %v583 = vld [vmem:[#allocation2 + $0xa8] sm:$0xff]
      %v584 = vld [vmem:[#allocation2 + $0xb0] sm:$0xff]
      %585 = vst [vmem:[#allocation3] sm:$0xff] %v569
      %586 = vst [vmem:[#allocation3 + $0x48] sm:$0xff] %v570
      %587 = vst [vmem:[#allocation3 + $0x90] sm:$0xff] %v571
      %588 = vst [vmem:[#allocation3 + $0xd8] sm:$0xff] %v572
      %589 = vst [vmem:[#allocation3 + $0x120] sm:$0xff] %v573
      %590 = vst [vmem:[#allocation3 + $0x168] sm:$0xff] %v574
      %591 = vst [vmem:[#allocation3 + $0x1b0] sm:$0xff] %v575
      %592 = vst [vmem:[#allocation3 + $0x1f8] sm:$0xff] %v576
      %593 = vst [vmem:[#allocation3 + $0x240] sm:$0xff] %v577
      %594 = vst [vmem:[#allocation3 + $0x288] sm:$0xff] %v578
      %595 = vst [vmem:[#allocation3 + $0x2d0] sm:$0xff] %v579
      %596 = vst [vmem:[#allocation3 + $0x318] sm:$0xff] %v580
      %597 = vst [vmem:[#allocation3 + $0x360] sm:$0xff] %v581
      %598 = vst [vmem:[#allocation3 + $0x3a8] sm:$0xff] %v582
      %599 = vst [vmem:[#allocation3 + $0x3f0] sm:$0xff] %v583
      %600 = vst [vmem:[#allocation3 + $0x438] sm:$0xff] %v584
      %v601 = vld [vmem:[#allocation2 + $0x1] sm:$0xff]
      %v602 = vld [vmem:[#allocation2 + $0x9] sm:$0xff]
      %v603 = vld [vmem:[#allocation2 + $0x19] sm:$0xff]
      %v604 = vld [vmem:[#allocation2 + $0x21] sm:$0xff]
      %v605 = vld [vmem:[#allocation2 + $0x31] sm:$0xff]
      %v606 = vld [vmem:[#allocation2 + $0x39] sm:$0xff]
      %v607 = vld [vmem:[#allocation2 + $0x49] sm:$0xff]
      %v608 = vld [vmem:[#allocation2 + $0x51] sm:$0xff]
      %v609 = vld [vmem:[#allocation2 + $0x61] sm:$0xff]
      %v610 = vld [vmem:[#allocation2 + $0x69] sm:$0xff]
      %v611 = vld [vmem:[#allocation2 + $0x79] sm:$0xff]
      %v612 = vld [vmem:[#allocation2 + $0x81] sm:$0xff]
      %v613 = vld [vmem:[#allocation2 + $0x91] sm:$0xff]
      %v614 = vld [vmem:[#allocation2 + $0x99] sm:$0xff]
      %v615 = vld [vmem:[#allocation2 + $0xa9] sm:$0xff]
      %v616 = vld [vmem:[#allocation2 + $0xb1] sm:$0xff]
      %617 = vst [vmem:[#allocation3 + $0x8] sm:$0xff] %v601
      %618 = vst [vmem:[#allocation3 + $0x50] sm:$0xff] %v602
      %619 = vst [vmem:[#allocation3 + $0x98] sm:$0xff] %v603
      %620 = vst [vmem:[#allocation3 + $0xe0] sm:$0xff] %v604
      %621 = vst [vmem:[#allocation3 + $0x128] sm:$0xff] %v605
      %622 = vst [vmem:[#allocation3 + $0x170] sm:$0xff] %v606
      %623 = vst [vmem:[#allocation3 + $0x1b8] sm:$0xff] %v607
      %624 = vst [vmem:[#allocation3 + $0x200] sm:$0xff] %v608
      %625 = vst [vmem:[#allocation3 + $0x248] sm:$0xff] %v609
      %626 = vst [vmem:[#allocation3 + $0x290] sm:$0xff] %v610
      %627 = vst [vmem:[#allocation3 + $0x2d8] sm:$0xff] %v611
      %628 = vst [vmem:[#allocation3 + $0x320] sm:$0xff] %v612
      %629 = vst [vmem:[#allocation3 + $0x368] sm:$0xff] %v613
      %630 = vst [vmem:[#allocation3 + $0x3b0] sm:$0xff] %v614
      %631 = vst [vmem:[#allocation3 + $0x3f8] sm:$0xff] %v615
      %632 = vst [vmem:[#allocation3 + $0x440] sm:$0xff] %v616
      %v633 = vld [vmem:[#allocation2 + $0x2] sm:$0xff]
      %v634 = vld [vmem:[#allocation2 + $0xa] sm:$0xff]
      %v635 = vld [vmem:[#allocation2 + $0x1a] sm:$0xff]
      %v636 = vld [vmem:[#allocation2 + $0x22] sm:$0xff]
      %v637 = vld [vmem:[#allocation2 + $0x32] sm:$0xff]
      %v638 = vld [vmem:[#allocation2 + $0x3a] sm:$0xff]
      %v639 = vld [vmem:[#allocation2 + $0x4a] sm:$0xff]
      %v640 = vld [vmem:[#allocation2 + $0x52] sm:$0xff]
      %v641 = vld [vmem:[#allocation2 + $0x62] sm:$0xff]
      %v642 = vld [vmem:[#allocation2 + $0x6a] sm:$0xff]
      %v643 = vld [vmem:[#allocation2 + $0x7a] sm:$0xff]
      %v644 = vld [vmem:[#allocation2 + $0x82] sm:$0xff]
      %v645 = vld [vmem:[#allocation2 + $0x92] sm:$0xff]
      %v646 = vld [vmem:[#allocation2 + $0x9a] sm:$0xff]
      %v647 = vld [vmem:[#allocation2 + $0xaa] sm:$0xff]
      %v648 = vld [vmem:[#allocation2 + $0xb2] sm:$0xff]
      %649 = vst [vmem:[#allocation3 + $0x10] sm:$0xff] %v633
      %650 = vst [vmem:[#allocation3 + $0x58] sm:$0xff] %v634
      %651 = vst [vmem:[#allocation3 + $0xa0] sm:$0xff] %v635
      %652 = vst [vmem:[#allocation3 + $0xe8] sm:$0xff] %v636
      %653 = vst [vmem:[#allocation3 + $0x130] sm:$0xff] %v637
      %654 = vst [vmem:[#allocation3 + $0x178] sm:$0xff] %v638
      %655 = vst [vmem:[#allocation3 + $0x1c0] sm:$0xff] %v639
      %656 = vst [vmem:[#allocation3 + $0x208] sm:$0xff] %v640
      %657 = vst [vmem:[#allocation3 + $0x250] sm:$0xff] %v641
      %658 = vst [vmem:[#allocation3 + $0x298] sm:$0xff] %v642
      %659 = vst [vmem:[#allocation3 + $0x2e0] sm:$0xff] %v643
      %660 = vst [vmem:[#allocation3 + $0x328] sm:$0xff] %v644
      %661 = vst [vmem:[#allocation3 + $0x370] sm:$0xff] %v645
      %662 = vst [vmem:[#allocation3 + $0x3b8] sm:$0xff] %v646
      %663 = vst [vmem:[#allocation3 + $0x400] sm:$0xff] %v647
      %664 = vst [vmem:[#allocation3 + $0x448] sm:$0xff] %v648
      %v665 = vld [vmem:[%s531] sm:$0xff]
      %v666 = vld [vmem:[%s531 + $0x8] sm:$0xff]
      %v667 = vld [vmem:[%s531 + $0x18] sm:$0xff]
      %v668 = vld [vmem:[%s531 + $0x20] sm:$0xff]
      %v669 = vld [vmem:[%s531 + $0x30] sm:$0xff]
      %v670 = vld [vmem:[%s531 + $0x38] sm:$0xff]
      %v671 = vld [vmem:[%s531 + $0x48] sm:$0xff]
      %v672 = vld [vmem:[%s531 + $0x50] sm:$0xff]
      %v673 = vld [vmem:[%s531 + $0x60] sm:$0xff]
      %v674 = vld [vmem:[%s531 + $0x68] sm:$0xff]
      %v675 = vld [vmem:[%s531 + $0x78] sm:$0xff]
      %v676 = vld [vmem:[%s531 + $0x80] sm:$0xff]
      %v677 = vld [vmem:[%s531 + $0x90] sm:$0xff]
      %v678 = vld [vmem:[%s531 + $0x98] sm:$0xff]
      %v679 = vld [vmem:[%s531 + $0xa8] sm:$0xff]
      %v680 = vld [vmem:[%s531 + $0xb0] sm:$0xff]
      %681 = vst [vmem:[#allocation3 + $0x18] sm:$0xff] %v665
      %682 = vst [vmem:[#allocation3 + $0x60] sm:$0xff] %v666
      %683 = vst [vmem:[#allocation3 + $0xa8] sm:$0xff] %v667
      %684 = vst [vmem:[#allocation3 + $0xf0] sm:$0xff] %v668
      %685 = vst [vmem:[#allocation3 + $0x138] sm:$0xff] %v669
      %686 = vst [vmem:[#allocation3 + $0x180] sm:$0xff] %v670
      %687 = vst [vmem:[#allocation3 + $0x1c8] sm:$0xff] %v671
      %688 = vst [vmem:[#allocation3 + $0x210] sm:$0xff] %v672
      %689 = vst [vmem:[#allocation3 + $0x258] sm:$0xff] %v673
      %690 = vst [vmem:[#allocation3 + $0x2a0] sm:$0xff] %v674
      %691 = vst [vmem:[#allocation3 + $0x2e8] sm:$0xff] %v675
      %692 = vst [vmem:[#allocation3 + $0x330] sm:$0xff] %v676
      %693 = vst [vmem:[#allocation3 + $0x378] sm:$0xff] %v677
      %694 = vst [vmem:[#allocation3 + $0x3c0] sm:$0xff] %v678
      %695 = vst [vmem:[#allocation3 + $0x408] sm:$0xff] %v679
      %696 = vst [vmem:[#allocation3 + $0x450] sm:$0xff] %v680
      %v697 = vld [vmem:[%s531 + $0x1] sm:$0xff]
      %v698 = vld [vmem:[%s531 + $0x9] sm:$0xff]
      %v699 = vld [vmem:[%s531 + $0x19] sm:$0xff]
      %v700 = vld [vmem:[%s531 + $0x21] sm:$0xff]
      %v701 = vld [vmem:[%s531 + $0x31] sm:$0xff]
      %v702 = vld [vmem:[%s531 + $0x39] sm:$0xff]
      %v703 = vld [vmem:[%s531 + $0x49] sm:$0xff]
      %v704 = vld [vmem:[%s531 + $0x51] sm:$0xff]
      %v705 = vld [vmem:[%s531 + $0x61] sm:$0xff]
      %v706 = vld [vmem:[%s531 + $0x69] sm:$0xff]
      %v707 = vld [vmem:[%s531 + $0x79] sm:$0xff]
      %v708 = vld [vmem:[%s531 + $0x81] sm:$0xff]
      %v709 = vld [vmem:[%s531 + $0x91] sm:$0xff]
      %v710 = vld [vmem:[%s531 + $0x99] sm:$0xff]
      %v711 = vld [vmem:[%s531 + $0xa9] sm:$0xff]
      %v712 = vld [vmem:[%s531 + $0xb1] sm:$0xff]
      %713 = vst [vmem:[#allocation3 + $0x20] sm:$0xff] %v697
      %714 = vst [vmem:[#allocation3 + $0x68] sm:$0xff] %v698
      %715 = vst [vmem:[#allocation3 + $0xb0] sm:$0xff] %v699
      %716 = vst [vmem:[#allocation3 + $0xf8] sm:$0xff] %v700
      %717 = vst [vmem:[#allocation3 + $0x140] sm:$0xff] %v701
      %718 = vst [vmem:[#allocation3 + $0x188] sm:$0xff] %v702
      %719 = vst [vmem:[#allocation3 + $0x1d0] sm:$0xff] %v703
      %720 = vst [vmem:[#allocation3 + $0x218] sm:$0xff] %v704
      %721 = vst [vmem:[#allocation3 + $0x260] sm:$0xff] %v705
      %722 = vst [vmem:[#allocation3 + $0x2a8] sm:$0xff] %v706
      %723 = vst [vmem:[#allocation3 + $0x2f0] sm:$0xff] %v707
      %724 = vst [vmem:[#allocation3 + $0x338] sm:$0xff] %v708
      %725 = vst [vmem:[#allocation3 + $0x380] sm:$0xff] %v709
      %726 = vst [vmem:[#allocation3 + $0x3c8] sm:$0xff] %v710
      %727 = vst [vmem:[#allocation3 + $0x410] sm:$0xff] %v711
      %728 = vst [vmem:[#allocation3 + $0x458] sm:$0xff] %v712
      %v729 = vld [vmem:[%s531 + $0x2] sm:$0xff]
      %v730 = vld [vmem:[%s531 + $0xa] sm:$0xff]
      %v731 = vld [vmem:[%s531 + $0x1a] sm:$0xff]
      %v732 = vld [vmem:[%s531 + $0x22] sm:$0xff]
      %v733 = vld [vmem:[%s531 + $0x32] sm:$0xff]
      %v734 = vld [vmem:[%s531 + $0x3a] sm:$0xff]
      %v735 = vld [vmem:[%s531 + $0x4a] sm:$0xff]
      %v736 = vld [vmem:[%s531 + $0x52] sm:$0xff]
      %v737 = vld [vmem:[%s531 + $0x62] sm:$0xff]
      %v738 = vld [vmem:[%s531 + $0x6a] sm:$0xff]
      %v739 = vld [vmem:[%s531 + $0x7a] sm:$0xff]
      %v740 = vld [vmem:[%s531 + $0x82] sm:$0xff]
      %v741 = vld [vmem:[%s531 + $0x92] sm:$0xff]
      %v742 = vld [vmem:[%s531 + $0x9a] sm:$0xff]
      %v743 = vld [vmem:[%s531 + $0xaa] sm:$0xff]
      %v744 = vld [vmem:[%s531 + $0xb2] sm:$0xff]
      %745 = vst [vmem:[#allocation3 + $0x28] sm:$0xff] %v729
      %746 = vst [vmem:[#allocation3 + $0x70] sm:$0xff] %v730
      %747 = vst [vmem:[#allocation3 + $0xb8] sm:$0xff] %v731
      %748 = vst [vmem:[#allocation3 + $0x100] sm:$0xff] %v732
      %749 = vst [vmem:[#allocation3 + $0x148] sm:$0xff] %v733
      %750 = vst [vmem:[#allocation3 + $0x190] sm:$0xff] %v734
      %751 = vst [vmem:[#allocation3 + $0x1d8] sm:$0xff] %v735
      %752 = vst [vmem:[#allocation3 + $0x220] sm:$0xff] %v736
      %753 = vst [vmem:[#allocation3 + $0x268] sm:$0xff] %v737
      %754 = vst [vmem:[#allocation3 + $0x2b0] sm:$0xff] %v738
      %755 = vst [vmem:[#allocation3 + $0x2f8] sm:$0xff] %v739
      %756 = vst [vmem:[#allocation3 + $0x340] sm:$0xff] %v740
      %757 = vst [vmem:[#allocation3 + $0x388] sm:$0xff] %v741
      %758 = vst [vmem:[#allocation3 + $0x3d0] sm:$0xff] %v742
      %759 = vst [vmem:[#allocation3 + $0x418] sm:$0xff] %v743
      %760 = vst [vmem:[#allocation3 + $0x460] sm:$0xff] %v744
      %s761 = scalar_lea.vmem [#allocation2], 48
      %v762 = vld [vmem:[%s761] sm:$0xff]
      %v763 = vld [vmem:[%s761 + $0x8] sm:$0xff]
      %v764 = vld [vmem:[%s761 + $0x18] sm:$0xff]
      %v765 = vld [vmem:[%s761 + $0x20] sm:$0xff]
      %v766 = vld [vmem:[%s761 + $0x30] sm:$0xff]
      %v767 = vld [vmem:[%s761 + $0x38] sm:$0xff]
      %v768 = vld [vmem:[%s761 + $0x48] sm:$0xff]
      %v769 = vld [vmem:[%s761 + $0x50] sm:$0xff]
      %v770 = vld [vmem:[%s761 + $0x60] sm:$0xff]
      %v771 = vld [vmem:[%s761 + $0x68] sm:$0xff]
      %v772 = vld [vmem:[%s761 + $0x78] sm:$0xff]
      %v773 = vld [vmem:[%s761 + $0x80] sm:$0xff]
      %v774 = vld [vmem:[%s761 + $0x90] sm:$0xff]
      %v775 = vld [vmem:[%s761 + $0x98] sm:$0xff]
      %v776 = vld [vmem:[%s761 + $0xa8] sm:$0xff]
      %v777 = vld [vmem:[%s761 + $0xb0] sm:$0xff]
      %778 = vst [vmem:[#allocation3 + $0x30] sm:$0xff] %v762
      %779 = vst [vmem:[#allocation3 + $0x78] sm:$0xff] %v763
      %780 = vst [vmem:[#allocation3 + $0xc0] sm:$0xff] %v764
      %781 = vst [vmem:[#allocation3 + $0x108] sm:$0xff] %v765
      %782 = vst [vmem:[#allocation3 + $0x150] sm:$0xff] %v766
      %783 = vst [vmem:[#allocation3 + $0x198] sm:$0xff] %v767
      %784 = vst [vmem:[#allocation3 + $0x1e0] sm:$0xff] %v768
      %785 = vst [vmem:[#allocation3 + $0x228] sm:$0xff] %v769
      %786 = vst [vmem:[#allocation3 + $0x270] sm:$0xff] %v770
      %787 = vst [vmem:[#allocation3 + $0x2b8] sm:$0xff] %v771
      %788 = vst [vmem:[#allocation3 + $0x300] sm:$0xff] %v772
      %789 = vst [vmem:[#allocation3 + $0x348] sm:$0xff] %v773
      %790 = vst [vmem:[#allocation3 + $0x390] sm:$0xff] %v774
      %791 = vst [vmem:[#allocation3 + $0x3d8] sm:$0xff] %v775
      %792 = vst [vmem:[#allocation3 + $0x420] sm:$0xff] %v776
      %793 = vst [vmem:[#allocation3 + $0x468] sm:$0xff] %v777
      %v794 = vld [vmem:[%s761 + $0x1] sm:$0xff]
      %v795 = vld [vmem:[%s761 + $0x9] sm:$0xff]
      %v796 = vld [vmem:[%s761 + $0x19] sm:$0xff]
      %v797 = vld [vmem:[%s761 + $0x21] sm:$0xff]
      %v798 = vld [vmem:[%s761 + $0x31] sm:$0xff]
      %v799 = vld [vmem:[%s761 + $0x39] sm:$0xff]
      %v800 = vld [vmem:[%s761 + $0x49] sm:$0xff]
      %v801 = vld [vmem:[%s761 + $0x51] sm:$0xff]
      %v802 = vld [vmem:[%s761 + $0x61] sm:$0xff]
      %v803 = vld [vmem:[%s761 + $0x69] sm:$0xff]
      %v804 = vld [vmem:[%s761 + $0x79] sm:$0xff]
      %v805 = vld [vmem:[%s761 + $0x81] sm:$0xff]
      %v806 = vld [vmem:[%s761 + $0x91] sm:$0xff]
      %v807 = vld [vmem:[%s761 + $0x99] sm:$0xff]
      %v808 = vld [vmem:[%s761 + $0xa9] sm:$0xff]
      %v809 = vld [vmem:[%s761 + $0xb1] sm:$0xff]
      %810 = vst [vmem:[#allocation3 + $0x38] sm:$0xff] %v794
      %811 = vst [vmem:[#allocation3 + $0x80] sm:$0xff] %v795
      %812 = vst [vmem:[#allocation3 + $0xc8] sm:$0xff] %v796
      %813 = vst [vmem:[#allocation3 + $0x110] sm:$0xff] %v797
      %814 = vst [vmem:[#allocation3 + $0x158] sm:$0xff] %v798
      %815 = vst [vmem:[#allocation3 + $0x1a0] sm:$0xff] %v799
      %816 = vst [vmem:[#allocation3 + $0x1e8] sm:$0xff] %v800
      %817 = vst [vmem:[#allocation3 + $0x230] sm:$0xff] %v801
      %818 = vst [vmem:[#allocation3 + $0x278] sm:$0xff] %v802
      %819 = vst [vmem:[#allocation3 + $0x2c0] sm:$0xff] %v803
      %820 = vst [vmem:[#allocation3 + $0x308] sm:$0xff] %v804
      %821 = vst [vmem:[#allocation3 + $0x350] sm:$0xff] %v805
      %822 = vst [vmem:[#allocation3 + $0x398] sm:$0xff] %v806
      %823 = vst [vmem:[#allocation3 + $0x3e0] sm:$0xff] %v807
      %824 = vst [vmem:[#allocation3 + $0x428] sm:$0xff] %v808
      %825 = vst [vmem:[#allocation3 + $0x470] sm:$0xff] %v809
      %v826 = vld [vmem:[%s761 + $0x2] sm:$0xff]
      %v827 = vld [vmem:[%s761 + $0xa] sm:$0xff]
      %v828 = vld [vmem:[%s761 + $0x1a] sm:$0xff]
      %v829 = vld [vmem:[%s761 + $0x22] sm:$0xff]
      %v830 = vld [vmem:[%s761 + $0x32] sm:$0xff]
      %v831 = vld [vmem:[%s761 + $0x3a] sm:$0xff]
      %v832 = vld [vmem:[%s761 + $0x4a] sm:$0xff]
      %v833 = vld [vmem:[%s761 + $0x52] sm:$0xff]
      %v834 = vld [vmem:[%s761 + $0x62] sm:$0xff]
      %v835 = vld [vmem:[%s761 + $0x6a] sm:$0xff]
      %v836 = vld [vmem:[%s761 + $0x7a] sm:$0xff]
      %v837 = vld [vmem:[%s761 + $0x82] sm:$0xff]
      %v838 = vld [vmem:[%s761 + $0x92] sm:$0xff]
      %v839 = vld [vmem:[%s761 + $0x9a] sm:$0xff]
      %v840 = vld [vmem:[%s761 + $0xaa] sm:$0xff]
      %v841 = vld [vmem:[%s761 + $0xb2] sm:$0xff]
      %842 = vst [vmem:[#allocation3 + $0x40] sm:$0xff] %v826
      %843 = vst [vmem:[#allocation3 + $0x88] sm:$0xff] %v827
      %844 = vst [vmem:[#allocation3 + $0xd0] sm:$0xff] %v828
      %845 = vst [vmem:[#allocation3 + $0x118] sm:$0xff] %v829
      %846 = vst [vmem:[#allocation3 + $0x160] sm:$0xff] %v830
      %847 = vst [vmem:[#allocation3 + $0x1a8] sm:$0xff] %v831
      %848 = vst [vmem:[#allocation3 + $0x1f0] sm:$0xff] %v832
      %849 = vst [vmem:[#allocation3 + $0x238] sm:$0xff] %v833
      %850 = vst [vmem:[#allocation3 + $0x280] sm:$0xff] %v834
      %851 = vst [vmem:[#allocation3 + $0x2c8] sm:$0xff] %v835
      %852 = vst [vmem:[#allocation3 + $0x310] sm:$0xff] %v836
      %853 = vst [vmem:[#allocation3 + $0x358] sm:$0xff] %v837
      %854 = vst [vmem:[#allocation3 + $0x3a0] sm:$0xff] %v838
      %855 = vst [vmem:[#allocation3 + $0x3e8] sm:$0xff] %v839
      %856 = vst [vmem:[#allocation3 + $0x430] sm:$0xff] %v840
      %857 = vst [vmem:[#allocation3 + $0x478] sm:$0xff] %v841
      %v858 = vld [vmem:[#allocation3] sm:$0xff]
      %v859 = vld [vmem:[#allocation3 + $0x8] sm:$0xff]
      %v860 = vld [vmem:[#allocation3 + $0x10] sm:$0xff]
      %v861 = vld [vmem:[#allocation3 + $0x18] sm:$0xff]
      %v862 = vld [vmem:[#allocation3 + $0x20] sm:$0xff]
      %v863 = vld [vmem:[#allocation3 + $0x28] sm:$0xff]
      %v864 = vld [vmem:[#allocation3 + $0x30] sm:$0xff]
      %v865 = vld [vmem:[#allocation3 + $0x38] sm:$0xff]
      %v866 = vld [vmem:[#allocation3 + $0x40] sm:$0xff]
      %v867 = vld [vmem:[#allocation3 + $0x48] sm:$0xff]
      %v868 = vld [vmem:[#allocation3 + $0x50] sm:$0xff]
      %v869 = vld [vmem:[#allocation3 + $0x58] sm:$0xff]
      %v870 = vld [vmem:[#allocation3 + $0x60] sm:$0xff]
      %v871 = vld [vmem:[#allocation3 + $0x68] sm:$0xff]
      %v872 = vld [vmem:[#allocation3 + $0x70] sm:$0xff]
      %v873 = vld [vmem:[#allocation3 + $0x78] sm:$0xff]
      %v874 = vld [vmem:[#allocation3 + $0x80] sm:$0xff]
      %v875 = vld [vmem:[#allocation3 + $0x88] sm:$0xff]
      %v876 = vld [vmem:[#allocation3 + $0x90] sm:$0xff]
      %v877 = vld [vmem:[#allocation3 + $0x98] sm:$0xff]
      %v878 = vld [vmem:[#allocation3 + $0xa0] sm:$0xff]
      %v879 = vld [vmem:[#allocation3 + $0xa8] sm:$0xff]
      %v880 = vld [vmem:[#allocation3 + $0xb0] sm:$0xff]
      %v881 = vld [vmem:[#allocation3 + $0xb8] sm:$0xff]
      %v882 = vld [vmem:[#allocation3 + $0xc0] sm:$0xff]
      %v883 = vld [vmem:[#allocation3 + $0xc8] sm:$0xff]
      %v884 = vld [vmem:[#allocation3 + $0xd0] sm:$0xff]
      %v885 = vld [vmem:[#allocation3 + $0xd8] sm:$0xff]
      %v886 = vld [vmem:[#allocation3 + $0xe0] sm:$0xff]
      %v887 = vld [vmem:[#allocation3 + $0xe8] sm:$0xff]
      %v888 = vld [vmem:[#allocation3 + $0xf0] sm:$0xff]
      %v889 = vld [vmem:[#allocation3 + $0xf8] sm:$0xff]
      %v890 = vld [vmem:[#allocation3 + $0x100] sm:$0xff]
      %v891 = vld [vmem:[#allocation3 + $0x108] sm:$0xff]
      %v892 = vld [vmem:[#allocation3 + $0x110] sm:$0xff]
      %v893 = vld [vmem:[#allocation3 + $0x118] sm:$0xff]
      %v894 = vld [vmem:[#allocation3 + $0x120] sm:$0xff]
      %v895 = vld [vmem:[#allocation3 + $0x128] sm:$0xff]
      %v896 = vld [vmem:[#allocation3 + $0x130] sm:$0xff]
      %v897 = vld [vmem:[#allocation3 + $0x138] sm:$0xff]
      %v898 = vld [vmem:[#allocation3 + $0x140] sm:$0xff]
      %v899 = vld [vmem:[#allocation3 + $0x148] sm:$0xff]
      %v900 = vld [vmem:[#allocation3 + $0x150] sm:$0xff]
      %v901 = vld [vmem:[#allocation3 + $0x158] sm:$0xff]
      %v902 = vld [vmem:[#allocation3 + $0x160] sm:$0xff]
      %v903 = vld [vmem:[#allocation3 + $0x168] sm:$0xff]
      %v904 = vld [vmem:[#allocation3 + $0x170] sm:$0xff]
      %v905 = vld [vmem:[#allocation3 + $0x178] sm:$0xff]
      %v906 = vld [vmem:[#allocation3 + $0x180] sm:$0xff]
      %v907 = vld [vmem:[#allocation3 + $0x188] sm:$0xff]
      %v908 = vld [vmem:[#allocation3 + $0x190] sm:$0xff]
      %v909 = vld [vmem:[#allocation3 + $0x198] sm:$0xff]
      %v910 = vld [vmem:[#allocation3 + $0x1a0] sm:$0xff]
      %v911 = vld [vmem:[#allocation3 + $0x1a8] sm:$0xff]
      %v912 = vld [vmem:[#allocation3 + $0x1b0] sm:$0xff]
      %v913 = vld [vmem:[#allocation3 + $0x1b8] sm:$0xff]
      %v914 = vld [vmem:[#allocation3 + $0x1c0] sm:$0xff]
      %v915 = vld [vmem:[#allocation3 + $0x1c8] sm:$0xff]
      %v916 = vld [vmem:[#allocation3 + $0x1d0] sm:$0xff]
      %v917 = vld [vmem:[#allocation3 + $0x1d8] sm:$0xff]
      %v918 = vld [vmem:[#allocation3 + $0x1e0] sm:$0xff]
      %v919 = vld [vmem:[#allocation3 + $0x1e8] sm:$0xff]
      %v920 = vld [vmem:[#allocation3 + $0x1f0] sm:$0xff]
      %v921 = vld [vmem:[#allocation3 + $0x1f8] sm:$0xff]
      %v922 = vld [vmem:[#allocation3 + $0x200] sm:$0xff]
      %v923 = vld [vmem:[#allocation3 + $0x208] sm:$0xff]
      %v924 = vld [vmem:[#allocation3 + $0x210] sm:$0xff]
      %v925 = vld [vmem:[#allocation3 + $0x218] sm:$0xff]
      %v926 = vld [vmem:[#allocation3 + $0x220] sm:$0xff]
      %v927 = vld [vmem:[#allocation3 + $0x228] sm:$0xff]
      %v928 = vld [vmem:[#allocation3 + $0x230] sm:$0xff]
      %v929 = vld [vmem:[#allocation3 + $0x238] sm:$0xff]
      %v930 = vld [vmem:[#allocation3 + $0x240] sm:$0xff]
      %v931 = vld [vmem:[#allocation3 + $0x248] sm:$0xff]
      %v932 = vld [vmem:[#allocation3 + $0x250] sm:$0xff]
      %v933 = vld [vmem:[#allocation3 + $0x258] sm:$0xff]
      %v934 = vld [vmem:[#allocation3 + $0x260] sm:$0xff]
      %v935 = vld [vmem:[#allocation3 + $0x268] sm:$0xff]
      %v936 = vld [vmem:[#allocation3 + $0x270] sm:$0xff]
      %v937 = vld [vmem:[#allocation3 + $0x278] sm:$0xff]
      %v938 = vld [vmem:[#allocation3 + $0x280] sm:$0xff]
      %v939 = vld [vmem:[#allocation3 + $0x288] sm:$0xff]
      %v940 = vld [vmem:[#allocation3 + $0x290] sm:$0xff]
      %v941 = vld [vmem:[#allocation3 + $0x298] sm:$0xff]
      %v942 = vld [vmem:[#allocation3 + $0x2a0] sm:$0xff]
      %v943 = vld [vmem:[#allocation3 + $0x2a8] sm:$0xff]
      %v944 = vld [vmem:[#allocation3 + $0x2b0] sm:$0xff]
      %v945 = vld [vmem:[#allocation3 + $0x2b8] sm:$0xff]
      %v946 = vld [vmem:[#allocation3 + $0x2c0] sm:$0xff]
      %v947 = vld [vmem:[#allocation3 + $0x2c8] sm:$0xff]
      %v948 = vld [vmem:[#allocation3 + $0x2d0] sm:$0xff]
      %v949 = vld [vmem:[#allocation3 + $0x2d8] sm:$0xff]
      %v950 = vld [vmem:[#allocation3 + $0x2e0] sm:$0xff]
      %v951 = vld [vmem:[#allocation3 + $0x2e8] sm:$0xff]
      %v952 = vld [vmem:[#allocation3 + $0x2f0] sm:$0xff]
      %v953 = vld [vmem:[#allocation3 + $0x2f8] sm:$0xff]
      %v954 = vld [vmem:[#allocation3 + $0x300] sm:$0xff]
      %v955 = vld [vmem:[#allocation3 + $0x308] sm:$0xff]
      %v956 = vld [vmem:[#allocation3 + $0x310] sm:$0xff]
      %v957 = vld [vmem:[#allocation3 + $0x318] sm:$0xff]
      %v958 = vld [vmem:[#allocation3 + $0x320] sm:$0xff]
      %v959 = vld [vmem:[#allocation3 + $0x328] sm:$0xff]
      %v960 = vld [vmem:[#allocation3 + $0x330] sm:$0xff]
      %v961 = vld [vmem:[#allocation3 + $0x338] sm:$0xff]
      %v962 = vld [vmem:[#allocation3 + $0x340] sm:$0xff]
      %v963 = vld [vmem:[#allocation3 + $0x348] sm:$0xff]
      %v964 = vld [vmem:[#allocation3 + $0x350] sm:$0xff]
      %v965 = vld [vmem:[#allocation3 + $0x358] sm:$0xff]
      %v966 = vld [vmem:[#allocation3 + $0x360] sm:$0xff]
      %v967 = vld [vmem:[#allocation3 + $0x368] sm:$0xff]
      %v968 = vld [vmem:[#allocation3 + $0x370] sm:$0xff]
      %v969 = vld [vmem:[#allocation3 + $0x378] sm:$0xff]
      %v970 = vld [vmem:[#allocation3 + $0x380] sm:$0xff]
      %v971 = vld [vmem:[#allocation3 + $0x388] sm:$0xff]
      %v972 = vld [vmem:[#allocation3 + $0x390] sm:$0xff]
      %v973 = vld [vmem:[#allocation3 + $0x398] sm:$0xff]
      %v974 = vld [vmem:[#allocation3 + $0x3a0] sm:$0xff]
      %v975 = vld [vmem:[#allocation3 + $0x3a8] sm:$0xff]
      %v976 = vld [vmem:[#allocation3 + $0x3b0] sm:$0xff]
      %v977 = vld [vmem:[#allocation3 + $0x3b8] sm:$0xff]
      %v978 = vld [vmem:[#allocation3 + $0x3c0] sm:$0xff]
      %v979 = vld [vmem:[#allocation3 + $0x3c8] sm:$0xff]
      %v980 = vld [vmem:[#allocation3 + $0x3d0] sm:$0xff]
      %v981 = vld [vmem:[#allocation3 + $0x3d8] sm:$0xff]
      %v982 = vld [vmem:[#allocation3 + $0x3e0] sm:$0xff]
      %v983 = vld [vmem:[#allocation3 + $0x3e8] sm:$0xff]
      %v984 = vld [vmem:[#allocation3 + $0x3f0] sm:$0xff]
      %v985 = vld [vmem:[#allocation3 + $0x3f8] sm:$0xff]
      %v986 = vld [vmem:[#allocation3 + $0x400] sm:$0xff]
      %v987 = vld [vmem:[#allocation3 + $0x408] sm:$0xff]
      %v988 = vld [vmem:[#allocation3 + $0x410] sm:$0xff]
      %v989 = vld [vmem:[#allocation3 + $0x418] sm:$0xff]
      %v990 = vld [vmem:[#allocation3 + $0x420] sm:$0xff]
      %v991 = vld [vmem:[#allocation3 + $0x428] sm:$0xff]
      %v992 = vld [vmem:[#allocation3 + $0x430] sm:$0xff]
      %v993 = vld [vmem:[#allocation3 + $0x438] sm:$0xff]
      %v994 = vld [vmem:[#allocation3 + $0x440] sm:$0xff]
      %v995 = vld [vmem:[#allocation3 + $0x448] sm:$0xff]
      %v996 = vld [vmem:[#allocation3 + $0x450] sm:$0xff]
      %v997 = vld [vmem:[#allocation3 + $0x458] sm:$0xff]
      %v998 = vld [vmem:[#allocation3 + $0x460] sm:$0xff]
      %v999 = vld [vmem:[#allocation3 + $0x468] sm:$0xff]
      %v1000 = vld [vmem:[#allocation3 + $0x470] sm:$0xff]
      %v1001 = vld [vmem:[#allocation3 + $0x478] sm:$0xff]
      %v1002 = vld [vmem:[%s3] sm:$0xff]
      %v1003 = vld [vmem:[%s3 + $0x8] sm:$0xff]
      %v1004 = vld [vmem:[%s3 + $0x10] sm:$0xff]
      %v1005 = vld [vmem:[%s3 + $0x18] sm:$0xff]
      %v1006 = vld [vmem:[%s3 + $0x20] sm:$0xff]
      %v1007 = vld [vmem:[%s3 + $0x28] sm:$0xff]
      %v1008 = vld [vmem:[%s3 + $0x30] sm:$0xff]
      %v1009 = vld [vmem:[%s3 + $0x38] sm:$0xff]
      %v1010 = vld [vmem:[%s3 + $0x40] sm:$0xff]
      %v1011 = vld [vmem:[%s3 + $0x48] sm:$0xff]
      %v1012 = vld [vmem:[%s3 + $0x50] sm:$0xff]
      %v1013 = vld [vmem:[%s3 + $0x58] sm:$0xff]
      %v1014 = vld [vmem:[%s3 + $0x60] sm:$0xff]
      %v1015 = vld [vmem:[%s3 + $0x68] sm:$0xff]
      %v1016 = vld [vmem:[%s3 + $0x70] sm:$0xff]
      %v1017 = vld [vmem:[%s3 + $0x78] sm:$0xff]
      %v1018 = vld [vmem:[%s3 + $0x80] sm:$0xff]
      %v1019 = vld [vmem:[%s3 + $0x88] sm:$0xff]
      %v1020 = vld [vmem:[%s3 + $0x90] sm:$0xff]
      %v1021 = vld [vmem:[%s3 + $0x98] sm:$0xff]
      %v1022 = vld [vmem:[%s3 + $0xa0] sm:$0xff]
      %v1023 = vld [vmem:[%s3 + $0xa8] sm:$0xff]
      %v1024 = vld [vmem:[%s3 + $0xb0] sm:$0xff]
      %v1025 = vld [vmem:[%s3 + $0xb8] sm:$0xff]
      %v1026 = vld [vmem:[%s3 + $0xc0] sm:$0xff]
      %v1027 = vld [vmem:[%s3 + $0xc8] sm:$0xff]
      %v1028 = vld [vmem:[%s3 + $0xd0] sm:$0xff]
      %v1029 = vld [vmem:[%s3 + $0xd8] sm:$0xff]
      %v1030 = vld [vmem:[%s3 + $0xe0] sm:$0xff]
      %v1031 = vld [vmem:[%s3 + $0xe8] sm:$0xff]
      %v1032 = vld [vmem:[%s3 + $0xf0] sm:$0xff]
      %v1033 = vld [vmem:[%s3 + $0xf8] sm:$0xff]
      %v1034 = vld [vmem:[%s3 + $0x100] sm:$0xff]
      %v1035 = vld [vmem:[%s3 + $0x108] sm:$0xff]
      %v1036 = vld [vmem:[%s3 + $0x110] sm:$0xff]
      %v1037 = vld [vmem:[%s3 + $0x118] sm:$0xff]
      %v1038 = vld [vmem:[%s3 + $0x120] sm:$0xff]
      %v1039 = vld [vmem:[%s3 + $0x128] sm:$0xff]
      %v1040 = vld [vmem:[%s3 + $0x130] sm:$0xff]
      %v1041 = vld [vmem:[%s3 + $0x138] sm:$0xff]
      %v1042 = vld [vmem:[%s3 + $0x140] sm:$0xff]
      %v1043 = vld [vmem:[%s3 + $0x148] sm:$0xff]
      %v1044 = vld [vmem:[%s3 + $0x150] sm:$0xff]
      %v1045 = vld [vmem:[%s3 + $0x158] sm:$0xff]
      %v1046 = vld [vmem:[%s3 + $0x160] sm:$0xff]
      %v1047 = vld [vmem:[%s3 + $0x168] sm:$0xff]
      %v1048 = vld [vmem:[%s3 + $0x170] sm:$0xff]
      %v1049 = vld [vmem:[%s3 + $0x178] sm:$0xff]
      %v1050 = vld [vmem:[%s3 + $0x180] sm:$0xff]
      %v1051 = vld [vmem:[%s3 + $0x188] sm:$0xff]
      %v1052 = vld [vmem:[%s3 + $0x190] sm:$0xff]
      %v1053 = vld [vmem:[%s3 + $0x198] sm:$0xff]
      %v1054 = vld [vmem:[%s3 + $0x1a0] sm:$0xff]
      %v1055 = vld [vmem:[%s3 + $0x1a8] sm:$0xff]
      %v1056 = vld [vmem:[%s3 + $0x1b0] sm:$0xff]
      %v1057 = vld [vmem:[%s3 + $0x1b8] sm:$0xff]
      %v1058 = vld [vmem:[%s3 + $0x1c0] sm:$0xff]
      %v1059 = vld [vmem:[%s3 + $0x1c8] sm:$0xff]
      %v1060 = vld [vmem:[%s3 + $0x1d0] sm:$0xff]
      %v1061 = vld [vmem:[%s3 + $0x1d8] sm:$0xff]
      %v1062 = vld [vmem:[%s3 + $0x1e0] sm:$0xff]
      %v1063 = vld [vmem:[%s3 + $0x1e8] sm:$0xff]
      %v1064 = vld [vmem:[%s3 + $0x1f0] sm:$0xff]
      %v1065 = vld [vmem:[%s3 + $0x1f8] sm:$0xff]
      %v1066 = vld [vmem:[%s3 + $0x200] sm:$0xff]
      %v1067 = vld [vmem:[%s3 + $0x208] sm:$0xff]
      %v1068 = vld [vmem:[%s3 + $0x210] sm:$0xff]
      %v1069 = vld [vmem:[%s3 + $0x218] sm:$0xff]
      %v1070 = vld [vmem:[%s3 + $0x220] sm:$0xff]
      %v1071 = vld [vmem:[%s3 + $0x228] sm:$0xff]
      %v1072 = vld [vmem:[%s3 + $0x230] sm:$0xff]
      %v1073 = vld [vmem:[%s3 + $0x238] sm:$0xff]
      %v1074 = vld [vmem:[%s3 + $0x240] sm:$0xff]
      %v1075 = vld [vmem:[%s3 + $0x248] sm:$0xff]
      %v1076 = vld [vmem:[%s3 + $0x250] sm:$0xff]
      %v1077 = vld [vmem:[%s3 + $0x258] sm:$0xff]
      %v1078 = vld [vmem:[%s3 + $0x260] sm:$0xff]
      %v1079 = vld [vmem:[%s3 + $0x268] sm:$0xff]
      %v1080 = vld [vmem:[%s3 + $0x270] sm:$0xff]
      %v1081 = vld [vmem:[%s3 + $0x278] sm:$0xff]
      %v1082 = vld [vmem:[%s3 + $0x280] sm:$0xff]
      %v1083 = vld [vmem:[%s3 + $0x288] sm:$0xff]
      %v1084 = vld [vmem:[%s3 + $0x290] sm:$0xff]
      %v1085 = vld [vmem:[%s3 + $0x298] sm:$0xff]
      %v1086 = vld [vmem:[%s3 + $0x2a0] sm:$0xff]
      %v1087 = vld [vmem:[%s3 + $0x2a8] sm:$0xff]
      %v1088 = vld [vmem:[%s3 + $0x2b0] sm:$0xff]
      %v1089 = vld [vmem:[%s3 + $0x2b8] sm:$0xff]
      %v1090 = vld [vmem:[%s3 + $0x2c0] sm:$0xff]
      %v1091 = vld [vmem:[%s3 + $0x2c8] sm:$0xff]
      %v1092 = vld [vmem:[%s3 + $0x2d0] sm:$0xff]
      %v1093 = vld [vmem:[%s3 + $0x2d8] sm:$0xff]
      %v1094 = vld [vmem:[%s3 + $0x2e0] sm:$0xff]
      %v1095 = vld [vmem:[%s3 + $0x2e8] sm:$0xff]
      %v1096 = vld [vmem:[%s3 + $0x2f0] sm:$0xff]
      %v1097 = vld [vmem:[%s3 + $0x2f8] sm:$0xff]
      %v1098 = vld [vmem:[%s3 + $0x300] sm:$0xff]
      %v1099 = vld [vmem:[%s3 + $0x308] sm:$0xff]
      %v1100 = vld [vmem:[%s3 + $0x310] sm:$0xff]
      %v1101 = vld [vmem:[%s3 + $0x318] sm:$0xff]
      %v1102 = vld [vmem:[%s3 + $0x320] sm:$0xff]
      %v1103 = vld [vmem:[%s3 + $0x328] sm:$0xff]
      %v1104 = vld [vmem:[%s3 + $0x330] sm:$0xff]
      %v1105 = vld [vmem:[%s3 + $0x338] sm:$0xff]
      %v1106 = vld [vmem:[%s3 + $0x340] sm:$0xff]
      %v1107 = vld [vmem:[%s3 + $0x348] sm:$0xff]
      %v1108 = vld [vmem:[%s3 + $0x350] sm:$0xff]
      %v1109 = vld [vmem:[%s3 + $0x358] sm:$0xff]
      %v1110 = vld [vmem:[%s3 + $0x360] sm:$0xff]
      %v1111 = vld [vmem:[%s3 + $0x368] sm:$0xff]
      %v1112 = vld [vmem:[%s3 + $0x370] sm:$0xff]
      %v1113 = vld [vmem:[%s3 + $0x378] sm:$0xff]
      %v1114 = vld [vmem:[%s3 + $0x380] sm:$0xff]
      %v1115 = vld [vmem:[%s3 + $0x388] sm:$0xff]
      %v1116 = vld [vmem:[%s3 + $0x390] sm:$0xff]
      %v1117 = vld [vmem:[%s3 + $0x398] sm:$0xff]
      %v1118 = vld [vmem:[%s3 + $0x3a0] sm:$0xff]
      %v1119 = vld [vmem:[%s3 + $0x3a8] sm:$0xff]
      %v1120 = vld [vmem:[%s3 + $0x3b0] sm:$0xff]
      %v1121 = vld [vmem:[%s3 + $0x3b8] sm:$0xff]
      %v1122 = vld [vmem:[%s3 + $0x3c0] sm:$0xff]
      %v1123 = vld [vmem:[%s3 + $0x3c8] sm:$0xff]
      %v1124 = vld [vmem:[%s3 + $0x3d0] sm:$0xff]
      %v1125 = vld [vmem:[%s3 + $0x3d8] sm:$0xff]
      %v1126 = vld [vmem:[%s3 + $0x3e0] sm:$0xff]
      %v1127 = vld [vmem:[%s3 + $0x3e8] sm:$0xff]
      %v1128 = vld [vmem:[%s3 + $0x3f0] sm:$0xff]
      %v1129 = vld [vmem:[%s3 + $0x3f8] sm:$0xff]
      %v1130 = vld [vmem:[%s3 + $0x400] sm:$0xff]
      %v1131 = vld [vmem:[%s3 + $0x408] sm:$0xff]
      %v1132 = vld [vmem:[%s3 + $0x410] sm:$0xff]
      %v1133 = vld [vmem:[%s3 + $0x418] sm:$0xff]
      %v1134 = vld [vmem:[%s3 + $0x420] sm:$0xff]
      %v1135 = vld [vmem:[%s3 + $0x428] sm:$0xff]
      %v1136 = vld [vmem:[%s3 + $0x430] sm:$0xff]
      %v1137 = vld [vmem:[%s3 + $0x438] sm:$0xff]
      %v1138 = vld [vmem:[%s3 + $0x440] sm:$0xff]
      %v1139 = vld [vmem:[%s3 + $0x448] sm:$0xff]
      %v1140 = vld [vmem:[%s3 + $0x450] sm:$0xff]
      %v1141 = vld [vmem:[%s3 + $0x458] sm:$0xff]
      %v1142 = vld [vmem:[%s3 + $0x460] sm:$0xff]
      %v1143 = vld [vmem:[%s3 + $0x468] sm:$0xff]
      %v1144 = vld [vmem:[%s3 + $0x470] sm:$0xff]
      %v1145 = vld [vmem:[%s3 + $0x478] sm:$0xff]
      %v1146 = vld [vmem:[%s4] sm:$0x1]
      %v1148 = vlaneseq
      %v1149 = vshrl.u32 %v1148, 7
      %v1150 = vsub.s32 0, %v1149
      %v1151 = vrot.slane %v1146, %v1150
      %1153 = vmatprep.subr.mxu0 0.0
      %1154 = vmatpush1.msra.mxu0 %v1017
      %1155 = vmatprep.subr.mxu0 0.0
      %1156 = vmatpush1.msra.mxu0 %v1016
      %1157 = vmatprep.subr.mxu0 0.0
      %1158 = vmatpush1.msra.mxu0 %v1015
      %1159 = vmatprep.subr.mxu0 0.0
      %1160 = vmatpush1.msra.mxu0 %v1014
      %1161 = vmatprep.subr.mxu0 0.0
      %1162 = vmatpush1.msra.mxu0 %v1013
      %1163 = vmatprep.subr.mxu0 0.0
      %1164 = vmatpush1.msra.mxu0 %v1012
      %1165 = vmatprep.subr.mxu0 0.0
      %1166 = vmatpush1.msra.mxu0 %v1011
      %1167 = vmatprep.subr.mxu0 0.0
      %1168 = vmatpush1.msra.mxu0 %v1010
      %1169 = vmatprep.subr.mxu0 0.0
      %1170 = vmatpush1.msra.mxu0 %v1009
      %1171 = vmatprep.subr.mxu0 0.0
      %1172 = vmatpush1.msra.mxu0 %v1008
      %1173 = vmatprep.subr.mxu0 0.0
      %1174 = vmatpush1.msra.mxu0 %v1007
      %1175 = vmatprep.subr.mxu0 0.0
      %1176 = vmatpush1.msra.mxu0 %v1006
      %1177 = vmatprep.subr.mxu0 0.0
      %1178 = vmatpush1.msra.mxu0 %v1005
      %1179 = vmatprep.subr.mxu0 0.0
      %1180 = vmatpush1.msra.mxu0 %v1004
      %1181 = vmatprep.subr.mxu0 0.0
      %1182 = vmatpush1.msra.mxu0 %v1003
      %1183 = vmatprep.subr.mxu0 0.0
      %1184 = vmatpush1.msra.mxu0 %v1002
      %1185 = vmatprep.subr.mxu0 0.0
      %1186 = vmatpush2.msra.mxu0 %v1033
      %1187 = vmatprep.subr.mxu0 0.0
      %1188 = vmatpush2.msra.mxu0 %v1032
      %1189 = vmatprep.subr.mxu0 0.0
      %1190 = vmatpush2.msra.mxu0 %v1031
      %1191 = vmatprep.subr.mxu0 0.0
      %1192 = vmatpush2.msra.mxu0 %v1030
      %1193 = vmatprep.subr.mxu0 0.0
      %1194 = vmatpush2.msra.mxu0 %v1029
      %1195 = vmatprep.subr.mxu0 0.0
      %1196 = vmatpush2.msra.mxu0 %v1028
      %1197 = vmatprep.subr.mxu0 0.0
      %1198 = vmatpush2.msra.mxu0 %v1027
      %1199 = vmatprep.subr.mxu0 0.0
      %1200 = vmatpush2.msra.mxu0 %v1026
      %1201 = vmatprep.subr.mxu0 0.0
      %1202 = vmatpush2.msra.mxu0 %v1025
      %1203 = vmatprep.subr.mxu0 0.0
      %1204 = vmatpush2.msra.mxu0 %v1024
      %1205 = vmatprep.subr.mxu0 0.0
      %1206 = vmatpush2.msra.mxu0 %v1023
      %1207 = vmatprep.subr.mxu0 0.0
      %1208 = vmatpush2.msra.mxu0 %v1022
      %1209 = vmatprep.subr.mxu0 0.0
      %1210 = vmatpush2.msra.mxu0 %v1021
      %1211 = vmatprep.subr.mxu0 0.0
      %1212 = vmatpush2.msra.mxu0 %v1020
      %1213 = vmatprep.subr.mxu0 0.0
      %1214 = vmatpush2.msra.mxu0 %v1019
      %1215 = vmatprep.subr.mxu0 0.0
      %1216 = vmatpush2.msra.mxu0 %v1018
      %1217 = vmatprep.mubr.f32.mxu0 %v859
      %1218 = vmatmul.mubr.f32.gmra.mxu0 %v858
      %v1219 = vpop.f32.mrf.mxu0
      %v1220 = vadd.f32 %v1151, %v1219
      %v1221 = vpop.f32.mrf.mxu0
      %1222 = vmatprep.mubr.f32.mxu0 %v868
      %1223 = vmatmul.mubr.f32.gmra.mxu0 %v867
      %v1224 = vpop.f32.mrf.mxu0
      %v1225 = vadd.f32 %v1151, %v1224
      %v1226 = vpop.f32.mrf.mxu0
      %1227 = vmatprep.mubr.f32.mxu0 %v877
      %1228 = vmatmul.mubr.f32.gmra.mxu0 %v876
      %v1229 = vpop.f32.mrf.mxu0
      %v1230 = vadd.f32 %v1151, %v1229
      %v1231 = vpop.f32.mrf.mxu0
      %1232 = vmatprep.mubr.f32.mxu0 %v886
      %1233 = vmatmul.mubr.f32.gmra.mxu0 %v885
      %v1234 = vpop.f32.mrf.mxu0
      %v1235 = vadd.f32 %v1151, %v1234
      %v1236 = vpop.f32.mrf.mxu0
      %1237 = vmatprep.mubr.f32.mxu0 %v895
      %1238 = vmatmul.mubr.f32.gmra.mxu0 %v894
      %v1239 = vpop.f32.mrf.mxu0
      %v1240 = vadd.f32 %v1151, %v1239
      %v1241 = vpop.f32.mrf.mxu0
      %1242 = vmatprep.mubr.f32.mxu0 %v904
      %1243 = vmatmul.mubr.f32.gmra.mxu0 %v903
      %v1244 = vpop.f32.mrf.mxu0
      %v1245 = vadd.f32 %v1151, %v1244
      %v1246 = vpop.f32.mrf.mxu0
      %1247 = vmatprep.mubr.f32.mxu0 %v913
      %1248 = vmatmul.mubr.f32.gmra.mxu0 %v912
      %v1249 = vpop.f32.mrf.mxu0
      %v1250 = vadd.f32 %v1151, %v1249
      %v1251 = vpop.f32.mrf.mxu0
      %1252 = vmatprep.mubr.f32.mxu0 %v922
      %1253 = vmatmul.mubr.f32.gmra.mxu0 %v921
      %v1254 = vpop.f32.mrf.mxu0
      %v1255 = vadd.f32 %v1151, %v1254
      %v1256 = vpop.f32.mrf.mxu0
      %1257 = vmatprep.mubr.f32.mxu0 %v931
      %1258 = vmatmul.mubr.f32.gmra.mxu0 %v930
      %v1259 = vpop.f32.mrf.mxu0
      %v1260 = vadd.f32 %v1151, %v1259
      %v1261 = vpop.f32.mrf.mxu0
      %1262 = vmatprep.mubr.f32.mxu0 %v940
      %1263 = vmatmul.mubr.f32.gmra.mxu0 %v939
      %v1264 = vpop.f32.mrf.mxu0
      %v1265 = vadd.f32 %v1151, %v1264
      %v1266 = vpop.f32.mrf.mxu0
      %1267 = vmatprep.mubr.f32.mxu0 %v949
      %1268 = vmatmul.mubr.f32.gmra.mxu0 %v948
      %v1269 = vpop.f32.mrf.mxu0
      %v1270 = vadd.f32 %v1151, %v1269
      %v1271 = vpop.f32.mrf.mxu0
      %1272 = vmatprep.mubr.f32.mxu0 %v958
      %1273 = vmatmul.mubr.f32.gmra.mxu0 %v957
      %v1274 = vpop.f32.mrf.mxu0
      %v1275 = vadd.f32 %v1151, %v1274
      %v1276 = vpop.f32.mrf.mxu0
      %1277 = vmatprep.mubr.f32.mxu0 %v967
      %1278 = vmatmul.mubr.f32.gmra.mxu0 %v966
      %v1279 = vpop.f32.mrf.mxu0
      %v1280 = vadd.f32 %v1151, %v1279
      %v1281 = vpop.f32.mrf.mxu0
      %1282 = vmatprep.mubr.f32.mxu0 %v976
      %1283 = vmatmul.mubr.f32.gmra.mxu0 %v975
      %v1284 = vpop.f32.mrf.mxu0
      %v1285 = vadd.f32 %v1151, %v1284
      %v1286 = vpop.f32.mrf.mxu0
      %1287 = vmatprep.mubr.f32.mxu0 %v985
      %1288 = vmatmul.mubr.f32.gmra.mxu0 %v984
      %v1289 = vpop.f32.mrf.mxu0
      %v1290 = vadd.f32 %v1151, %v1289
      %v1291 = vpop.f32.mrf.mxu0
      %1292 = vmatprep.mubr.f32.mxu0 %v994
      %1293 = vmatmul.mubr.f32.gmra.mxu0 %v993
      %v1294 = vpop.f32.mrf.mxu0
      %v1295 = vadd.f32 %v1151, %v1294
      %v1296 = vpop.f32.mrf.mxu0
      %1297 = vdwg.mxu0
      %1298 = vmatprep.subr.mxu0 0.0
      %1299 = vmatpush1.msra.mxu0 %v1049
      %1300 = vmatprep.subr.mxu0 0.0
      %1301 = vmatpush1.msra.mxu0 %v1048
      %1302 = vmatprep.subr.mxu0 0.0
      %1303 = vmatpush1.msra.mxu0 %v1047
      %1304 = vmatprep.subr.mxu0 0.0
      %1305 = vmatpush1.msra.mxu0 %v1046
      %1306 = vmatprep.subr.mxu0 0.0
      %1307 = vmatpush1.msra.mxu0 %v1045
      %1308 = vmatprep.subr.mxu0 0.0
      %1309 = vmatpush1.msra.mxu0 %v1044
      %1310 = vmatprep.subr.mxu0 0.0
      %1311 = vmatpush1.msra.mxu0 %v1043
      %1312 = vmatprep.subr.mxu0 0.0
      %1313 = vmatpush1.msra.mxu0 %v1042
      %1314 = vmatprep.subr.mxu0 0.0
      %1315 = vmatpush1.msra.mxu0 %v1041
      %1316 = vmatprep.subr.mxu0 0.0
      %1317 = vmatpush1.msra.mxu0 %v1040
      %1318 = vmatprep.subr.mxu0 0.0
      %1319 = vmatpush1.msra.mxu0 %v1039
      %1320 = vmatprep.subr.mxu0 0.0
      %1321 = vmatpush1.msra.mxu0 %v1038
      %1322 = vmatprep.subr.mxu0 0.0
      %1323 = vmatpush1.msra.mxu0 %v1037
      %1324 = vmatprep.subr.mxu0 0.0
      %1325 = vmatpush1.msra.mxu0 %v1036
      %1326 = vmatprep.subr.mxu0 0.0
      %1327 = vmatpush1.msra.mxu0 %v1035
      %1328 = vmatprep.subr.mxu0 0.0
      %1329 = vmatpush1.msra.mxu0 %v1034
      %1330 = vmatprep.subr.mxu0 0.0
      %1331 = vmatpush2.msra.mxu0 %v1065
      %1332 = vmatprep.subr.mxu0 0.0
      %1333 = vmatpush2.msra.mxu0 %v1064
      %1334 = vmatprep.subr.mxu0 0.0
      %1335 = vmatpush2.msra.mxu0 %v1063
      %1336 = vmatprep.subr.mxu0 0.0
      %1337 = vmatpush2.msra.mxu0 %v1062
      %1338 = vmatprep.subr.mxu0 0.0
      %1339 = vmatpush2.msra.mxu0 %v1061
      %1340 = vmatprep.subr.mxu0 0.0
      %1341 = vmatpush2.msra.mxu0 %v1060
      %1342 = vmatprep.subr.mxu0 0.0
      %1343 = vmatpush2.msra.mxu0 %v1059
      %1344 = vmatprep.subr.mxu0 0.0
      %1345 = vmatpush2.msra.mxu0 %v1058
      %1346 = vmatprep.subr.mxu0 0.0
      %1347 = vmatpush2.msra.mxu0 %v1057
      %1348 = vmatprep.subr.mxu0 0.0
      %1349 = vmatpush2.msra.mxu0 %v1056
      %1350 = vmatprep.subr.mxu0 0.0
      %1351 = vmatpush2.msra.mxu0 %v1055
      %1352 = vmatprep.subr.mxu0 0.0
      %1353 = vmatpush2.msra.mxu0 %v1054
      %1354 = vmatprep.subr.mxu0 0.0
      %1355 = vmatpush2.msra.mxu0 %v1053
      %1356 = vmatprep.subr.mxu0 0.0
      %1357 = vmatpush2.msra.mxu0 %v1052
      %1358 = vmatprep.subr.mxu0 0.0
      %1359 = vmatpush2.msra.mxu0 %v1051
      %1360 = vmatprep.subr.mxu0 0.0
      %1361 = vmatpush2.msra.mxu0 %v1050
      %1362 = vmatprep.mubr.f32.mxu0 %v861
      %1363 = vmatmul.mubr.f32.gmra.mxu0 %v860
      %v1364 = vpop.f32.mrf.mxu0
      %v1365 = vadd.f32 %v1220, %v1364
      %v1366 = vpop.f32.mrf.mxu0
      %1367 = vmatprep.mubr.f32.mxu0 %v870
      %1368 = vmatmul.mubr.f32.gmra.mxu0 %v869
      %v1369 = vpop.f32.mrf.mxu0
      %v1370 = vadd.f32 %v1225, %v1369
      %v1371 = vpop.f32.mrf.mxu0
      %1372 = vmatprep.mubr.f32.mxu0 %v879
      %1373 = vmatmul.mubr.f32.gmra.mxu0 %v878
      %v1374 = vpop.f32.mrf.mxu0
      %v1375 = vadd.f32 %v1230, %v1374
      %v1376 = vpop.f32.mrf.mxu0
      %1377 = vmatprep.mubr.f32.mxu0 %v888
      %1378 = vmatmul.mubr.f32.gmra.mxu0 %v887
      %v1379 = vpop.f32.mrf.mxu0
      %v1380 = vadd.f32 %v1235, %v1379
      %v1381 = vpop.f32.mrf.mxu0
      %1382 = vmatprep.mubr.f32.mxu0 %v897
      %1383 = vmatmul.mubr.f32.gmra.mxu0 %v896
      %v1384 = vpop.f32.mrf.mxu0
      %v1385 = vadd.f32 %v1240, %v1384
      %v1386 = vpop.f32.mrf.mxu0
      %1387 = vmatprep.mubr.f32.mxu0 %v906
      %1388 = vmatmul.mubr.f32.gmra.mxu0 %v905
      %v1389 = vpop.f32.mrf.mxu0
      %v1390 = vadd.f32 %v1245, %v1389
      %v1391 = vpop.f32.mrf.mxu0
      %1392 = vmatprep.mubr.f32.mxu0 %v915
      %1393 = vmatmul.mubr.f32.gmra.mxu0 %v914
      %v1394 = vpop.f32.mrf.mxu0
      %v1395 = vadd.f32 %v1250, %v1394
      %v1396 = vpop.f32.mrf.mxu0
      %1397 = vmatprep.mubr.f32.mxu0 %v924
      %1398 = vmatmul.mubr.f32.gmra.mxu0 %v923
      %v1399 = vpop.f32.mrf.mxu0
      %v1400 = vadd.f32 %v1255, %v1399
      %v1401 = vpop.f32.mrf.mxu0
      %1402 = vmatprep.mubr.f32.mxu0 %v933
      %1403 = vmatmul.mubr.f32.gmra.mxu0 %v932
      %v1404 = vpop.f32.mrf.mxu0
      %v1405 = vadd.f32 %v1260, %v1404
      %v1406 = vpop.f32.mrf.mxu0
      %1407 = vmatprep.mubr.f32.mxu0 %v942
      %1408 = vmatmul.mubr.f32.gmra.mxu0 %v941
      %v1409 = vpop.f32.mrf.mxu0
      %v1410 = vadd.f32 %v1265, %v1409
      %v1411 = vpop.f32.mrf.mxu0
      %1412 = vmatprep.mubr.f32.mxu0 %v951
      %1413 = vmatmul.mubr.f32.gmra.mxu0 %v950
      %v1414 = vpop.f32.mrf.mxu0
      %v1415 = vadd.f32 %v1270, %v1414
      %v1416 = vpop.f32.mrf.mxu0
      %1417 = vmatprep.mubr.f32.mxu0 %v960
      %1418 = vmatmul.mubr.f32.gmra.mxu0 %v959
      %v1419 = vpop.f32.mrf.mxu0
      %v1420 = vadd.f32 %v1275, %v1419
      %v1421 = vpop.f32.mrf.mxu0
      %1422 = vmatprep.mubr.f32.mxu0 %v969
      %1423 = vmatmul.mubr.f32.gmra.mxu0 %v968
      %v1424 = vpop.f32.mrf.mxu0
      %v1425 = vadd.f32 %v1280, %v1424
      %v1426 = vpop.f32.mrf.mxu0
      %1427 = vmatprep.mubr.f32.mxu0 %v978
      %1428 = vmatmul.mubr.f32.gmra.mxu0 %v977
      %v1429 = vpop.f32.mrf.mxu0
      %v1430 = vadd.f32 %v1285, %v1429
      %v1431 = vpop.f32.mrf.mxu0
      %1432 = vmatprep.mubr.f32.mxu0 %v987
      %1433 = vmatmul.mubr.f32.gmra.mxu0 %v986
      %v1434 = vpop.f32.mrf.mxu0
      %v1435 = vadd.f32 %v1290, %v1434
      %v1436 = vpop.f32.mrf.mxu0
      %1437 = vmatprep.mubr.f32.mxu0 %v996
      %1438 = vmatmul.mubr.f32.gmra.mxu0 %v995
      %v1439 = vpop.f32.mrf.mxu0
      %v1440 = vadd.f32 %v1295, %v1439
      %v1441 = vpop.f32.mrf.mxu0
      %1442 = vdwg.mxu0
      %1443 = vmatprep.subr.mxu0 0.0
      %1444 = vmatpush1.msra.mxu0 %v1081
      %1445 = vmatprep.subr.mxu0 0.0
      %1446 = vmatpush1.msra.mxu0 %v1080
      %1447 = vmatprep.subr.mxu0 0.0
      %1448 = vmatpush1.msra.mxu0 %v1079
      %1449 = vmatprep.subr.mxu0 0.0
      %1450 = vmatpush1.msra.mxu0 %v1078
      %1451 = vmatprep.subr.mxu0 0.0
      %1452 = vmatpush1.msra.mxu0 %v1077
      %1453 = vmatprep.subr.mxu0 0.0
      %1454 = vmatpush1.msra.mxu0 %v1076
      %1455 = vmatprep.subr.mxu0 0.0
      %1456 = vmatpush1.msra.mxu0 %v1075
      %1457 = vmatprep.subr.mxu0 0.0
      %1458 = vmatpush1.msra.mxu0 %v1074
      %1459 = vmatprep.subr.mxu0 0.0
      %1460 = vmatpush1.msra.mxu0 %v1073
      %1461 = vmatprep.subr.mxu0 0.0
      %1462 = vmatpush1.msra.mxu0 %v1072
      %1463 = vmatprep.subr.mxu0 0.0
      %1464 = vmatpush1.msra.mxu0 %v1071
      %1465 = vmatprep.subr.mxu0 0.0
      %1466 = vmatpush1.msra.mxu0 %v1070
      %1467 = vmatprep.subr.mxu0 0.0
      %1468 = vmatpush1.msra.mxu0 %v1069
      %1469 = vmatprep.subr.mxu0 0.0
      %1470 = vmatpush1.msra.mxu0 %v1068
      %1471 = vmatprep.subr.mxu0 0.0
      %1472 = vmatpush1.msra.mxu0 %v1067
      %1473 = vmatprep.subr.mxu0 0.0
      %1474 = vmatpush1.msra.mxu0 %v1066
      %1475 = vmatprep.subr.mxu0 0.0
      %1476 = vmatpush2.msra.mxu0 %v1097
      %1477 = vmatprep.subr.mxu0 0.0
      %1478 = vmatpush2.msra.mxu0 %v1096
      %1479 = vmatprep.subr.mxu0 0.0
      %1480 = vmatpush2.msra.mxu0 %v1095
      %1481 = vmatprep.subr.mxu0 0.0
      %1482 = vmatpush2.msra.mxu0 %v1094
      %1483 = vmatprep.subr.mxu0 0.0
      %1484 = vmatpush2.msra.mxu0 %v1093
      %1485 = vmatprep.subr.mxu0 0.0
      %1486 = vmatpush2.msra.mxu0 %v1092
      %1487 = vmatprep.subr.mxu0 0.0
      %1488 = vmatpush2.msra.mxu0 %v1091
      %1489 = vmatprep.subr.mxu0 0.0
      %1490 = vmatpush2.msra.mxu0 %v1090
      %1491 = vmatprep.subr.mxu0 0.0
      %1492 = vmatpush2.msra.mxu0 %v1089
      %1493 = vmatprep.subr.mxu0 0.0
      %1494 = vmatpush2.msra.mxu0 %v1088
      %1495 = vmatprep.subr.mxu0 0.0
      %1496 = vmatpush2.msra.mxu0 %v1087
      %1497 = vmatprep.subr.mxu0 0.0
      %1498 = vmatpush2.msra.mxu0 %v1086
      %1499 = vmatprep.subr.mxu0 0.0
      %1500 = vmatpush2.msra.mxu0 %v1085
      %1501 = vmatprep.subr.mxu0 0.0
      %1502 = vmatpush2.msra.mxu0 %v1084
      %1503 = vmatprep.subr.mxu0 0.0
      %1504 = vmatpush2.msra.mxu0 %v1083
      %1505 = vmatprep.subr.mxu0 0.0
      %1506 = vmatpush2.msra.mxu0 %v1082
      %1507 = vmatprep.mubr.f32.mxu0 %v863
      %1508 = vmatmul.mubr.f32.gmra.mxu0 %v862
      %v1509 = vpop.f32.mrf.mxu0
      %v1510 = vadd.f32 %v1365, %v1509
      %v1511 = vpop.f32.mrf.mxu0
      %1512 = vmatprep.mubr.f32.mxu0 %v872
      %1513 = vmatmul.mubr.f32.gmra.mxu0 %v871
      %v1514 = vpop.f32.mrf.mxu0
      %v1515 = vadd.f32 %v1370, %v1514
      %v1516 = vpop.f32.mrf.mxu0
      %1517 = vmatprep.mubr.f32.mxu0 %v881
      %1518 = vmatmul.mubr.f32.gmra.mxu0 %v880
      %v1519 = vpop.f32.mrf.mxu0
      %v1520 = vadd.f32 %v1375, %v1519
      %v1521 = vpop.f32.mrf.mxu0
      %1522 = vmatprep.mubr.f32.mxu0 %v890
      %1523 = vmatmul.mubr.f32.gmra.mxu0 %v889
      %v1524 = vpop.f32.mrf.mxu0
      %v1525 = vadd.f32 %v1380, %v1524
      %v1526 = vpop.f32.mrf.mxu0
      %1527 = vmatprep.mubr.f32.mxu0 %v899
      %1528 = vmatmul.mubr.f32.gmra.mxu0 %v898
      %v1529 = vpop.f32.mrf.mxu0
      %v1530 = vadd.f32 %v1385, %v1529
      %v1531 = vpop.f32.mrf.mxu0
      %1532 = vmatprep.mubr.f32.mxu0 %v908
      %1533 = vmatmul.mubr.f32.gmra.mxu0 %v907
      %v1534 = vpop.f32.mrf.mxu0
      %v1535 = vadd.f32 %v1390, %v1534
      %v1536 = vpop.f32.mrf.mxu0
      %1537 = vmatprep.mubr.f32.mxu0 %v917
      %1538 = vmatmul.mubr.f32.gmra.mxu0 %v916
      %v1539 = vpop.f32.mrf.mxu0
      %v1540 = vadd.f32 %v1395, %v1539
      %v1541 = vpop.f32.mrf.mxu0
      %1542 = vmatprep.mubr.f32.mxu0 %v926
      %1543 = vmatmul.mubr.f32.gmra.mxu0 %v925
      %v1544 = vpop.f32.mrf.mxu0
      %v1545 = vadd.f32 %v1400, %v1544
      %v1546 = vpop.f32.mrf.mxu0
      %1547 = vmatprep.mubr.f32.mxu0 %v935
      %1548 = vmatmul.mubr.f32.gmra.mxu0 %v934
      %v1549 = vpop.f32.mrf.mxu0
      %v1550 = vadd.f32 %v1405, %v1549
      %v1551 = vpop.f32.mrf.mxu0
      %1552 = vmatprep.mubr.f32.mxu0 %v944
      %1553 = vmatmul.mubr.f32.gmra.mxu0 %v943
      %v1554 = vpop.f32.mrf.mxu0
      %v1555 = vadd.f32 %v1410, %v1554
      %v1556 = vpop.f32.mrf.mxu0
      %1557 = vmatprep.mubr.f32.mxu0 %v953
      %1558 = vmatmul.mubr.f32.gmra.mxu0 %v952
      %v1559 = vpop.f32.mrf.mxu0
      %v1560 = vadd.f32 %v1415, %v1559
      %v1561 = vpop.f32.mrf.mxu0
      %1562 = vmatprep.mubr.f32.mxu0 %v962
      %1563 = vmatmul.mubr.f32.gmra.mxu0 %v961
      %v1564 = vpop.f32.mrf.mxu0
      %v1565 = vadd.f32 %v1420, %v1564
      %v1566 = vpop.f32.mrf.mxu0
      %1567 = vmatprep.mubr.f32.mxu0 %v971
      %1568 = vmatmul.mubr.f32.gmra.mxu0 %v970
      %v1569 = vpop.f32.mrf.mxu0
      %v1570 = vadd.f32 %v1425, %v1569
      %v1571 = vpop.f32.mrf.mxu0
      %1572 = vmatprep.mubr.f32.mxu0 %v980
      %1573 = vmatmul.mubr.f32.gmra.mxu0 %v979
      %v1574 = vpop.f32.mrf.mxu0
      %v1575 = vadd.f32 %v1430, %v1574
      %v1576 = vpop.f32.mrf.mxu0
      %1577 = vmatprep.mubr.f32.mxu0 %v989
      %1578 = vmatmul.mubr.f32.gmra.mxu0 %v988
      %v1579 = vpop.f32.mrf.mxu0
      %v1580 = vadd.f32 %v1435, %v1579
      %v1581 = vpop.f32.mrf.mxu0
      %1582 = vmatprep.mubr.f32.mxu0 %v998
      %1583 = vmatmul.mubr.f32.gmra.mxu0 %v997
      %v1584 = vpop.f32.mrf.mxu0
      %v1585 = vadd.f32 %v1440, %v1584
      %v1586 = vpop.f32.mrf.mxu0
      %1587 = vdwg.mxu0
      %1588 = vmatprep.subr.mxu0 0.0
      %1589 = vmatpush1.msra.mxu0 %v1113
      %1590 = vmatprep.subr.mxu0 0.0
      %1591 = vmatpush1.msra.mxu0 %v1112
      %1592 = vmatprep.subr.mxu0 0.0
      %1593 = vmatpush1.msra.mxu0 %v1111
      %1594 = vmatprep.subr.mxu0 0.0
      %1595 = vmatpush1.msra.mxu0 %v1110
      %1596 = vmatprep.subr.mxu0 0.0
      %1597 = vmatpush1.msra.mxu0 %v1109
      %1598 = vmatprep.subr.mxu0 0.0
      %1599 = vmatpush1.msra.mxu0 %v1108
      %1600 = vmatprep.subr.mxu0 0.0
      %1601 = vmatpush1.msra.mxu0 %v1107
      %1602 = vmatprep.subr.mxu0 0.0
      %1603 = vmatpush1.msra.mxu0 %v1106
      %1604 = vmatprep.subr.mxu0 0.0
      %1605 = vmatpush1.msra.mxu0 %v1105
      %1606 = vmatprep.subr.mxu0 0.0
      %1607 = vmatpush1.msra.mxu0 %v1104
      %1608 = vmatprep.subr.mxu0 0.0
      %1609 = vmatpush1.msra.mxu0 %v1103
      %1610 = vmatprep.subr.mxu0 0.0
      %1611 = vmatpush1.msra.mxu0 %v1102
      %1612 = vmatprep.subr.mxu0 0.0
      %1613 = vmatpush1.msra.mxu0 %v1101
      %1614 = vmatprep.subr.mxu0 0.0
      %1615 = vmatpush1.msra.mxu0 %v1100
      %1616 = vmatprep.subr.mxu0 0.0
      %1617 = vmatpush1.msra.mxu0 %v1099
      %1618 = vmatprep.subr.mxu0 0.0
      %1619 = vmatpush1.msra.mxu0 %v1098
      %1620 = vmatprep.subr.mxu0 0.0
      %1621 = vmatpush2.msra.mxu0 %v1129
      %1622 = vmatprep.subr.mxu0 0.0
      %1623 = vmatpush2.msra.mxu0 %v1128
      %1624 = vmatprep.subr.mxu0 0.0
      %1625 = vmatpush2.msra.mxu0 %v1127
      %1626 = vmatprep.subr.mxu0 0.0
      %1627 = vmatpush2.msra.mxu0 %v1126
      %1628 = vmatprep.subr.mxu0 0.0
      %1629 = vmatpush2.msra.mxu0 %v1125
      %1630 = vmatprep.subr.mxu0 0.0
      %1631 = vmatpush2.msra.mxu0 %v1124
      %1632 = vmatprep.subr.mxu0 0.0
      %1633 = vmatpush2.msra.mxu0 %v1123
      %1634 = vmatprep.subr.mxu0 0.0
      %1635 = vmatpush2.msra.mxu0 %v1122
      %1636 = vmatprep.subr.mxu0 0.0
      %1637 = vmatpush2.msra.mxu0 %v1121
      %1638 = vmatprep.subr.mxu0 0.0
      %1639 = vmatpush2.msra.mxu0 %v1120
      %1640 = vmatprep.subr.mxu0 0.0
      %1641 = vmatpush2.msra.mxu0 %v1119
      %1642 = vmatprep.subr.mxu0 0.0
      %1643 = vmatpush2.msra.mxu0 %v1118
      %1644 = vmatprep.subr.mxu0 0.0
      %1645 = vmatpush2.msra.mxu0 %v1117
      %1646 = vmatprep.subr.mxu0 0.0
      %1647 = vmatpush2.msra.mxu0 %v1116
      %1648 = vmatprep.subr.mxu0 0.0
      %1649 = vmatpush2.msra.mxu0 %v1115
      %1650 = vmatprep.subr.mxu0 0.0
      %1651 = vmatpush2.msra.mxu0 %v1114
      %1652 = vmatprep.mubr.f32.mxu0 %v865
      %1653 = vmatmul.mubr.f32.gmra.mxu0 %v864
      %v1654 = vpop.f32.mrf.mxu0
      %v1655 = vadd.f32 %v1510, %v1654
      %v1656 = vpop.f32.mrf.mxu0
      %1657 = vmatprep.mubr.f32.mxu0 %v874
      %1658 = vmatmul.mubr.f32.gmra.mxu0 %v873
      %v1659 = vpop.f32.mrf.mxu0
      %v1660 = vadd.f32 %v1515, %v1659
      %v1661 = vpop.f32.mrf.mxu0
      %1662 = vmatprep.mubr.f32.mxu0 %v883
      %1663 = vmatmul.mubr.f32.gmra.mxu0 %v882
      %v1664 = vpop.f32.mrf.mxu0
      %v1665 = vadd.f32 %v1520, %v1664
      %v1666 = vpop.f32.mrf.mxu0
      %1667 = vmatprep.mubr.f32.mxu0 %v892
      %1668 = vmatmul.mubr.f32.gmra.mxu0 %v891
      %v1669 = vpop.f32.mrf.mxu0
      %v1670 = vadd.f32 %v1525, %v1669
      %v1671 = vpop.f32.mrf.mxu0
      %1672 = vmatprep.mubr.f32.mxu0 %v901
      %1673 = vmatmul.mubr.f32.gmra.mxu0 %v900
      %v1674 = vpop.f32.mrf.mxu0
      %v1675 = vadd.f32 %v1530, %v1674
      %v1676 = vpop.f32.mrf.mxu0
      %1677 = vmatprep.mubr.f32.mxu0 %v910
      %1678 = vmatmul.mubr.f32.gmra.mxu0 %v909
      %v1679 = vpop.f32.mrf.mxu0
      %v1680 = vadd.f32 %v1535, %v1679
      %v1681 = vpop.f32.mrf.mxu0
      %1682 = vmatprep.mubr.f32.mxu0 %v919
      %1683 = vmatmul.mubr.f32.gmra.mxu0 %v918
      %v1684 = vpop.f32.mrf.mxu0
      %v1685 = vadd.f32 %v1540, %v1684
      %v1686 = vpop.f32.mrf.mxu0
      %1687 = vmatprep.mubr.f32.mxu0 %v928
      %1688 = vmatmul.mubr.f32.gmra.mxu0 %v927
      %v1689 = vpop.f32.mrf.mxu0
      %v1690 = vadd.f32 %v1545, %v1689
      %v1691 = vpop.f32.mrf.mxu0
      %1692 = vmatprep.mubr.f32.mxu0 %v937
      %1693 = vmatmul.mubr.f32.gmra.mxu0 %v936
      %v1694 = vpop.f32.mrf.mxu0
      %v1695 = vadd.f32 %v1550, %v1694
      %v1696 = vpop.f32.mrf.mxu0
      %1697 = vmatprep.mubr.f32.mxu0 %v946
      %1698 = vmatmul.mubr.f32.gmra.mxu0 %v945
      %v1699 = vpop.f32.mrf.mxu0
      %v1700 = vadd.f32 %v1555, %v1699
      %v1701 = vpop.f32.mrf.mxu0
      %1702 = vmatprep.mubr.f32.mxu0 %v955
      %1703 = vmatmul.mubr.f32.gmra.mxu0 %v954
      %v1704 = vpop.f32.mrf.mxu0
      %v1705 = vadd.f32 %v1560, %v1704
      %v1706 = vpop.f32.mrf.mxu0
      %1707 = vmatprep.mubr.f32.mxu0 %v964
      %1708 = vmatmul.mubr.f32.gmra.mxu0 %v963
      %v1709 = vpop.f32.mrf.mxu0
      %v1710 = vadd.f32 %v1565, %v1709
      %v1711 = vpop.f32.mrf.mxu0
      %1712 = vmatprep.mubr.f32.mxu0 %v973
      %1713 = vmatmul.mubr.f32.gmra.mxu0 %v972
      %v1714 = vpop.f32.mrf.mxu0
      %v1715 = vadd.f32 %v1570, %v1714
      %v1716 = vpop.f32.mrf.mxu0
      %1717 = vmatprep.mubr.f32.mxu0 %v982
      %1718 = vmatmul.mubr.f32.gmra.mxu0 %v981
      %v1719 = vpop.f32.mrf.mxu0
      %v1720 = vadd.f32 %v1575, %v1719
      %v1721 = vpop.f32.mrf.mxu0
      %1722 = vmatprep.mubr.f32.mxu0 %v991
      %1723 = vmatmul.mubr.f32.gmra.mxu0 %v990
      %v1724 = vpop.f32.mrf.mxu0
      %v1725 = vadd.f32 %v1580, %v1724
      %v1726 = vpop.f32.mrf.mxu0
      %1727 = vmatprep.mubr.f32.mxu0 %v1000
      %1728 = vmatmul.mubr.f32.gmra.mxu0 %v999
      %v1729 = vpop.f32.mrf.mxu0
      %v1730 = vadd.f32 %v1585, %v1729
      %v1731 = vpop.f32.mrf.mxu0
      %1732 = vdwg.mxu0
      %1733 = vmatprep.subr.mxu0 0.0
      %1734 = vmatpush1.msra.mxu0 %v1145
      %1735 = vmatprep.subr.mxu0 0.0
      %1736 = vmatpush1.msra.mxu0 %v1144
      %1737 = vmatprep.subr.mxu0 0.0
      %1738 = vmatpush1.msra.mxu0 %v1143
      %1739 = vmatprep.subr.mxu0 0.0
      %1740 = vmatpush1.msra.mxu0 %v1142
      %1741 = vmatprep.subr.mxu0 0.0
      %1742 = vmatpush1.msra.mxu0 %v1141
      %1743 = vmatprep.subr.mxu0 0.0
      %1744 = vmatpush1.msra.mxu0 %v1140
      %1745 = vmatprep.subr.mxu0 0.0
      %1746 = vmatpush1.msra.mxu0 %v1139
      %1747 = vmatprep.subr.mxu0 0.0
      %1748 = vmatpush1.msra.mxu0 %v1138
      %1749 = vmatprep.subr.mxu0 0.0
      %1750 = vmatpush1.msra.mxu0 %v1137
      %1751 = vmatprep.subr.mxu0 0.0
      %1752 = vmatpush1.msra.mxu0 %v1136
      %1753 = vmatprep.subr.mxu0 0.0
      %1754 = vmatpush1.msra.mxu0 %v1135
      %1755 = vmatprep.subr.mxu0 0.0
      %1756 = vmatpush1.msra.mxu0 %v1134
      %1757 = vmatprep.subr.mxu0 0.0
      %1758 = vmatpush1.msra.mxu0 %v1133
      %1759 = vmatprep.subr.mxu0 0.0
      %1760 = vmatpush1.msra.mxu0 %v1132
      %1761 = vmatprep.subr.mxu0 0.0
      %1762 = vmatpush1.msra.mxu0 %v1131
      %1763 = vmatprep.subr.mxu0 0.0
      %1764 = vmatpush1.msra.mxu0 %v1130
      %1765 = vmatprep.subr.mxu0 0.0
      %1766 = vmatpush2.msra.mxu0 0.0
      %1767 = vmatprep.subr.mxu0 0.0
      %1768 = vmatpush2.msra.mxu0 0.0
      %1769 = vmatprep.subr.mxu0 0.0
      %1770 = vmatpush2.msra.mxu0 0.0
      %1771 = vmatprep.subr.mxu0 0.0
      %1772 = vmatpush2.msra.mxu0 0.0
      %1773 = vmatprep.subr.mxu0 0.0
      %1774 = vmatpush2.msra.mxu0 0.0
      %1775 = vmatprep.subr.mxu0 0.0
      %1776 = vmatpush2.msra.mxu0 0.0
      %1777 = vmatprep.subr.mxu0 0.0
      %1778 = vmatpush2.msra.mxu0 0.0
      %1779 = vmatprep.subr.mxu0 0.0
      %1780 = vmatpush2.msra.mxu0 0.0
      %1781 = vmatprep.subr.mxu0 0.0
      %1782 = vmatpush2.msra.mxu0 0.0
      %1783 = vmatprep.subr.mxu0 0.0
      %1784 = vmatpush2.msra.mxu0 0.0
      %1785 = vmatprep.subr.mxu0 0.0
      %1786 = vmatpush2.msra.mxu0 0.0
      %1787 = vmatprep.subr.mxu0 0.0
      %1788 = vmatpush2.msra.mxu0 0.0
      %1789 = vmatprep.subr.mxu0 0.0
      %1790 = vmatpush2.msra.mxu0 0.0
      %1791 = vmatprep.subr.mxu0 0.0
      %1792 = vmatpush2.msra.mxu0 0.0
      %1793 = vmatprep.subr.mxu0 0.0
      %1794 = vmatpush2.msra.mxu0 0.0
      %1795 = vmatprep.subr.mxu0 0.0
      %1796 = vmatpush2.msra.mxu0 0.0
      %1797 = vmatprep.mubr.f32.mxu0 0.0
      %1798 = vmatmul.mubr.f32.gmra.mxu0 %v866
      %v1799 = vpop.f32.mrf.mxu0
      %v1800 = vadd.f32 %v1655, %v1799
      %v1801 = vpop.f32.mrf.mxu0
      %1802 = vmatprep.mubr.f32.mxu0 0.0
      %1803 = vmatmul.mubr.f32.gmra.mxu0 %v875
      %v1804 = vpop.f32.mrf.mxu0
      %v1805 = vadd.f32 %v1660, %v1804
      %v1806 = vpop.f32.mrf.mxu0
      %1807 = vmatprep.mubr.f32.mxu0 0.0
      %1808 = vmatmul.mubr.f32.gmra.mxu0 %v884
      %v1809 = vpop.f32.mrf.mxu0
      %v1810 = vadd.f32 %v1665, %v1809
      %v1811 = vpop.f32.mrf.mxu0
      %1812 = vmatprep.mubr.f32.mxu0 0.0
      %1813 = vmatmul.mubr.f32.gmra.mxu0 %v893
      %v1814 = vpop.f32.mrf.mxu0
      %v1815 = vadd.f32 %v1670, %v1814
      %v1816 = vpop.f32.mrf.mxu0
      %1817 = vmatprep.mubr.f32.mxu0 0.0
      %1818 = vmatmul.mubr.f32.gmra.mxu0 %v902
      %v1819 = vpop.f32.mrf.mxu0
      %v1820 = vadd.f32 %v1675, %v1819
      %v1821 = vpop.f32.mrf.mxu0
      %1822 = vmatprep.mubr.f32.mxu0 0.0
      %1823 = vmatmul.mubr.f32.gmra.mxu0 %v911
      %v1824 = vpop.f32.mrf.mxu0
      %v1825 = vadd.f32 %v1680, %v1824
      %v1826 = vpop.f32.mrf.mxu0
      %1827 = vmatprep.mubr.f32.mxu0 0.0
      %1828 = vmatmul.mubr.f32.gmra.mxu0 %v920
      %v1829 = vpop.f32.mrf.mxu0
      %v1830 = vadd.f32 %v1685, %v1829
      %v1831 = vpop.f32.mrf.mxu0
      %1832 = vmatprep.mubr.f32.mxu0 0.0
      %1833 = vmatmul.mubr.f32.gmra.mxu0 %v929
      %v1834 = vpop.f32.mrf.mxu0
      %v1835 = vadd.f32 %v1690, %v1834
      %v1836 = vpop.f32.mrf.mxu0
      %1837 = vmatprep.mubr.f32.mxu0 0.0
      %1838 = vmatmul.mubr.f32.gmra.mxu0 %v938
      %v1839 = vpop.f32.mrf.mxu0
      %v1840 = vadd.f32 %v1695, %v1839
      %v1841 = vpop.f32.mrf.mxu0
      %1842 = vmatprep.mubr.f32.mxu0 0.0
      %1843 = vmatmul.mubr.f32.gmra.mxu0 %v947
      %v1844 = vpop.f32.mrf.mxu0
      %v1845 = vadd.f32 %v1700, %v1844
      %v1846 = vpop.f32.mrf.mxu0
      %1847 = vmatprep.mubr.f32.mxu0 0.0
      %1848 = vmatmul.mubr.f32.gmra.mxu0 %v956
      %v1849 = vpop.f32.mrf.mxu0
      %v1850 = vadd.f32 %v1705, %v1849
      %v1851 = vpop.f32.mrf.mxu0
      %1852 = vmatprep.mubr.f32.mxu0 0.0
      %1853 = vmatmul.mubr.f32.gmra.mxu0 %v965
      %v1854 = vpop.f32.mrf.mxu0
      %v1855 = vadd.f32 %v1710, %v1854
      %v1856 = vpop.f32.mrf.mxu0
      %1857 = vmatprep.mubr.f32.mxu0 0.0
      %1858 = vmatmul.mubr.f32.gmra.mxu0 %v974
      %v1859 = vpop.f32.mrf.mxu0
      %v1860 = vadd.f32 %v1715, %v1859
      %v1861 = vpop.f32.mrf.mxu0
      %1862 = vmatprep.mubr.f32.mxu0 0.0
      %1863 = vmatmul.mubr.f32.gmra.mxu0 %v983
      %v1864 = vpop.f32.mrf.mxu0
      %v1865 = vadd.f32 %v1720, %v1864
      %v1866 = vpop.f32.mrf.mxu0
      %1867 = vmatprep.mubr.f32.mxu0 0.0
      %1868 = vmatmul.mubr.f32.gmra.mxu0 %v992
      %v1869 = vpop.f32.mrf.mxu0
      %v1870 = vadd.f32 %v1725, %v1869
      %v1871 = vpop.f32.mrf.mxu0
      %1872 = vmatprep.mubr.f32.mxu0 0.0
      %1873 = vmatmul.mubr.f32.gmra.mxu0 %v1001
      %v1874 = vpop.f32.mrf.mxu0
      %v1875 = vadd.f32 %v1730, %v1874
      %v1876 = vpop.f32.mrf.mxu0
      %1877 = vdwg.mxu0
      %v1878 = vadd.f32 %v1800, %v1805
      %v1879 = vadd.f32 %v1878, %v1810
      %v1880 = vadd.f32 %v1879, %v1815
      %v1881 = vadd.f32 %v1880, %v1820
      %v1882 = vadd.f32 %v1881, %v1825
      %v1883 = vadd.f32 %v1882, %v1830
      %v1884 = vadd.f32 %v1883, %v1835
      %v1885 = vadd.f32 %v1884, %v1840
      %v1886 = vadd.f32 %v1885, %v1845
      %v1887 = vadd.f32 %v1886, %v1850
      %v1888 = vadd.f32 %v1887, %v1855
      %v1889 = vadd.f32 %v1888, %v1860
      %v1890 = vadd.f32 %v1889, %v1865
      %v1891 = vadd.f32 %v1890, %v1870
      %v1892 = vadd.f32 %v1891, %v1875
      %v1893 = vrot.slane %v1892, 4
      %v1894 = vadd.f32 %v1892, %v1893
      %v1895 = vrot.slane %v1894, 2
      %v1896 = vadd.f32 %v1894, %v1895
      %v1897 = vrot.slane %v1896, 1
      %v1898 = vadd.f32 %v1896, %v1897
      %v1899 = vmul.f32 %v1800, %v1800
      %v1900 = vmul.f32 %v1805, %v1805
      %v1901 = vmul.f32 %v1810, %v1810
      %v1902 = vmul.f32 %v1815, %v1815
      %v1903 = vmul.f32 %v1820, %v1820
      %v1904 = vmul.f32 %v1825, %v1825
      %v1905 = vmul.f32 %v1830, %v1830
      %v1906 = vmul.f32 %v1835, %v1835
      %v1907 = vmul.f32 %v1840, %v1840
      %v1908 = vmul.f32 %v1845, %v1845
      %v1909 = vmul.f32 %v1850, %v1850
      %v1910 = vmul.f32 %v1855, %v1855
      %v1911 = vmul.f32 %v1860, %v1860
      %v1912 = vmul.f32 %v1865, %v1865
      %v1913 = vmul.f32 %v1870, %v1870
      %v1914 = vmul.f32 %v1875, %v1875
      %v1915 = vadd.f32 %v1899, %v1900
      %v1916 = vadd.f32 %v1915, %v1901
      %v1917 = vadd.f32 %v1916, %v1902
      %v1918 = vadd.f32 %v1917, %v1903
      %v1919 = vadd.f32 %v1918, %v1904
      %v1920 = vadd.f32 %v1919, %v1905
      %v1921 = vadd.f32 %v1920, %v1906
      %v1922 = vadd.f32 %v1921, %v1907
      %v1923 = vadd.f32 %v1922, %v1908
      %v1924 = vadd.f32 %v1923, %v1909
      %v1925 = vadd.f32 %v1924, %v1910
      %v1926 = vadd.f32 %v1925, %v1911
      %v1927 = vadd.f32 %v1926, %v1912
      %v1928 = vadd.f32 %v1927, %v1913
      %v1929 = vadd.f32 %v1928, %v1914
      %v1930 = vrot.slane %v1929, 4
      %v1931 = vadd.f32 %v1929, %v1930
      %v1932 = vrot.slane %v1931, 2
      %v1933 = vadd.f32 %v1931, %v1932
      %v1934 = vrot.slane %v1933, 1
      %v1935 = vadd.f32 %v1933, %v1934
      %1936 = vst [vmem:[%s494] sm:$0x1] %v1898
      %1937 = vst [vmem:[%s494 + $0x1] sm:$0x1] %v1935
      %1938 = vst [vmem:[%s485] sm:$0xff] %v1800
      %1939 = vst [vmem:[%s485 + $0x8] sm:$0xff] %v1805
      %1940 = vst [vmem:[%s485 + $0x10] sm:$0xff] %v1810
      %1941 = vst [vmem:[%s485 + $0x18] sm:$0xff] %v1815
      %1942 = vst [vmem:[%s485 + $0x20] sm:$0xff] %v1820
      %1943 = vst [vmem:[%s485 + $0x28] sm:$0xff] %v1825
      %1944 = vst [vmem:[%s485 + $0x30] sm:$0xff] %v1830
      %1945 = vst [vmem:[%s485 + $0x38] sm:$0xff] %v1835
      %1946 = vst [vmem:[%s485 + $0x40] sm:$0xff] %v1840
      %1947 = vst [vmem:[%s485 + $0x48] sm:$0xff] %v1845
      %1948 = vst [vmem:[%s485 + $0x50] sm:$0xff] %v1850
      %1949 = vst [vmem:[%s485 + $0x58] sm:$0xff] %v1855
      %1950 = vst [vmem:[%s485 + $0x60] sm:$0xff] %v1860
      %1951 = vst [vmem:[%s485 + $0x68] sm:$0xff] %v1865
      %1952 = vst [vmem:[%s485 + $0x70] sm:$0xff] %v1870
      %1953 = vst [vmem:[%s485 + $0x78] sm:$0xff] %v1875
      %s1954 = smul.u32 8, %s25
      %p1955 = scmp.lt.s32.totalorder %s24, 1
      %s1956 = scalar_select %p1955, %s24, 1
      %p1957 = scmp.lt.s32.totalorder %s1954, 15
      %s1958 = scalar_select %p1957, %s1954, 15
      %s1959 = smul.addr %s1958, 2
      %s1960 = smul.addr %s1956, 32
      %s1961 = sadd.s32 %s1959, %s1960
      %s1962 = smul.addr %s1961, 8
      %s1963 = scalar_lea.vmem %s7, %s1962
      %p1964 = scmp.lt.s32.totalorder %s24, 1
      %s1965 = scalar_select %p1964, %s24, 1
      %p1966 = scmp.lt.s32.totalorder %s25, 1
      %s1967 = scalar_select %p1966, %s25, 1
      %s1968 = smul.addr %s1965, 2
      %s1969 = sadd.s32 %s1967, %s1968
      %s1970 = smul.addr %s1969, 2
      %s1971 = scalar_lea.vmem %s8, %s1970
      // Predicated region
      $region49: #{conv_block_forward.3} parent=47 // pred_check
        %p1972 = pneg %p236
      $region50: #{conv_block_forward.3} parent=47 // pred_check_branch
        %1974 = sbr.rel (%p1972) target = $region52
      $region51: #{conv_block_forward.3} parent=47 // pred_region
        %s1975 = smul.u32 8, %s25
      $region52: #{conv_block_forward.3} parent=47 // pred_fallthru
        _
      // Predicated region
      $region53: #{conv_block_forward.3} parent=47 // pred_check
        %p1976 = pneg %p264
      $region54: #{conv_block_forward.3} parent=47 // pred_check_branch
        %1978 = sbr.rel (%p1976) target = $region56
      $region55: #{conv_block_forward.3} parent=47 // pred_region
        _
      $region56: #{conv_block_forward.3} parent=47 // pred_fallthru
        _
    $region48: #{conv_block_forward.3} parent=5 // pred_fallthru
      _
    %p1979 = scmp.le.s32.totalorder 2, %s15
    // Predicated region
    $region57: #{conv_block_forward.3} parent=5 // pred_check
      %p1980 = pneg %p1979
    $region58: #{conv_block_forward.3} parent=5 // pred_check_branch
      %1982 = sbr.rel (%p1980) target = $region60
    $region59: #{conv_block_forward.3} parent=5 // pred_region
      %s1983 = ssub.s32 %s15, 2
      // Predicated region
      $region61: #{conv_block_forward.3} parent=59 // pred_check
        %p1984 = pneg %p242
      $region62: #{conv_block_forward.3} parent=59 // pred_check_branch
        %1986 = sbr.rel (%p1984) target = $region64
      $region63: #{conv_block_forward.3} parent=59 // pred_region
        %s1987 = smul.u32 8, %s27
        %p1988 = scmp.lt.s32.totalorder %s26, 1
        %s1989 = scalar_select %p1988, %s26, 1
        %p1990 = scmp.lt.s32.totalorder %s1987, 15
        %s1991 = scalar_select %p1990, %s1987, 15
        %s1992 = smul.addr %s1991, 2
        %s1993 = smul.addr %s1989, 32
        %s1994 = sadd.s32 %s1992, %s1993
        %s1995 = smul.addr %s1994, 8
        %s1996 = scalar_lea.vmem %s7, %s1995
      $region64: #{conv_block_forward.3} parent=59 // pred_fallthru
        _
      // Predicated region
      $region65: #{conv_block_forward.3} parent=59 // pred_check
        %p1997 = pneg %p270
      $region66: #{conv_block_forward.3} parent=59 // pred_check_branch
        %1999 = sbr.rel (%p1997) target = $region68
      $region67: #{conv_block_forward.3} parent=59 // pred_region
        %p2000 = scmp.lt.s32.totalorder %s26, 1
        %s2001 = scalar_select %p2000, %s26, 1
        %p2002 = scmp.lt.s32.totalorder %s27, 1
        %s2003 = scalar_select %p2002, %s27, 1
        %s2004 = smul.addr %s2001, 2
        %s2005 = sadd.s32 %s2003, %s2004
        %s2006 = smul.addr %s2005, 2
        %s2007 = scalar_lea.vmem %s8, %s2006
      $region68: #{conv_block_forward.3} parent=59 // pred_fallthru
        _
    $region60: #{conv_block_forward.3} parent=5 // pred_fallthru
      _
  $region6: #{conv_block_forward.3} parent=0 // loop_footer
    %s19 = sadd.s32 1, %s15
  $region7: #{conv_block_forward.3} parent=0 // loop_footer_branch
    %14 = sbr.rel target = $region3
  $region8: #{conv_block_forward.3} parent=0 // loop_exit
    _

// kernel: conv_block_forward.4
$region0: #{conv_block_forward.4}
  #allocation0 [shape = 'u32[]', space=smem, size = 0x4, offset = 0x4, fixed_abs, tag = 'smem constant byte address 0x4 - core index']
  #allocation1 [shape = 'u32[144,128]{1,0:T(1,128)}', space=vmem, size = 0x12000, scoped, tag = 'internal scratch']
  #allocation2 [shape = 'f32[10,18,128]{2,1,0:T(8,128)}', space=vmem, size = 0x1e000, scoped, tag = 'scratch operand']
  #allocation3 [shape = 'f32[128,1152]{1,0:T(8,128)}', space=vmem, size = 0x90000, scoped, tag = 'scratch operand']
  %s0 = inlined_call_operand.vmem [shape: f32[2,16,16,128], index: 0, kind: input, shape index: {}, may-alias: {0,1,2}]
  %s1 = inlined_call_operand.vmem [shape: f32[2,16,16,128], index: 1, kind: input, shape index: {}, may-alias: {0,1,2}]
  %s2 = inlined_call_operand.vmem [shape: f32[2,16,16,128], index: 2, kind: input, shape index: {}, may-alias: {0,1,2}]
  %s3 = inlined_call_operand.vmem [shape: f32[1152,128], index: 3, kind: input, shape index: {}]
  %s4 = inlined_call_operand.vmem [shape: f32[1,128], index: 4, kind: input, shape index: {}]
  %s5 = inlined_call_operand.vmem [shape: f32[1,128], index: 5, kind: input, shape index: {}]
  %s6 = inlined_call_operand.vmem [shape: f32[1,128], index: 6, kind: input, shape index: {}]
  %s7 = inlined_call_operand.vmem [shape: f32[2,16,16,128], index: 7, kind: output, shape index: {0}]
  %s8 = inlined_call_operand.vmem [shape: f32[2,2,2,128], index: 8, kind: output, shape index: {1}]
  %9 = xla_tuple %s7, %s8
  %s10 = sld [smem:[#allocation0]]
  $region69: #{conv_block_forward.4} parent=0
    _
  %s12 = ssub.s32 1, %s10
  %s13 = scalar_select 0, %s12, %s10
  loop: start=0, step=1, limit=6
  $region2: #{conv_block_forward.4} parent=0 // loop_pre_header
    _
  $region3: #{conv_block_forward.4} parent=0 // loop_header
    %s15 = sphi 0, %s19
    %p16 = scmp.ge.s32.totalorder %s15, 6
    %s22 = sphi 0, %s34
    %s23 = sphi 0, %s30
    %s24 = sphi 0, %s22
    %s25 = sphi 0, %s23
    %s26 = sphi 0, %s24
    %s27 = sphi 0, %s25
    %s39 = sphi 0, %s41
    %s42 = sphi 0, %s39
    %s43 = sphi 0, %s42
    %s59 = sphi 0, %s43
    %s75 = sphi 0, %s77
    %s78 = sphi 0, %s75
    %s79 = sphi 0, %s78
    %s95 = sphi 0, %s79
    %s111 = sphi 0, %s113
    %s114 = sphi 0, %s111
    %s115 = sphi 0, %s114
    %s131 = sphi 0, %s115
    %s135 = sphi 0, %s135
    %s137 = sphi 0, %s135
    %s138 = sphi 0, %s137
    %s152 = sphi 0, %s138
    %s156 = sphi 0, %s156
    %s158 = sphi 0, %s156
    %s159 = sphi 0, %s158
    %s173 = sphi 0, %s159
    %s177 = sphi 0, %s177
    %s179 = sphi 0, %s177
    %s180 = sphi 0, %s179
    %s194 = sphi 0, %s180
    %s198 = sphi 0, %s198
    %s200 = sphi 0, %s198
    %s201 = sphi 0, %s200
    %s215 = sphi 0, %s201
    %s223 = sphi 0, %s225
    %s226 = sphi 0, %s223
    %s227 = sphi 0, %s226
    %s243 = sphi 0, %s227
    %s251 = sphi 0, %s253
    %s254 = sphi 0, %s251
    %s255 = sphi 0, %s254
    %s271 = sphi 0, %s255
  $region4: #{conv_block_forward.4} parent=0 // loop_header_branch
    %18 = sbr.rel (%p16) target = $region8
  $region5: #{conv_block_forward.4} parent=0 // loop_body
    %s20 = ssub.s32 %s15, 1
    %s21 = ssub.s32 %s15, 2
    %s28 = sadd.s32 1, %s23
    %p29 = scmp.ge.s32.totalorder %s28, 2
    %s30 = scalar_select %p29, 0, %s28
    %s31 = sadd.s32 1, %s22
    %s32 = scalar_select %p29, %s31, %s22
    %p33 = scmp.ge.s32.totalorder %s32, 2
    %s34 = scalar_select %p33, 0, %s32
    %s35 = ssub.s32 %s22, %s34
    %s36 = ssub.s32 %s23, %s30
    %s37 = sor.u32 %s35, %s36
    %p38 = scmp.eq.s32.totalorder %s37, 0
    %s40 = sadd.s32 %s39, 1
    %s41 = scalar_select %p38, %s39, %s40
    %p44 = pneg %p38
    %p45 = scmp.eq.s32.totalorder %s15, 3
    %p46 = por %p44, %p45
    %p47 = scmp.ne.s32.totalorder %s39, %s42
    %p48 = scmp.eq.s32.totalorder %s15, 0
    %p49 = por %p47, %p48
    %p50 = scmp.ne.s32.totalorder %s39, %s42
    %p51 = scmp.eq.s32.totalorder %s20, 3
    %p52 = por %p50, %p51
    %p53 = scmp.ne.s32.totalorder %s42, %s43
    %p54 = scmp.eq.s32.totalorder %s20, 0
    %p55 = por %p53, %p54
    %p56 = scmp.ne.s32.totalorder %s42, %s43
    %p57 = scmp.eq.s32.totalorder %s21, 3
    %p58 = por %p56, %p57
    %p60 = scmp.ne.s32.totalorder %s43, %s59
    %p61 = scmp.eq.s32.totalorder %s21, 0
    %p62 = por %p60, %p61
    %s63 = smul.u32 %s23, 8
    %s64 = ssub.s32 %s63, 1
    %p65 = scmp.gt.s32.totalorder %s64, 0
    %s66 = scalar_select %p65, %s64, 0
    %s67 = smul.u32 %s30, 8
    %s68 = ssub.s32 %s67, 1
    %p69 = scmp.gt.s32.totalorder %s68, 0
    %s70 = scalar_select %p69, %s68, 0
    %s71 = ssub.s32 %s22, %s34
    %s72 = ssub.s32 %s66, %s70
    %s73 = sor.u32 %s71, %s72
    %p74 = scmp.eq.s32.totalorder %s73, 0
    %s76 = sadd.s32 %s75, 1
    %s77 = scalar_select %p74, %s75, %s76
    %p80 = pneg %p74
    %p81 = scmp.eq.s32.totalorder %s15, 3
    %p82 = por %p80, %p81
    %p83 = scmp.ne.s32.totalorder %s75, %s78
    %p84 = scmp.eq.s32.totalorder %s15, 0
    %p85 = por %p83, %p84
    %p86 = scmp.ne.s32.totalorder %s75, %s78
    %p87 = scmp.eq.s32.totalorder %s20, 3
    %p88 = por %p86, %p87
    %p89 = scmp.ne.s32.totalorder %s78, %s79
    %p90 = scmp.eq.s32.totalorder %s20, 0
    %p91 = por %p89, %p90
    %p92 = scmp.ne.s32.totalorder %s78, %s79
    %p93 = scmp.eq.s32.totalorder %s21, 3
    %p94 = por %p92, %p93
    %p96 = scmp.ne.s32.totalorder %s79, %s95
    %p97 = scmp.eq.s32.totalorder %s21, 0
    %p98 = por %p96, %p97
    %s99 = sadd.s32 %s23, 1
    %s100 = smul.u32 %s99, 8
    %p101 = scmp.lt.s32.totalorder %s100, 15
    %s102 = scalar_select %p101, %s100, 15
    %s103 = sadd.s32 %s30, 1
    %s104 = smul.u32 %s103, 8
    %p105 = scmp.lt.s32.totalorder %s104, 15
    %s106 = scalar_select %p105, %s104, 15
    %s107 = ssub.s32 %s22, %s34
    %s108 = ssub.s32 %s102, %s106
    %s109 = sor.u32 %s107, %s108
    %p110 = scmp.eq.s32.totalorder %s109, 0
    %s112 = sadd.s32 %s111, 1
    %s113 = scalar_select %p110, %s111, %s112
    %p116 = pneg %p110
    %p117 = scmp.eq.s32.totalorder %s15, 3
    %p118 = por %p116, %p117
    %p119 = scmp.ne.s32.totalorder %s111, %s114
    %p120 = scmp.eq.s32.totalorder %s15, 0
    %p121 = por %p119, %p120
    %p122 = scmp.ne.s32.totalorder %s111, %s114
    %p123 = scmp.eq.s32.totalorder %s20, 3
    %p124 = por %p122, %p123
    %p125 = scmp.ne.s32.totalorder %s114, %s115
    %p126 = scmp.eq.s32.totalorder %s20, 0
    %p127 = por %p125, %p126
    %p128 = scmp.ne.s32.totalorder %s114, %s115
    %p129 = scmp.eq.s32.totalorder %s21, 3
    %p130 = por %p128, %p129
    %p132 = scmp.ne.s32.totalorder %s115, %s131
    %p133 = scmp.eq.s32.totalorder %s21, 0
    %p134 = por %p132, %p133
    %s136 = sadd.s32 %s135, 1
    %p139 = scmp.eq.s32.totalorder %s15, 3
    %p140 = scmp.ne.s32.totalorder %s135, %s137
    %p141 = scmp.eq.s32.totalorder %s15, 0
    %p142 = por %p140, %p141
    %p143 = scmp.ne.s32.totalorder %s135, %s137
    %p144 = scmp.eq.s32.totalorder %s20, 3
    %p145 = por %p143, %p144
    %p146 = scmp.ne.s32.totalorder %s137, %s138
    %p147 = scmp.eq.s32.totalorder %s20, 0
    %p148 = por %p146, %p147
    %p149 = scmp.ne.s32.totalorder %s137, %s138
    %p150 = scmp.eq.s32.totalorder %s21, 3
    %p151 = por %p149, %p150
    %p153 = scmp.ne.s32.totalorder %s138, %s152
    %p154 = scmp.eq.s32.totalorder %s21, 0
    %p155 = por %p153, %p154
    %s157 = sadd.s32 %s156, 1
    %p160 = scmp.eq.s32.totalorder %s15, 3
    %p161 = scmp.ne.s32.totalorder %s156, %s158
    %p162 = scmp.eq.s32.totalorder %s15, 0
    %p163 = por %p161, %p162
    %p164 = scmp.ne.s32.totalorder %s156, %s158
    %p165 = scmp.eq.s32.totalorder %s20, 3
    %p166 = por %p164, %p165
    %p167 = scmp.ne.s32.totalorder %s158, %s159
    %p168 = scmp.eq.s32.totalorder %s20, 0
    %p169 = por %p167, %p168
    %p170 = scmp.ne.s32.totalorder %s158, %s159
    %p171 = scmp.eq.s32.totalorder %s21, 3
    %p172 = por %p170, %p171
    %p174 = scmp.ne.s32.totalorder %s159, %s173
    %p175 = scmp.eq.s32.totalorder %s21, 0
    %p176 = por %p174, %p175
    %s178 = sadd.s32 %s177, 1
    %p181 = scmp.eq.s32.totalorder %s15, 3
    %p182 = scmp.ne.s32.totalorder %s177, %s179
    %p183 = scmp.eq.s32.totalorder %s15, 0
    %p184 = por %p182, %p183
    %p185 = scmp.ne.s32.totalorder %s177, %s179
    %p186 = scmp.eq.s32.totalorder %s20, 3
    %p187 = por %p185, %p186
    %p188 = scmp.ne.s32.totalorder %s179, %s180
    %p189 = scmp.eq.s32.totalorder %s20, 0
    %p190 = por %p188, %p189
    %p191 = scmp.ne.s32.totalorder %s179, %s180
    %p192 = scmp.eq.s32.totalorder %s21, 3
    %p193 = por %p191, %p192
    %p195 = scmp.ne.s32.totalorder %s180, %s194
    %p196 = scmp.eq.s32.totalorder %s21, 0
    %p197 = por %p195, %p196
    %s199 = sadd.s32 %s198, 1
    %p202 = scmp.eq.s32.totalorder %s15, 3
    %p203 = scmp.ne.s32.totalorder %s198, %s200
    %p204 = scmp.eq.s32.totalorder %s15, 0
    %p205 = por %p203, %p204
    %p206 = scmp.ne.s32.totalorder %s198, %s200
    %p207 = scmp.eq.s32.totalorder %s20, 3
    %p208 = por %p206, %p207
    %p209 = scmp.ne.s32.totalorder %s200, %s201
    %p210 = scmp.eq.s32.totalorder %s20, 0
    %p211 = por %p209, %p210
    %p212 = scmp.ne.s32.totalorder %s200, %s201
    %p213 = scmp.eq.s32.totalorder %s21, 3
    %p214 = por %p212, %p213
    %p216 = scmp.ne.s32.totalorder %s201, %s215
    %p217 = scmp.eq.s32.totalorder %s21, 0
    %p218 = por %p216, %p217
    %s219 = ssub.s32 %s22, %s34
    %s220 = ssub.s32 %s23, %s30
    %s221 = sor.u32 %s219, %s220
    %p222 = scmp.eq.s32.totalorder %s221, 0
    %s224 = sadd.s32 %s223, 1
    %s225 = scalar_select %p222, %s223, %s224
    %p228 = pneg %p222
    %p229 = scmp.eq.s32.totalorder %s15, 3
    %p230 = por %p228, %p229
    %p231 = scmp.ne.s32.totalorder %s223, %s226
    %p232 = scmp.eq.s32.totalorder %s15, 0
    %p233 = por %p231, %p232
    %p234 = scmp.ne.s32.totalorder %s223, %s226
    %p235 = scmp.eq.s32.totalorder %s20, 3
    %p236 = por %p234, %p235
    %p237 = scmp.ne.s32.totalorder %s226, %s227
    %p238 = scmp.eq.s32.totalorder %s20, 0
    %p239 = por %p237, %p238
    %p240 = scmp.ne.s32.totalorder %s226, %s227
    %p241 = scmp.eq.s32.totalorder %s21, 3
    %p242 = por %p240, %p241
    %p244 = scmp.ne.s32.totalorder %s227, %s243
    %p245 = scmp.eq.s32.totalorder %s21, 0
    %p246 = por %p244, %p245
    %s247 = ssub.s32 %s22, %s34
    %s248 = ssub.s32 %s23, %s30
    %s249 = sor.u32 %s247, %s248
    %p250 = scmp.eq.s32.totalorder %s249, 0
    %s252 = sadd.s32 %s251, 1
    %s253 = scalar_select %p250, %s251, %s252
    %p256 = pneg %p250
    %p257 = scmp.eq.s32.totalorder %s15, 3
    %p258 = por %p256, %p257
    %p259 = scmp.ne.s32.totalorder %s251, %s254
    %p260 = scmp.eq.s32.totalorder %s15, 0
    %p261 = por %p259, %p260
    %p262 = scmp.ne.s32.totalorder %s251, %s254
    %p263 = scmp.eq.s32.totalorder %s20, 3
    %p264 = por %p262, %p263
    %p265 = scmp.ne.s32.totalorder %s254, %s255
    %p266 = scmp.eq.s32.totalorder %s20, 0
    %p267 = por %p265, %p266
    %p268 = scmp.ne.s32.totalorder %s254, %s255
    %p269 = scmp.eq.s32.totalorder %s21, 3
    %p270 = por %p268, %p269
    %p272 = scmp.ne.s32.totalorder %s255, %s271
    %p273 = scmp.eq.s32.totalorder %s21, 0
    %p274 = por %p272, %p273
    %p275 = scmp.le.s32.totalorder 1, %s15
    %p276 = scmp.lt.s32.totalorder %s15, 5
    %p277 = pnand %p275, %p276
    %p278 = pneg %p277
    // Predicated region
    $region9: #{conv_block_forward.4} parent=5 // pred_check
      _
    $region10: #{conv_block_forward.4} parent=5 // pred_check_branch
      %280 = sbr.rel (%p277) target = $region12
    $region11: #{conv_block_forward.4} parent=5 // pred_region
      %s281 = ssub.s32 %s15, 1
      // Predicated region
      $region13: #{conv_block_forward.4} parent=11 // pred_check
        %p282 = pneg %p148
      $region14: #{conv_block_forward.4} parent=11 // pred_check_branch
        %284 = sbr.rel (%p282) target = $region16
      $region15: #{conv_block_forward.4} parent=11 // pred_region
        _
      $region16: #{conv_block_forward.4} parent=11 // pred_fallthru
        _
      // Predicated region
      $region17: #{conv_block_forward.4} parent=11 // pred_check
        %p285 = pneg %p169
      $region18: #{conv_block_forward.4} parent=11 // pred_check_branch
        %287 = sbr.rel (%p285) target = $region20
      $region19: #{conv_block_forward.4} parent=11 // pred_region
        _
      $region20: #{conv_block_forward.4} parent=11 // pred_fallthru
        _
      // Predicated region
      $region21: #{conv_block_forward.4} parent=11 // pred_check
        %p288 = pneg %p190
      $region22: #{conv_block_forward.4} parent=11 // pred_check_branch
        %290 = sbr.rel (%p288) target = $region24
      $region23: #{conv_block_forward.4} parent=11 // pred_region
        _
      $region24: #{conv_block_forward.4} parent=11 // pred_fallthru
        _
      // Predicated region
      $region25: #{conv_block_forward.4} parent=11 // pred_check
        %p291 = pneg %p211
      $region26: #{conv_block_forward.4} parent=11 // pred_check_branch
        %293 = sbr.rel (%p291) target = $region28
      $region27: #{conv_block_forward.4} parent=11 // pred_region
        _
      $region28: #{conv_block_forward.4} parent=11 // pred_fallthru
        _
    $region12: #{conv_block_forward.4} parent=5 // pred_fallthru
      _
    %p294 = scmp.lt.s32.totalorder %s15, 4
    // Predicated region
    $region29: #{conv_block_forward.4} parent=5 // pred_check
      %p295 = pneg %p294
    $region30: #{conv_block_forward.4} parent=5 // pred_check_branch
      %297 = sbr.rel (%p295) target = $region32
    $region31: #{conv_block_forward.4} parent=5 // pred_region
      // Predicated region
      $region33: #{conv_block_forward.4} parent=31 // pred_check
        %p298 = pneg %p49
      $region34: #{conv_block_forward.4} parent=31 // pred_check_branch
        %300 = sbr.rel (%p298) target = $region36
      $region35: #{conv_block_forward.4} parent=31 // pred_region
        %s301 = smul.u32 8, %s23
        %p302 = scmp.lt.s32.totalorder %s22, 1
        %s303 = scalar_select %p302, %s22, 1
        %p304 = scmp.lt.s32.totalorder %s301, 15
        %s305 = scalar_select %p304, %s301, 15
        %s306 = smul.addr %s305, 2
        %s307 = smul.addr %s303, 32
        %s308 = sadd.s32 %s306, %s307
        %s309 = smul.addr %s308, 8
        %s310 = scalar_lea.vmem %s0, %s309
        %s311 = smul.u32 8, %s23
      $region36: #{conv_block_forward.4} parent=31 // pred_fallthru
        _
      // Predicated region
      $region37: #{conv_block_forward.4} parent=31 // pred_check
        %p312 = pneg %p85
      $region38: #{conv_block_forward.4} parent=31 // pred_check_branch
        %314 = sbr.rel (%p312) target = $region40
      $region39: #{conv_block_forward.4} parent=31 // pred_region
        %s315 = smul.u32 %s23, 8
        %s316 = ssub.s32 %s315, 1
        %p317 = scmp.gt.s32.totalorder %s316, 0
        %s318 = scalar_select %p317, %s316, 0
        %p319 = scmp.lt.s32.totalorder %s22, 1
        %s320 = scalar_select %p319, %s22, 1
        %p321 = scmp.lt.s32.totalorder %s318, 15
        %s322 = scalar_select %p321, %s318, 15
        %s323 = smul.addr %s322, 2
        %s324 = smul.addr %s320, 32
        %s325 = sadd.s32 %s323, %s324
        %s326 = smul.addr %s325, 8
        %s327 = scalar_lea.vmem %s1, %s326
        %s328 = smul.u32 %s23, 8
        %s329 = ssub.s32 %s328, 1
        %p330 = scmp.gt.s32.totalorder %s329, 0
        %s331 = scalar_select %p330, %s329, 0
      $region40: #{conv_block_forward.4} parent=31 // pred_fallthru
        _
      // Predicated region
      $region41: #{conv_block_forward.4} parent=31 // pred_check
        %p332 = pneg %p121
      $region42: #{conv_block_forward.4} parent=31 // pred_check_branch
        %334 = sbr.rel (%p332) target = $region44
      $region43: #{conv_block_forward.4} parent=31 // pred_region
        %s335 = sadd.s32 %s23, 1
        %s336 = smul.u32 %s335, 8
        %p337 = scmp.lt.s32.totalorder %s336, 15
        %s338 = scalar_select %p337, %s336, 15
        %p339 = scmp.lt.s32.totalorder %s22, 1
        %s340 = scalar_select %p339, %s22, 1
        %p341 = scmp.lt.s32.totalorder %s338, 15
        %s342 = scalar_select %p341, %s338, 15
        %s343 = smul.addr %s342, 2
        %s344 = smul.addr %s340, 32
        %s345 = sadd.s32 %s343, %s344
        %s346 = smul.addr %s345, 8
        %s347 = scalar_lea.vmem %s2, %s346
        %s348 = sadd.s32 %s23, 1
        %s349 = smul.u32 %s348, 8
        %p350 = scmp.lt.s32.totalorder %s349, 15
        %s351 = scalar_select %p350, %s349, 15
      $region44: #{conv_block_forward.4} parent=31 // pred_fallthru
        _
    $region32: #{conv_block_forward.4} parent=5 // pred_fallthru
      _
    %p352 = scmp.le.s32.totalorder 1, %s15
    %p353 = scmp.lt.s32.totalorder %s15, 5
    %p354 = pnand %p352, %p353
    %p355 = pneg %p354
    // Predicated region
    $region45: #{conv_block_forward.4} parent=5 // pred_check
      _
    $region46: #{conv_block_forward.4} parent=5 // pred_check_branch
      %357 = sbr.rel (%p354) target = $region48
    $region47: #{conv_block_forward.4} parent=5 // pred_region
      %s358 = ssub.s32 %s15, 1
      %s359 = smul.u32 8, %s25
      %p360 = scmp.lt.s32.totalorder %s24, 1
      %s361 = scalar_select %p360, %s24, 1
      %p362 = scmp.lt.s32.totalorder %s359, 15
      %s363 = scalar_select %p362, %s359, 15
      %s364 = smul.addr %s363, 2
      %s365 = smul.addr %s361, 32
      %s366 = sadd.s32 %s364, %s365
      %s367 = smul.addr %s366, 8
      %s368 = scalar_lea.vmem %s0, %s367
      %p369 = pneg %p55
      %p370 = pneg %p52
      %s371 = smul.u32 %s25, 8
      %s372 = ssub.s32 %s371, 1
      %p373 = scmp.gt.s32.totalorder %s372, 0
      %s374 = scalar_select %p373, %s372, 0
      %p375 = scmp.lt.s32.totalorder %s24, 1
      %s376 = scalar_select %p375, %s24, 1
      %p377 = scmp.lt.s32.totalorder %s374, 15
      %s378 = scalar_select %p377, %s374, 15
      %s379 = smul.addr %s378, 2
      %s380 = smul.addr %s376, 32
      %s381 = sadd.s32 %s379, %s380
      %s382 = smul.addr %s381, 8
      %s383 = scalar_lea.vmem %s1, %s382
      %p384 = pneg %p91
      %p385 = pneg %p88
      %s386 = sadd.s32 %s25, 1
      %s387 = smul.u32 %s386, 8
      %p388 = scmp.lt.s32.totalorder %s387, 15
      %s389 = scalar_select %p388, %s387, 15
      %p390 = scmp.lt.s32.totalorder %s24, 1
      %s391 = scalar_select %p390, %s24, 1
      %p392 = scmp.lt.s32.totalorder %s389, 15
      %s393 = scalar_select %p392, %s389, 15
      %s394 = smul.addr %s393, 2
      %s395 = smul.addr %s391, 32
      %s396 = sadd.s32 %s394, %s395
      %s397 = smul.addr %s396, 8
      %s398 = scalar_lea.vmem %s2, %s397
      %p399 = pneg %p127
      %p400 = pneg %p124
      %p401 = pneg %p148
      %p402 = pneg %p145
      %p403 = pneg %p169
      %p404 = pneg %p166
      %p405 = pneg %p190
      %p406 = pneg %p187
      %p407 = pneg %p211
      %p408 = pneg %p208
      %p409 = pneg %p239
      %p410 = pneg %p236
      %s411 = smul.u32 8, %s25
      %p412 = scmp.lt.s32.totalorder %s24, 1
      %s413 = scalar_select %p412, %s24, 1
      %p414 = scmp.lt.s32.totalorder %s411, 15
      %s415 = scalar_select %p414, %s411, 15
      %s416 = smul.addr %s415, 2
      %s417 = smul.addr %s413, 32
      %s418 = sadd.s32 %s416, %s417
      %s419 = smul.addr %s418, 8
      %s420 = scalar_lea.vmem %s7, %s419
      %p421 = pneg %p267
      %p422 = pneg %p264
      %p423 = scmp.lt.s32.totalorder %s24, 1
      %s424 = scalar_select %p423, %s24, 1
      %p425 = scmp.lt.s32.totalorder %s25, 1
      %s426 = scalar_select %p425, %s25, 1
      %s427 = smul.addr %s424, 2
      %s428 = sadd.s32 %s426, %s427
      %s429 = smul.addr %s428, 2
      %s430 = scalar_lea.vmem %s8, %s429
      %s431 = smul.u32 8, %s25
      %p432 = scmp.lt.s32.totalorder %s24, 1
      %s433 = scalar_select %p432, %s24, 1
      %p434 = scmp.lt.s32.totalorder %s431, 15
      %s435 = scalar_select %p434, %s431, 15
      %s436 = smul.addr %s435, 2
      %s437 = smul.addr %s433, 32
      %s438 = sadd.s32 %s436, %s437
      %s439 = smul.addr %s438, 8
      %s440 = scalar_lea.vmem %s0, %s439
      %s441 = smul.u32 8, %s25
      %s442 = smul.u32 %s25, 8
      %s443 = ssub.s32 %s442, 1
      %p444 = scmp.gt.s32.totalorder %s443, 0
      %s445 = scalar_select %p444, %s443, 0
      %p446 = scmp.lt.s32.totalorder %s24, 1
      %s447 = scalar_select %p446, %s24, 1
      %p448 = scmp.lt.s32.totalorder %s445, 15
      %s449 = scalar_select %p448, %s445, 15
      %s450 = smul.addr %s449, 2
      %s451 = smul.addr %s447, 32
      %s452 = sadd.s32 %s450, %s451
      %s453 = smul.addr %s452, 8
      %s454 = scalar_lea.vmem %s1, %s453
      %s455 = smul.u32 %s25, 8
      %s456 = ssub.s32 %s455, 1
      %p457 = scmp.gt.s32.totalorder %s456, 0
      %s458 = scalar_select %p457, %s456, 0
      %s459 = sadd.s32 %s25, 1
      %s460 = smul.u32 %s459, 8
      %p461 = scmp.lt.s32.totalorder %s460, 15
      %s462 = scalar_select %p461, %s460, 15
      %p463 = scmp.lt.s32.totalorder %s24, 1
      %s464 = scalar_select %p463, %s24, 1
      %p465 = scmp.lt.s32.totalorder %s462, 15
      %s466 = scalar_select %p465, %s462, 15
      %s467 = smul.addr %s466, 2
      %s468 = smul.addr %s464, 32
      %s469 = sadd.s32 %s467, %s468
      %s470 = smul.addr %s469, 8
      %s471 = scalar_lea.vmem %s2, %s470
      %s472 = sadd.s32 %s25, 1
      %s473 = smul.u32 %s472, 8
      %p474 = scmp.lt.s32.totalorder %s473, 15
      %s475 = scalar_select %p474, %s473, 15
      %s476 = smul.u32 8, %s25
      %p477 = scmp.lt.s32.totalorder %s24, 1
      %s478 = scalar_select %p477, %s24, 1
      %p479 = scmp.lt.s32.totalorder %s476, 15
      %s480 = scalar_select %p479, %s476, 15
      %s481 = smul.addr %s480, 2
      %s482 = smul.addr %s478, 32
      %s483 = sadd.s32 %s481, %s482
      %s484 = smul.addr %s483, 8
      %s485 = scalar_lea.vmem %s7, %s484
      %s486 = smul.u32 8, %s25
      %p487 = scmp.lt.s32.totalorder %s24, 1
      %s488 = scalar_select %p487, %s24, 1
      %p489 = scmp.lt.s32.totalorder %s25, 1
      %s490 = scalar_select %p489, %s25, 1
      %s491 = smul.addr %s488, 2
      %s492 = sadd.s32 %s490, %s491
      %s493 = smul.addr %s492, 2
      %s494 = scalar_lea.vmem %s8, %s493
      %495 = vst [vmem:[#allocation2] sm:$0x1] 0.0
      %496 = vst [vmem:[#allocation2 + $0x18] sm:$0x1] 0.0
      %497 = vst [vmem:[#allocation2 + $0x30] sm:$0x1] 0.0
      %498 = vst [vmem:[#allocation2 + $0x48] sm:$0x1] 0.0
      %499 = vst [vmem:[#allocation2 + $0x60] sm:$0x1] 0.0
      %500 = vst [vmem:[#allocation2 + $0x78] sm:$0x1] 0.0
      %501 = vst [vmem:[#allocation2 + $0x90] sm:$0x1] 0.0
      %502 = vst [vmem:[#allocation2 + $0xa8] sm:$0x1] 0.0
      %503 = vst [vmem:[#allocation2 + $0xc0] sm:$0x1] 0.0
      %504 = vst [vmem:[#allocation2 + $0xd8] sm:$0x1] 0.0
      %505 = vst [vmem:[#allocation2 + $0x11] sm:$0x1] 0.0
      %506 = vst [vmem:[#allocation2 + $0x29] sm:$0x1] 0.0
      %507 = vst [vmem:[#allocation2 + $0x41] sm:$0x1] 0.0
      %508 = vst [vmem:[#allocation2 + $0x59] sm:$0x1] 0.0
      %509 = vst [vmem:[#allocation2 + $0x71] sm:$0x1] 0.0
      %510 = vst [vmem:[#allocation2 + $0x89] sm:$0x1] 0.0
      %511 = vst [vmem:[#allocation2 + $0xa1] sm:$0x1] 0.0
      %512 = vst [vmem:[#allocation2 + $0xb9] sm:$0x1] 0.0
      %513 = vst [vmem:[#allocation2 + $0xd1] sm:$0x1] 0.0
      %514 = vst [vmem:[#allocation2 + $0xe9] sm:$0x1] 0.0
      %v515 = vld [vmem:[%s440] sm:$0xff]
      %v516 = vld [vmem:[%s440 + $0x8] sm:$0xff]
      %v517 = vld [vmem:[%s440 + $0x10] sm:$0xff]
      %v518 = vld [vmem:[%s440 + $0x18] sm:$0xff]
      %v519 = vld [vmem:[%s440 + $0x20] sm:$0xff]
      %v520 = vld [vmem:[%s440 + $0x28] sm:$0xff]
      %v521 = vld [vmem:[%s440 + $0x30] sm:$0xff]
      %v522 = vld [vmem:[%s440 + $0x38] sm:$0xff]
      %v523 = vld [vmem:[%s440 + $0x40] sm:$0xff]
      %v524 = vld [vmem:[%s440 + $0x48] sm:$0xff]
      %v525 = vld [vmem:[%s440 + $0x50] sm:$0xff]
      %v526 = vld [vmem:[%s440 + $0x58] sm:$0xff]
      %v527 = vld [vmem:[%s440 + $0x60] sm:$0xff]
      %v528 = vld [vmem:[%s440 + $0x68] sm:$0xff]
      %v529 = vld [vmem:[%s440 + $0x70] sm:$0xff]
      %v530 = vld [vmem:[%s440 + $0x78] sm:$0xff]
      %v531 = vld [vmem:[%s5] sm:$0x1]
      %v533 = vlaneseq
      %v534 = vshrl.u32 %v533, 7
      %v535 = vsub.s32 0, %v534
      %v536 = vrot.slane %v531, %v535
      %v538 = vmul.f32 %v515, %v536
      %v539 = vmul.f32 %v516, %v536
      %v540 = vmul.f32 %v517, %v536
      %v541 = vmul.f32 %v518, %v536
      %v542 = vmul.f32 %v519, %v536
      %v543 = vmul.f32 %v520, %v536
      %v544 = vmul.f32 %v521, %v536
      %v545 = vmul.f32 %v522, %v536
      %v546 = vmul.f32 %v523, %v536
      %v547 = vmul.f32 %v524, %v536
      %v548 = vmul.f32 %v525, %v536
      %v549 = vmul.f32 %v526, %v536
      %v550 = vmul.f32 %v527, %v536
      %v551 = vmul.f32 %v528, %v536
      %v552 = vmul.f32 %v529, %v536
      %v553 = vmul.f32 %v530, %v536
      %v554 = vld [vmem:[%s6] sm:$0x1]
      %v556 = vlaneseq
      %v557 = vshrl.u32 %v556, 7
      %v558 = vsub.s32 0, %v557
      %v559 = vrot.slane %v554, %v558
      %v561 = vadd.f32 %v538, %v559
      %v562 = vadd.f32 %v539, %v559
      %v563 = vadd.f32 %v540, %v559
      %v564 = vadd.f32 %v541, %v559
      %v565 = vadd.f32 %v542, %v559
      %v566 = vadd.f32 %v543, %v559
      %v567 = vadd.f32 %v544, %v559
      %v568 = vadd.f32 %v545, %v559
      %v569 = vadd.f32 %v546, %v559
      %v570 = vadd.f32 %v547, %v559
      %v571 = vadd.f32 %v548, %v559
      %v572 = vadd.f32 %v549, %v559
      %v573 = vadd.f32 %v550, %v559
      %v574 = vadd.f32 %v551, %v559
      %v575 = vadd.f32 %v552, %v559
      %v576 = vadd.f32 %v553, %v559
      %v577 = vmax.f32 %v561, 0.0
      %v578 = vmax.f32 %v562, 0.0
      %v579 = vmax.f32 %v563, 0.0
      %v580 = vmax.f32 %v564, 0.0
      %v581 = vmax.f32 %v565, 0.0
      %v582 = vmax.f32 %v566, 0.0
      %v583 = vmax.f32 %v567, 0.0
      %v584 = vmax.f32 %v568, 0.0
      %v585 = vmax.f32 %v569, 0.0
      %v586 = vmax.f32 %v570, 0.0
      %v587 = vmax.f32 %v571, 0.0
      %v588 = vmax.f32 %v572, 0.0
      %v589 = vmax.f32 %v573, 0.0
      %v590 = vmax.f32 %v574, 0.0
      %v591 = vmax.f32 %v575, 0.0
      %v592 = vmax.f32 %v576, 0.0
      %s593 = scalar_lea.vmem [#allocation2], 24
      %594 = vst [vmem:[%s593 + $0x1] sm:$0xff] %v577
      %595 = vst [vmem:[%s593 + $0x9] sm:$0xff] %v578
      %596 = vst [vmem:[%s593 + $0x19] sm:$0xff] %v579
      %597 = vst [vmem:[%s593 + $0x21] sm:$0xff] %v580
      %598 = vst [vmem:[%s593 + $0x31] sm:$0xff] %v581
      %599 = vst [vmem:[%s593 + $0x39] sm:$0xff] %v582
      %600 = vst [vmem:[%s593 + $0x49] sm:$0xff] %v583
      %601 = vst [vmem:[%s593 + $0x51] sm:$0xff] %v584
      %602 = vst [vmem:[%s593 + $0x61] sm:$0xff] %v585
      %603 = vst [vmem:[%s593 + $0x69] sm:$0xff] %v586
      %604 = vst [vmem:[%s593 + $0x79] sm:$0xff] %v587
      %605 = vst [vmem:[%s593 + $0x81] sm:$0xff] %v588
      %606 = vst [vmem:[%s593 + $0x91] sm:$0xff] %v589
      %607 = vst [vmem:[%s593 + $0x99] sm:$0xff] %v590
      %608 = vst [vmem:[%s593 + $0xa9] sm:$0xff] %v591
      %609 = vst [vmem:[%s593 + $0xb1] sm:$0xff] %v592
      %p610 = scmp.gt.s32.totalorder %s25, 0
      %v611 = vld [vmem:[%s454] sm:$0xff]
      %v612 = vld [vmem:[%s454 + $0x8] sm:$0xff]
      %v613 = vld [vmem:[%s5] sm:$0x1]
      %v615 = vlaneseq
      %v616 = vshrl.u32 %v615, 7
      %v617 = vsub.s32 0, %v616
      %v618 = vrot.slane %v613, %v617
      %v620 = vmul.f32 %v611, %v618
      %v621 = vmul.f32 %v612, %v618
      %v622 = vld [vmem:[%s6] sm:$0x1]
      %v624 = vlaneseq
      %v625 = vshrl.u32 %v624, 7
      %v626 = vsub.s32 0, %v625
      %v627 = vrot.slane %v622, %v626
      %v629 = vadd.f32 %v620, %v627
      %v630 = vadd.f32 %v621, %v627
      %v631 = vmax.f32 %v629, 0.0
      %v632 = vmax.f32 %v630, 0.0
      %s633 = scalar_select %p610, 1, 0
      %v634 = vstv %s633
      %vm635 = vcmp.eq.s32.totalorder %v634, 1
      %v636 = vsel %vm635, %v631, 0.0
      %v637 = vsel %vm635, %v632, 0.0
      %638 = vst [vmem:[#allocation2 + $0x1] sm:$0xff] %v636
      %639 = vst [vmem:[#allocation2 + $0x9] sm:$0xff] %v637
      %p640 = scmp.lt.s32.totalorder %s25, 1
      %v641 = vld [vmem:[%s471] sm:$0xff]
      %v642 = vld [vmem:[%s471 + $0x8] sm:$0xff]
      %v643 = vld [vmem:[%s5] sm:$0x1]
      %v645 = vlaneseq
      %v646 = vshrl.u32 %v645, 7
      %v647 = vsub.s32 0, %v646
      %v648 = vrot.slane %v643, %v647
      %v650 = vmul.f32 %v641, %v648
      %v651 = vmul.f32 %v642, %v648
      %v652 = vld [vmem:[%s6] sm:$0x1]
      %v654 = vlaneseq
      %v655 = vshrl.u32 %v654, 7
      %v656 = vsub.s32 0, %v655
      %v657 = vrot.slane %v652, %v656
      %v659 = vadd.f32 %v650, %v657
      %v660 = vadd.f32 %v651, %v657
      %v661 = vmax.f32 %v659, 0.0
      %v662 = vmax.f32 %v660, 0.0
      %s663 = scalar_select %p640, 1, 0
      %v664 = vstv %s663
      %vm665 = vcmp.eq.s32.totalorder %v664, 1
      %v666 = vsel %vm665, %v661, 0.0
      %v667 = vsel %vm665, %v662, 0.0
      %s668 = scalar_lea.vmem [#allocation2], 216
      %669 = vst [vmem:[%s668 + $0x1] sm:$0xff] %v666
      %670 = vst [vmem:[%s668 + $0x9] sm:$0xff] %v667
      %v671 = vld [vmem:[#allocation2] sm:$0xff]
      %v672 = vld [vmem:[#allocation2 + $0x8] sm:$0xff]
      %v673 = vld [vmem:[#allocation2 + $0x18] sm:$0xff]
      %v674 = vld [vmem:[#allocation2 + $0x20] sm:$0xff]
      %v675 = vld [vmem:[#allocation2 + $0x30] sm:$0xff]
      %v676 = vld [vmem:[#allocation2 + $0x38] sm:$0xff]
      %v677 = vld [vmem:[#allocation2 + $0x48] sm:$0xff]
      %v678 = vld [vmem:[#allocation2 + $0x50] sm:$0xff]
      %v679 = vld [vmem:[#allocation2 + $0x60] sm:$0xff]
      %v680 = vld [vmem:[#allocation2 + $0x68] sm:$0xff]
      %v681 = vld [vmem:[#allocation2 + $0x78] sm:$0xff]
      %v682 = vld [vmem:[#allocation2 + $0x80] sm:$0xff]
      %v683 = vld [vmem:[#allocation2 + $0x90] sm:$0xff]
      %v684 = vld [vmem:[#allocation2 + $0x98] sm:$0xff]
      %v685 = vld [vmem:[#allocation2 + $0xa8] sm:$0xff]
      %v686 = vld [vmem:[#allocation2 + $0xb0] sm:$0xff]
      %687 = vst [vmem:[#allocation3] sm:$0xff] %v671
      %688 = vst [vmem:[#allocation3 + $0x48] sm:$0xff] %v672
      %689 = vst [vmem:[#allocation3 + $0x90] sm:$0xff] %v673
      %690 = vst [vmem:[#allocation3 + $0xd8] sm:$0xff] %v674
      %691 = vst [vmem:[#allocation3 + $0x120] sm:$0xff] %v675
      %692 = vst [vmem:[#allocation3 + $0x168] sm:$0xff] %v676
      %693 = vst [vmem:[#allocation3 + $0x1b0] sm:$0xff] %v677
      %694 = vst [vmem:[#allocation3 + $0x1f8] sm:$0xff] %v678
      %695 = vst [vmem:[#allocation3 + $0x240] sm:$0xff] %v679
      %696 = vst [vmem:[#allocation3 + $0x288] sm:$0xff] %v680
      %697 = vst [vmem:[#allocation3 + $0x2d0] sm:$0xff] %v681
      %698 = vst [vmem:[#allocation3 + $0x318] sm:$0xff] %v682
      %699 = vst [vmem:[#allocation3 + $0x360] sm:$0xff] %v683
      %700 = vst [vmem:[#allocation3 + $0x3a8] sm:$0xff] %v684
      %701 = vst [vmem:[#allocation3 + $0x3f0] sm:$0xff] %v685
      %702 = vst [vmem:[#allocation3 + $0x438] sm:$0xff] %v686
      %v703 = vld [vmem:[#allocation2 + $0x1] sm:$0xff]
      %v704 = vld [vmem:[#allocation2 + $0x9] sm:$0xff]
      %v705 = vld [vmem:[#allocation2 + $0x19] sm:$0xff]
      %v706 = vld [vmem:[#allocation2 + $0x21] sm:$0xff]
      %v707 = vld [vmem:[#allocation2 + $0x31] sm:$0xff]
      %v708 = vld [vmem:[#allocation2 + $0x39] sm:$0xff]
      %v709 = vld [vmem:[#allocation2 + $0x49] sm:$0xff]
      %v710 = vld [vmem:[#allocation2 + $0x51] sm:$0xff]
      %v711 = vld [vmem:[#allocation2 + $0x61] sm:$0xff]
      %v712 = vld [vmem:[#allocation2 + $0x69] sm:$0xff]
      %v713 = vld [vmem:[#allocation2 + $0x79] sm:$0xff]
      %v714 = vld [vmem:[#allocation2 + $0x81] sm:$0xff]
      %v715 = vld [vmem:[#allocation2 + $0x91] sm:$0xff]
      %v716 = vld [vmem:[#allocation2 + $0x99] sm:$0xff]
      %v717 = vld [vmem:[#allocation2 + $0xa9] sm:$0xff]
      %v718 = vld [vmem:[#allocation2 + $0xb1] sm:$0xff]
      %719 = vst [vmem:[#allocation3 + $0x8] sm:$0xff] %v703
      %720 = vst [vmem:[#allocation3 + $0x50] sm:$0xff] %v704
      %721 = vst [vmem:[#allocation3 + $0x98] sm:$0xff] %v705
      %722 = vst [vmem:[#allocation3 + $0xe0] sm:$0xff] %v706
      %723 = vst [vmem:[#allocation3 + $0x128] sm:$0xff] %v707
      %724 = vst [vmem:[#allocation3 + $0x170] sm:$0xff] %v708
      %725 = vst [vmem:[#allocation3 + $0x1b8] sm:$0xff] %v709
      %726 = vst [vmem:[#allocation3 + $0x200] sm:$0xff] %v710
      %727 = vst [vmem:[#allocation3 + $0x248] sm:$0xff] %v711
      %728 = vst [vmem:[#allocation3 + $0x290] sm:$0xff] %v712
      %729 = vst [vmem:[#allocation3 + $0x2d8] sm:$0xff] %v713
      %730 = vst [vmem:[#allocation3 + $0x320] sm:$0xff] %v714
      %731 = vst [vmem:[#allocation3 + $0x368] sm:$0xff] %v715
      %732 = vst [vmem:[#allocation3 + $0x3b0] sm:$0xff] %v716
      %733 = vst [vmem:[#allocation3 + $0x3f8] sm:$0xff] %v717
      %734 = vst [vmem:[#allocation3 + $0x440] sm:$0xff] %v718
      %v735 = vld [vmem:[#allocation2 + $0x2] sm:$0xff]
      %v736 = vld [vmem:[#allocation2 + $0xa] sm:$0xff]
      %v737 = vld [vmem:[#allocation2 + $0x1a] sm:$0xff]
      %v738 = vld [vmem:[#allocation2 + $0x22] sm:$0xff]
      %v739 = vld [vmem:[#allocation2 + $0x32] sm:$0xff]
      %v740 = vld [vmem:[#allocation2 + $0x3a] sm:$0xff]
      %v741 = vld [vmem:[#allocation2 + $0x4a] sm:$0xff]
      %v742 = vld [vmem:[#allocation2 + $0x52] sm:$0xff]
      %v743 = vld [vmem:[#allocation2 + $0x62] sm:$0xff]
      %v744 = vld [vmem:[#allocation2 + $0x6a] sm:$0xff]
      %v745 = vld [vmem:[#allocation2 + $0x7a] sm:$0xff]
      %v746 = vld [vmem:[#allocation2 + $0x82] sm:$0xff]
      %v747 = vld [vmem:[#allocation2 + $0x92] sm:$0xff]
      %v748 = vld [vmem:[#allocation2 + $0x9a] sm:$0xff]
      %v749 = vld [vmem:[#allocation2 + $0xaa] sm:$0xff]
      %v750 = vld [vmem:[#allocation2 + $0xb2] sm:$0xff]
      %751 = vst [vmem:[#allocation3 + $0x10] sm:$0xff] %v735
      %752 = vst [vmem:[#allocation3 + $0x58] sm:$0xff] %v736
      %753 = vst [vmem:[#allocation3 + $0xa0] sm:$0xff] %v737
      %754 = vst [vmem:[#allocation3 + $0xe8] sm:$0xff] %v738
      %755 = vst [vmem:[#allocation3 + $0x130] sm:$0xff] %v739
      %756 = vst [vmem:[#allocation3 + $0x178] sm:$0xff] %v740
      %757 = vst [vmem:[#allocation3 + $0x1c0] sm:$0xff] %v741
      %758 = vst [vmem:[#allocation3 + $0x208] sm:$0xff] %v742
      %759 = vst [vmem:[#allocation3 + $0x250] sm:$0xff] %v743
      %760 = vst [vmem:[#allocation3 + $0x298] sm:$0xff] %v744
      %761 = vst [vmem:[#allocation3 + $0x2e0] sm:$0xff] %v745
      %762 = vst [vmem:[#allocation3 + $0x328] sm:$0xff] %v746
      %763 = vst [vmem:[#allocation3 + $0x370] sm:$0xff] %v747
      %764 = vst [vmem:[#allocation3 + $0x3b8] sm:$0xff] %v748
      %765 = vst [vmem:[#allocation3 + $0x400] sm:$0xff] %v749
      %766 = vst [vmem:[#allocation3 + $0x448] sm:$0xff] %v750
      %v767 = vld [vmem:[%s593] sm:$0xff]
      %v768 = vld [vmem:[%s593 + $0x8] sm:$0xff]
      %v769 = vld [vmem:[%s593 + $0x18] sm:$0xff]
      %v770 = vld [vmem:[%s593 + $0x20] sm:$0xff]
      %v771 = vld [vmem:[%s593 + $0x30] sm:$0xff]
      %v772 = vld [vmem:[%s593 + $0x38] sm:$0xff]
      %v773 = vld [vmem:[%s593 + $0x48] sm:$0xff]
      %v774 = vld [vmem:[%s593 + $0x50] sm:$0xff]
      %v775 = vld [vmem:[%s593 + $0x60] sm:$0xff]
      %v776 = vld [vmem:[%s593 + $0x68] sm:$0xff]
      %v777 = vld [vmem:[%s593 + $0x78] sm:$0xff]
      %v778 = vld [vmem:[%s593 + $0x80] sm:$0xff]
      %v779 = vld [vmem:[%s593 + $0x90] sm:$0xff]
      %v780 = vld [vmem:[%s593 + $0x98] sm:$0xff]
      %v781 = vld [vmem:[%s593 + $0xa8] sm:$0xff]
      %v782 = vld [vmem:[%s593 + $0xb0] sm:$0xff]
      %783 = vst [vmem:[#allocation3 + $0x18] sm:$0xff] %v767
      %784 = vst [vmem:[#allocation3 + $0x60] sm:$0xff] %v768
      %785 = vst [vmem:[#allocation3 + $0xa8] sm:$0xff] %v769
      %786 = vst [vmem:[#allocation3 + $0xf0] sm:$0xff] %v770
      %787 = vst [vmem:[#allocation3 + $0x138] sm:$0xff] %v771
      %788 = vst [vmem:[#allocation3 + $0x180] sm:$0xff] %v772
      %789 = vst [vmem:[#allocation3 + $0x1c8] sm:$0xff] %v773
      %790 = vst [vmem:[#allocation3 + $0x210] sm:$0xff] %v774
      %791 = vst [vmem:[#allocation3 + $0x258] sm:$0xff] %v775
      %792 = vst [vmem:[#allocation3 + $0x2a0] sm:$0xff] %v776
      %793 = vst [vmem:[#allocation3 + $0x2e8] sm:$0xff] %v777
      %794 = vst [vmem:[#allocation3 + $0x330] sm:$0xff] %v778
      %795 = vst [vmem:[#allocation3 + $0x378] sm:$0xff] %v779
      %796 = vst [vmem:[#allocation3 + $0x3c0] sm:$0xff] %v780
      %797 = vst [vmem:[#allocation3 + $0x408] sm:$0xff] %v781
      %798 = vst [vmem:[#allocation3 + $0x450] sm:$0xff] %v782
      %v799 = vld [vmem:[%s593 + $0x1] sm:$0xff]
      %v800 = vld [vmem:[%s593 + $0x9] sm:$0xff]
      %v801 = vld [vmem:[%s593 + $0x19] sm:$0xff]
      %v802 = vld [vmem:[%s593 + $0x21] sm:$0xff]
      %v803 = vld [vmem:[%s593 + $0x31] sm:$0xff]
      %v804 = vld [vmem:[%s593 + $0x39] sm:$0xff]
      %v805 = vld [vmem:[%s593 + $0x49] sm:$0xff]
      %v806 = vld [vmem:[%s593 + $0x51] sm:$0xff]
      %v807 = vld [vmem:[%s593 + $0x61] sm:$0xff]
      %v808 = vld [vmem:[%s593 + $0x69] sm:$0xff]
      %v809 = vld [vmem:[%s593 + $0x79] sm:$0xff]
      %v810 = vld [vmem:[%s593 + $0x81] sm:$0xff]
      %v811 = vld [vmem:[%s593 + $0x91] sm:$0xff]
      %v812 = vld [vmem:[%s593 + $0x99] sm:$0xff]
      %v813 = vld [vmem:[%s593 + $0xa9] sm:$0xff]
      %v814 = vld [vmem:[%s593 + $0xb1] sm:$0xff]
      %815 = vst [vmem:[#allocation3 + $0x20] sm:$0xff] %v799
      %816 = vst [vmem:[#allocation3 + $0x68] sm:$0xff] %v800
      %817 = vst [vmem:[#allocation3 + $0xb0] sm:$0xff] %v801
      %818 = vst [vmem:[#allocation3 + $0xf8] sm:$0xff] %v802
      %819 = vst [vmem:[#allocation3 + $0x140] sm:$0xff] %v803
      %820 = vst [vmem:[#allocation3 + $0x188] sm:$0xff] %v804
      %821 = vst [vmem:[#allocation3 + $0x1d0] sm:$0xff] %v805
      %822 = vst [vmem:[#allocation3 + $0x218] sm:$0xff] %v806
      %823 = vst [vmem:[#allocation3 + $0x260] sm:$0xff] %v807
      %824 = vst [vmem:[#allocation3 + $0x2a8] sm:$0xff] %v808
      %825 = vst [vmem:[#allocation3 + $0x2f0] sm:$0xff] %v809
      %826 = vst [vmem:[#allocation3 + $0x338] sm:$0xff] %v810
      %827 = vst [vmem:[#allocation3 + $0x380] sm:$0xff] %v811
      %828 = vst [vmem:[#allocation3 + $0x3c8] sm:$0xff] %v812
      %829 = vst [vmem:[#allocation3 + $0x410] sm:$0xff] %v813
      %830 = vst [vmem:[#allocation3 + $0x458] sm:$0xff] %v814
      %v831 = vld [vmem:[%s593 + $0x2] sm:$0xff]
      %v832 = vld [vmem:[%s593 + $0xa] sm:$0xff]
      %v833 = vld [vmem:[%s593 + $0x1a] sm:$0xff]
      %v834 = vld [vmem:[%s593 + $0x22] sm:$0xff]
      %v835 = vld [vmem:[%s593 + $0x32] sm:$0xff]
      %v836 = vld [vmem:[%s593 + $0x3a] sm:$0xff]
      %v837 = vld [vmem:[%s593 + $0x4a] sm:$0xff]
      %v838 = vld [vmem:[%s593 + $0x52] sm:$0xff]
      %v839 = vld [vmem:[%s593 + $0x62] sm:$0xff]
      %v840 = vld [vmem:[%s593 + $0x6a] sm:$0xff]
      %v841 = vld [vmem:[%s593 + $0x7a] sm:$0xff]
      %v842 = vld [vmem:[%s593 + $0x82] sm:$0xff]
      %v843 = vld [vmem:[%s593 + $0x92] sm:$0xff]
      %v844 = vld [vmem:[%s593 + $0x9a] sm:$0xff]
      %v845 = vld [vmem:[%s593 + $0xaa] sm:$0xff]
      %v846 = vld [vmem:[%s593 + $0xb2] sm:$0xff]
      %847 = vst [vmem:[#allocation3 + $0x28] sm:$0xff] %v831
      %848 = vst [vmem:[#allocation3 + $0x70] sm:$0xff] %v832
      %849 = vst [vmem:[#allocation3 + $0xb8] sm:$0xff] %v833
      %850 = vst [vmem:[#allocation3 + $0x100] sm:$0xff] %v834
      %851 = vst [vmem:[#allocation3 + $0x148] sm:$0xff] %v835
      %852 = vst [vmem:[#allocation3 + $0x190] sm:$0xff] %v836
      %853 = vst [vmem:[#allocation3 + $0x1d8] sm:$0xff] %v837
      %854 = vst [vmem:[#allocation3 + $0x220] sm:$0xff] %v838
      %855 = vst [vmem:[#allocation3 + $0x268] sm:$0xff] %v839
      %856 = vst [vmem:[#allocation3 + $0x2b0] sm:$0xff] %v840
      %857 = vst [vmem:[#allocation3 + $0x2f8] sm:$0xff] %v841
      %858 = vst [vmem:[#allocation3 + $0x340] sm:$0xff] %v842
      %859 = vst [vmem:[#allocation3 + $0x388] sm:$0xff] %v843
      %860 = vst [vmem:[#allocation3 + $0x3d0] sm:$0xff] %v844
      %861 = vst [vmem:[#allocation3 + $0x418] sm:$0xff] %v845
      %862 = vst [vmem:[#allocation3 + $0x460] sm:$0xff] %v846
      %s863 = scalar_lea.vmem [#allocation2], 48
      %v864 = vld [vmem:[%s863] sm:$0xff]
      %v865 = vld [vmem:[%s863 + $0x8] sm:$0xff]
      %v866 = vld [vmem:[%s863 + $0x18] sm:$0xff]
      %v867 = vld [vmem:[%s863 + $0x20] sm:$0xff]
      %v868 = vld [vmem:[%s863 + $0x30] sm:$0xff]
      %v869 = vld [vmem:[%s863 + $0x38] sm:$0xff]
      %v870 = vld [vmem:[%s863 + $0x48] sm:$0xff]
      %v871 = vld [vmem:[%s863 + $0x50] sm:$0xff]
      %v872 = vld [vmem:[%s863 + $0x60] sm:$0xff]
      %v873 = vld [vmem:[%s863 + $0x68] sm:$0xff]
      %v874 = vld [vmem:[%s863 + $0x78] sm:$0xff]
      %v875 = vld [vmem:[%s863 + $0x80] sm:$0xff]
      %v876 = vld [vmem:[%s863 + $0x90] sm:$0xff]
      %v877 = vld [vmem:[%s863 + $0x98] sm:$0xff]
      %v878 = vld [vmem:[%s863 + $0xa8] sm:$0xff]
      %v879 = vld [vmem:[%s863 + $0xb0] sm:$0xff]
      %880 = vst [vmem:[#allocation3 + $0x30] sm:$0xff] %v864
      %881 = vst [vmem:[#allocation3 + $0x78] sm:$0xff] %v865
      %882 = vst [vmem:[#allocation3 + $0xc0] sm:$0xff] %v866
      %883 = vst [vmem:[#allocation3 + $0x108] sm:$0xff] %v867
      %884 = vst [vmem:[#allocation3 + $0x150] sm:$0xff] %v868
      %885 = vst [vmem:[#allocation3 + $0x198] sm:$0xff] %v869
      %886 = vst [vmem:[#allocation3 + $0x1e0] sm:$0xff] %v870
      %887 = vst [vmem:[#allocation3 + $0x228] sm:$0xff] %v871
      %888 = vst [vmem:[#allocation3 + $0x270] sm:$0xff] %v872
      %889 = vst [vmem:[#allocation3 + $0x2b8] sm:$0xff] %v873
      %890 = vst [vmem:[#allocation3 + $0x300] sm:$0xff] %v874
      %891 = vst [vmem:[#allocation3 + $0x348] sm:$0xff] %v875
      %892 = vst [vmem:[#allocation3 + $0x390] sm:$0xff] %v876
      %893 = vst [vmem:[#allocation3 + $0x3d8] sm:$0xff] %v877
      %894 = vst [vmem:[#allocation3 + $0x420] sm:$0xff] %v878
      %895 = vst [vmem:[#allocation3 + $0x468] sm:$0xff] %v879
      %v896 = vld [vmem:[%s863 + $0x1] sm:$0xff]
      %v897 = vld [vmem:[%s863 + $0x9] sm:$0xff]
      %v898 = vld [vmem:[%s863 + $0x19] sm:$0xff]
      %v899 = vld [vmem:[%s863 + $0x21] sm:$0xff]
      %v900 = vld [vmem:[%s863 + $0x31] sm:$0xff]
      %v901 = vld [vmem:[%s863 + $0x39] sm:$0xff]
      %v902 = vld [vmem:[%s863 + $0x49] sm:$0xff]
      %v903 = vld [vmem:[%s863 + $0x51] sm:$0xff]
      %v904 = vld [vmem:[%s863 + $0x61] sm:$0xff]
      %v905 = vld [vmem:[%s863 + $0x69] sm:$0xff]
      %v906 = vld [vmem:[%s863 + $0x79] sm:$0xff]
      %v907 = vld [vmem:[%s863 + $0x81] sm:$0xff]
      %v908 = vld [vmem:[%s863 + $0x91] sm:$0xff]
      %v909 = vld [vmem:[%s863 + $0x99] sm:$0xff]
      %v910 = vld [vmem:[%s863 + $0xa9] sm:$0xff]
      %v911 = vld [vmem:[%s863 + $0xb1] sm:$0xff]
      %912 = vst [vmem:[#allocation3 + $0x38] sm:$0xff] %v896
      %913 = vst [vmem:[#allocation3 + $0x80] sm:$0xff] %v897
      %914 = vst [vmem:[#allocation3 + $0xc8] sm:$0xff] %v898
      %915 = vst [vmem:[#allocation3 + $0x110] sm:$0xff] %v899
      %916 = vst [vmem:[#allocation3 + $0x158] sm:$0xff] %v900
      %917 = vst [vmem:[#allocation3 + $0x1a0] sm:$0xff] %v901
      %918 = vst [vmem:[#allocation3 + $0x1e8] sm:$0xff] %v902
      %919 = vst [vmem:[#allocation3 + $0x230] sm:$0xff] %v903
      %920 = vst [vmem:[#allocation3 + $0x278] sm:$0xff] %v904
      %921 = vst [vmem:[#allocation3 + $0x2c0] sm:$0xff] %v905
      %922 = vst [vmem:[#allocation3 + $0x308] sm:$0xff] %v906
      %923 = vst [vmem:[#allocation3 + $0x350] sm:$0xff] %v907
      %924 = vst [vmem:[#allocation3 + $0x398] sm:$0xff] %v908
      %925 = vst [vmem:[#allocation3 + $0x3e0] sm:$0xff] %v909
      %926 = vst [vmem:[#allocation3 + $0x428] sm:$0xff] %v910
      %927 = vst [vmem:[#allocation3 + $0x470] sm:$0xff] %v911
      %v928 = vld [vmem:[%s863 + $0x2] sm:$0xff]
      %v929 = vld [vmem:[%s863 + $0xa] sm:$0xff]
      %v930 = vld [vmem:[%s863 + $0x1a] sm:$0xff]
      %v931 = vld [vmem:[%s863 + $0x22] sm:$0xff]
      %v932 = vld [vmem:[%s863 + $0x32] sm:$0xff]
      %v933 = vld [vmem:[%s863 + $0x3a] sm:$0xff]
      %v934 = vld [vmem:[%s863 + $0x4a] sm:$0xff]
      %v935 = vld [vmem:[%s863 + $0x52] sm:$0xff]
      %v936 = vld [vmem:[%s863 + $0x62] sm:$0xff]
      %v937 = vld [vmem:[%s863 + $0x6a] sm:$0xff]
      %v938 = vld [vmem:[%s863 + $0x7a] sm:$0xff]
      %v939 = vld [vmem:[%s863 + $0x82] sm:$0xff]
      %v940 = vld [vmem:[%s863 + $0x92] sm:$0xff]
      %v941 = vld [vmem:[%s863 + $0x9a] sm:$0xff]
      %v942 = vld [vmem:[%s863 + $0xaa] sm:$0xff]
      %v943 = vld [vmem:[%s863 + $0xb2] sm:$0xff]
      %944 = vst [vmem:[#allocation3 + $0x40] sm:$0xff] %v928
      %945 = vst [vmem:[#allocation3 + $0x88] sm:$0xff] %v929
      %946 = vst [vmem:[#allocation3 + $0xd0] sm:$0xff] %v930
      %947 = vst [vmem:[#allocation3 + $0x118] sm:$0xff] %v931
      %948 = vst [vmem:[#allocation3 + $0x160] sm:$0xff] %v932
      %949 = vst [vmem:[#allocation3 + $0x1a8] sm:$0xff] %v933
      %950 = vst [vmem:[#allocation3 + $0x1f0] sm:$0xff] %v934
      %951 = vst [vmem:[#allocation3 + $0x238] sm:$0xff] %v935
      %952 = vst [vmem:[#allocation3 + $0x280] sm:$0xff] %v936
      %953 = vst [vmem:[#allocation3 + $0x2c8] sm:$0xff] %v937
      %954 = vst [vmem:[#allocation3 + $0x310] sm:$0xff] %v938
      %955 = vst [vmem:[#allocation3 + $0x358] sm:$0xff] %v939
      %956 = vst [vmem:[#allocation3 + $0x3a0] sm:$0xff] %v940
      %957 = vst [vmem:[#allocation3 + $0x3e8] sm:$0xff] %v941
      %958 = vst [vmem:[#allocation3 + $0x430] sm:$0xff] %v942
      %959 = vst [vmem:[#allocation3 + $0x478] sm:$0xff] %v943
      %v960 = vld [vmem:[#allocation3] sm:$0xff]
      %v961 = vld [vmem:[#allocation3 + $0x8] sm:$0xff]
      %v962 = vld [vmem:[#allocation3 + $0x10] sm:$0xff]
      %v963 = vld [vmem:[#allocation3 + $0x18] sm:$0xff]
      %v964 = vld [vmem:[#allocation3 + $0x20] sm:$0xff]
      %v965 = vld [vmem:[#allocation3 + $0x28] sm:$0xff]
      %v966 = vld [vmem:[#allocation3 + $0x30] sm:$0xff]
      %v967 = vld [vmem:[#allocation3 + $0x38] sm:$0xff]
      %v968 = vld [vmem:[#allocation3 + $0x40] sm:$0xff]
      %v969 = vld [vmem:[#allocation3 + $0x48] sm:$0xff]
      %v970 = vld [vmem:[#allocation3 + $0x50] sm:$0xff]
      %v971 = vld [vmem:[#allocation3 + $0x58] sm:$0xff]
      %v972 = vld [vmem:[#allocation3 + $0x60] sm:$0xff]
      %v973 = vld [vmem:[#allocation3 + $0x68] sm:$0xff]
      %v974 = vld [vmem:[#allocation3 + $0x70] sm:$0xff]
      %v975 = vld [vmem:[#allocation3 + $0x78] sm:$0xff]
      %v976 = vld [vmem:[#allocation3 + $0x80] sm:$0xff]
      %v977 = vld [vmem:[#allocation3 + $0x88] sm:$0xff]
      %v978 = vld [vmem:[#allocation3 + $0x90] sm:$0xff]
      %v979 = vld [vmem:[#allocation3 + $0x98] sm:$0xff]
      %v980 = vld [vmem:[#allocation3 + $0xa0] sm:$0xff]
      %v981 = vld [vmem:[#allocation3 + $0xa8] sm:$0xff]
      %v982 = vld [vmem:[#allocation3 + $0xb0] sm:$0xff]
      %v983 = vld [vmem:[#allocation3 + $0xb8] sm:$0xff]
      %v984 = vld [vmem:[#allocation3 + $0xc0] sm:$0xff]
      %v985 = vld [vmem:[#allocation3 + $0xc8] sm:$0xff]
      %v986 = vld [vmem:[#allocation3 + $0xd0] sm:$0xff]
      %v987 = vld [vmem:[#allocation3 + $0xd8] sm:$0xff]
      %v988 = vld [vmem:[#allocation3 + $0xe0] sm:$0xff]
      %v989 = vld [vmem:[#allocation3 + $0xe8] sm:$0xff]
      %v990 = vld [vmem:[#allocation3 + $0xf0] sm:$0xff]
      %v991 = vld [vmem:[#allocation3 + $0xf8] sm:$0xff]
      %v992 = vld [vmem:[#allocation3 + $0x100] sm:$0xff]
      %v993 = vld [vmem:[#allocation3 + $0x108] sm:$0xff]
      %v994 = vld [vmem:[#allocation3 + $0x110] sm:$0xff]
      %v995 = vld [vmem:[#allocation3 + $0x118] sm:$0xff]
      %v996 = vld [vmem:[#allocation3 + $0x120] sm:$0xff]
      %v997 = vld [vmem:[#allocation3 + $0x128] sm:$0xff]
      %v998 = vld [vmem:[#allocation3 + $0x130] sm:$0xff]
      %v999 = vld [vmem:[#allocation3 + $0x138] sm:$0xff]
      %v1000 = vld [vmem:[#allocation3 + $0x140] sm:$0xff]
      %v1001 = vld [vmem:[#allocation3 + $0x148] sm:$0xff]
      %v1002 = vld [vmem:[#allocation3 + $0x150] sm:$0xff]
      %v1003 = vld [vmem:[#allocation3 + $0x158] sm:$0xff]
      %v1004 = vld [vmem:[#allocation3 + $0x160] sm:$0xff]
      %v1005 = vld [vmem:[#allocation3 + $0x168] sm:$0xff]
      %v1006 = vld [vmem:[#allocation3 + $0x170] sm:$0xff]
      %v1007 = vld [vmem:[#allocation3 + $0x178] sm:$0xff]
      %v1008 = vld [vmem:[#allocation3 + $0x180] sm:$0xff]
      %v1009 = vld [vmem:[#allocation3 + $0x188] sm:$0xff]
      %v1010 = vld [vmem:[#allocation3 + $0x190] sm:$0xff]
      %v1011 = vld [vmem:[#allocation3 + $0x198] sm:$0xff]
      %v1012 = vld [vmem:[#allocation3 + $0x1a0] sm:$0xff]
      %v1013 = vld [vmem:[#allocation3 + $0x1a8] sm:$0xff]
      %v1014 = vld [vmem:[#allocation3 + $0x1b0] sm:$0xff]
      %v1015 = vld [vmem:[#allocation3 + $0x1b8] sm:$0xff]
      %v1016 = vld [vmem:[#allocation3 + $0x1c0] sm:$0xff]
      %v1017 = vld [vmem:[#allocation3 + $0x1c8] sm:$0xff]
      %v1018 = vld [vmem:[#allocation3 + $0x1d0] sm:$0xff]
      %v1019 = vld [vmem:[#allocation3 + $0x1d8] sm:$0xff]
      %v1020 = vld [vmem:[#allocation3 + $0x1e0] sm:$0xff]
      %v1021 = vld [vmem:[#allocation3 + $0x1e8] sm:$0xff]
      %v1022 = vld [vmem:[#allocation3 + $0x1f0] sm:$0xff]
      %v1023 = vld [vmem:[#allocation3 + $0x1f8] sm:$0xff]
      %v1024 = vld [vmem:[#allocation3 + $0x200] sm:$0xff]
      %v1025 = vld [vmem:[#allocation3 + $0x208] sm:$0xff]
      %v1026 = vld [vmem:[#allocation3 + $0x210] sm:$0xff]
      %v1027 = vld [vmem:[#allocation3 + $0x218] sm:$0xff]
      %v1028 = vld [vmem:[#allocation3 + $0x220] sm:$0xff]
      %v1029 = vld [vmem:[#allocation3 + $0x228] sm:$0xff]
      %v1030 = vld [vmem:[#allocation3 + $0x230] sm:$0xff]
      %v1031 = vld [vmem:[#allocation3 + $0x238] sm:$0xff]
      %v1032 = vld [vmem:[#allocation3 + $0x240] sm:$0xff]
      %v1033 = vld [vmem:[#allocation3 + $0x248] sm:$0xff]
      %v1034 = vld [vmem:[#allocation3 + $0x250] sm:$0xff]
      %v1035 = vld [vmem:[#allocation3 + $0x258] sm:$0xff]
      %v1036 = vld [vmem:[#allocation3 + $0x260] sm:$0xff]
      %v1037 = vld [vmem:[#allocation3 + $0x268] sm:$0xff]
      %v1038 = vld [vmem:[#allocation3 + $0x270] sm:$0xff]
      %v1039 = vld [vmem:[#allocation3 + $0x278] sm:$0xff]
      %v1040 = vld [vmem:[#allocation3 + $0x280] sm:$0xff]
      %v1041 = vld [vmem:[#allocation3 + $0x288] sm:$0xff]
      %v1042 = vld [vmem:[#allocation3 + $0x290] sm:$0xff]
      %v1043 = vld [vmem:[#allocation3 + $0x298] sm:$0xff]
      %v1044 = vld [vmem:[#allocation3 + $0x2a0] sm:$0xff]
      %v1045 = vld [vmem:[#allocation3 + $0x2a8] sm:$0xff]
      %v1046 = vld [vmem:[#allocation3 + $0x2b0] sm:$0xff]
      %v1047 = vld [vmem:[#allocation3 + $0x2b8] sm:$0xff]
      %v1048 = vld [vmem:[#allocation3 + $0x2c0] sm:$0xff]
      %v1049 = vld [vmem:[#allocation3 + $0x2c8] sm:$0xff]
      %v1050 = vld [vmem:[#allocation3 + $0x2d0] sm:$0xff]
      %v1051 = vld [vmem:[#allocation3 + $0x2d8] sm:$0xff]
      %v1052 = vld [vmem:[#allocation3 + $0x2e0] sm:$0xff]
      %v1053 = vld [vmem:[#allocation3 + $0x2e8] sm:$0xff]
      %v1054 = vld [vmem:[#allocation3 + $0x2f0] sm:$0xff]
      %v1055 = vld [vmem:[#allocation3 + $0x2f8] sm:$0xff]
      %v1056 = vld [vmem:[#allocation3 + $0x300] sm:$0xff]
      %v1057 = vld [vmem:[#allocation3 + $0x308] sm:$0xff]
      %v1058 = vld [vmem:[#allocation3 + $0x310] sm:$0xff]
      %v1059 = vld [vmem:[#allocation3 + $0x318] sm:$0xff]
      %v1060 = vld [vmem:[#allocation3 + $0x320] sm:$0xff]
      %v1061 = vld [vmem:[#allocation3 + $0x328] sm:$0xff]
      %v1062 = vld [vmem:[#allocation3 + $0x330] sm:$0xff]
      %v1063 = vld [vmem:[#allocation3 + $0x338] sm:$0xff]
      %v1064 = vld [vmem:[#allocation3 + $0x340] sm:$0xff]
      %v1065 = vld [vmem:[#allocation3 + $0x348] sm:$0xff]
      %v1066 = vld [vmem:[#allocation3 + $0x350] sm:$0xff]
      %v1067 = vld [vmem:[#allocation3 + $0x358] sm:$0xff]
      %v1068 = vld [vmem:[#allocation3 + $0x360] sm:$0xff]
      %v1069 = vld [vmem:[#allocation3 + $0x368] sm:$0xff]
      %v1070 = vld [vmem:[#allocation3 + $0x370] sm:$0xff]
      %v1071 = vld [vmem:[#allocation3 + $0x378] sm:$0xff]
      %v1072 = vld [vmem:[#allocation3 + $0x380] sm:$0xff]
      %v1073 = vld [vmem:[#allocation3 + $0x388] sm:$0xff]
      %v1074 = vld [vmem:[#allocation3 + $0x390] sm:$0xff]
      %v1075 = vld [vmem:[#allocation3 + $0x398] sm:$0xff]
      %v1076 = vld [vmem:[#allocation3 + $0x3a0] sm:$0xff]
      %v1077 = vld [vmem:[#allocation3 + $0x3a8] sm:$0xff]
      %v1078 = vld [vmem:[#allocation3 + $0x3b0] sm:$0xff]
      %v1079 = vld [vmem:[#allocation3 + $0x3b8] sm:$0xff]
      %v1080 = vld [vmem:[#allocation3 + $0x3c0] sm:$0xff]
      %v1081 = vld [vmem:[#allocation3 + $0x3c8] sm:$0xff]
      %v1082 = vld [vmem:[#allocation3 + $0x3d0] sm:$0xff]
      %v1083 = vld [vmem:[#allocation3 + $0x3d8] sm:$0xff]
      %v1084 = vld [vmem:[#allocation3 + $0x3e0] sm:$0xff]
      %v1085 = vld [vmem:[#allocation3 + $0x3e8] sm:$0xff]
      %v1086 = vld [vmem:[#allocation3 + $0x3f0] sm:$0xff]
      %v1087 = vld [vmem:[#allocation3 + $0x3f8] sm:$0xff]
      %v1088 = vld [vmem:[#allocation3 + $0x400] sm:$0xff]
      %v1089 = vld [vmem:[#allocation3 + $0x408] sm:$0xff]
      %v1090 = vld [vmem:[#allocation3 + $0x410] sm:$0xff]
      %v1091 = vld [vmem:[#allocation3 + $0x418] sm:$0xff]
      %v1092 = vld [vmem:[#allocation3 + $0x420] sm:$0xff]
      %v1093 = vld [vmem:[#allocation3 + $0x428] sm:$0xff]
      %v1094 = vld [vmem:[#allocation3 + $0x430] sm:$0xff]
      %v1095 = vld [vmem:[#allocation3 + $0x438] sm:$0xff]
      %v1096 = vld [vmem:[#allocation3 + $0x440] sm:$0xff]
      %v1097 = vld [vmem:[#allocation3 + $0x448] sm:$0xff]
      %v1098 = vld [vmem:[#allocation3 + $0x450] sm:$0xff]
      %v1099 = vld [vmem:[#allocation3 + $0x458] sm:$0xff]
      %v1100 = vld [vmem:[#allocation3 + $0x460] sm:$0xff]
      %v1101 = vld [vmem:[#allocation3 + $0x468] sm:$0xff]
      %v1102 = vld [vmem:[#allocation3 + $0x470] sm:$0xff]
      %v1103 = vld [vmem:[#allocation3 + $0x478] sm:$0xff]
      %v1104 = vld [vmem:[%s3] sm:$0xff]
      %v1105 = vld [vmem:[%s3 + $0x8] sm:$0xff]
      %v1106 = vld [vmem:[%s3 + $0x10] sm:$0xff]
      %v1107 = vld [vmem:[%s3 + $0x18] sm:$0xff]
      %v1108 = vld [vmem:[%s3 + $0x20] sm:$0xff]
      %v1109 = vld [vmem:[%s3 + $0x28] sm:$0xff]
      %v1110 = vld [vmem:[%s3 + $0x30] sm:$0xff]
      %v1111 = vld [vmem:[%s3 + $0x38] sm:$0xff]
      %v1112 = vld [vmem:[%s3 + $0x40] sm:$0xff]
      %v1113 = vld [vmem:[%s3 + $0x48] sm:$0xff]
      %v1114 = vld [vmem:[%s3 + $0x50] sm:$0xff]
      %v1115 = vld [vmem:[%s3 + $0x58] sm:$0xff]
      %v1116 = vld [vmem:[%s3 + $0x60] sm:$0xff]
      %v1117 = vld [vmem:[%s3 + $0x68] sm:$0xff]
      %v1118 = vld [vmem:[%s3 + $0x70] sm:$0xff]
      %v1119 = vld [vmem:[%s3 + $0x78] sm:$0xff]
      %v1120 = vld [vmem:[%s3 + $0x80] sm:$0xff]
      %v1121 = vld [vmem:[%s3 + $0x88] sm:$0xff]
      %v1122 = vld [vmem:[%s3 + $0x90] sm:$0xff]
      %v1123 = vld [vmem:[%s3 + $0x98] sm:$0xff]
      %v1124 = vld [vmem:[%s3 + $0xa0] sm:$0xff]
      %v1125 = vld [vmem:[%s3 + $0xa8] sm:$0xff]
      %v1126 = vld [vmem:[%s3 + $0xb0] sm:$0xff]
      %v1127 = vld [vmem:[%s3 + $0xb8] sm:$0xff]
      %v1128 = vld [vmem:[%s3 + $0xc0] sm:$0xff]
      %v1129 = vld [vmem:[%s3 + $0xc8] sm:$0xff]
      %v1130 = vld [vmem:[%s3 + $0xd0] sm:$0xff]
      %v1131 = vld [vmem:[%s3 + $0xd8] sm:$0xff]
      %v1132 = vld [vmem:[%s3 + $0xe0] sm:$0xff]
      %v1133 = vld [vmem:[%s3 + $0xe8] sm:$0xff]
      %v1134 = vld [vmem:[%s3 + $0xf0] sm:$0xff]
      %v1135 = vld [vmem:[%s3 + $0xf8] sm:$0xff]
      %v1136 = vld [vmem:[%s3 + $0x100] sm:$0xff]
      %v1137 = vld [vmem:[%s3 + $0x108] sm:$0xff]
      %v1138 = vld [vmem:[%s3 + $0x110] sm:$0xff]
      %v1139 = vld [vmem:[%s3 + $0x118] sm:$0xff]
      %v1140 = vld [vmem:[%s3 + $0x120] sm:$0xff]
      %v1141 = vld [vmem:[%s3 + $0x128] sm:$0xff]
      %v1142 = vld [vmem:[%s3 + $0x130] sm:$0xff]
      %v1143 = vld [vmem:[%s3 + $0x138] sm:$0xff]
      %v1144 = vld [vmem:[%s3 + $0x140] sm:$0xff]
      %v1145 = vld [vmem:[%s3 + $0x148] sm:$0xff]
      %v1146 = vld [vmem:[%s3 + $0x150] sm:$0xff]
      %v1147 = vld [vmem:[%s3 + $0x158] sm:$0xff]
      %v1148 = vld [vmem:[%s3 + $0x160] sm:$0xff]
      %v1149 = vld [vmem:[%s3 + $0x168] sm:$0xff]
      %v1150 = vld [vmem:[%s3 + $0x170] sm:$0xff]
      %v1151 = vld [vmem:[%s3 + $0x178] sm:$0xff]
      %v1152 = vld [vmem:[%s3 + $0x180] sm:$0xff]
      %v1153 = vld [vmem:[%s3 + $0x188] sm:$0xff]
      %v1154 = vld [vmem:[%s3 + $0x190] sm:$0xff]
      %v1155 = vld [vmem:[%s3 + $0x198] sm:$0xff]
      %v1156 = vld [vmem:[%s3 + $0x1a0] sm:$0xff]
      %v1157 = vld [vmem:[%s3 + $0x1a8] sm:$0xff]
      %v1158 = vld [vmem:[%s3 + $0x1b0] sm:$0xff]
      %v1159 = vld [vmem:[%s3 + $0x1b8] sm:$0xff]
      %v1160 = vld [vmem:[%s3 + $0x1c0] sm:$0xff]
      %v1161 = vld [vmem:[%s3 + $0x1c8] sm:$0xff]
      %v1162 = vld [vmem:[%s3 + $0x1d0] sm:$0xff]
      %v1163 = vld [vmem:[%s3 + $0x1d8] sm:$0xff]
      %v1164 = vld [vmem:[%s3 + $0x1e0] sm:$0xff]
      %v1165 = vld [vmem:[%s3 + $0x1e8] sm:$0xff]
      %v1166 = vld [vmem:[%s3 + $0x1f0] sm:$0xff]
      %v1167 = vld [vmem:[%s3 + $0x1f8] sm:$0xff]
      %v1168 = vld [vmem:[%s3 + $0x200] sm:$0xff]
      %v1169 = vld [vmem:[%s3 + $0x208] sm:$0xff]
      %v1170 = vld [vmem:[%s3 + $0x210] sm:$0xff]
      %v1171 = vld [vmem:[%s3 + $0x218] sm:$0xff]
      %v1172 = vld [vmem:[%s3 + $0x220] sm:$0xff]
      %v1173 = vld [vmem:[%s3 + $0x228] sm:$0xff]
      %v1174 = vld [vmem:[%s3 + $0x230] sm:$0xff]
      %v1175 = vld [vmem:[%s3 + $0x238] sm:$0xff]
      %v1176 = vld [vmem:[%s3 + $0x240] sm:$0xff]
      %v1177 = vld [vmem:[%s3 + $0x248] sm:$0xff]
      %v1178 = vld [vmem:[%s3 + $0x250] sm:$0xff]
      %v1179 = vld [vmem:[%s3 + $0x258] sm:$0xff]
      %v1180 = vld [vmem:[%s3 + $0x260] sm:$0xff]
      %v1181 = vld [vmem:[%s3 + $0x268] sm:$0xff]
      %v1182 = vld [vmem:[%s3 + $0x270] sm:$0xff]
      %v1183 = vld [vmem:[%s3 + $0x278] sm:$0xff]
      %v1184 = vld [vmem:[%s3 + $0x280] sm:$0xff]
      %v1185 = vld [vmem:[%s3 + $0x288] sm:$0xff]
      %v1186 = vld [vmem:[%s3 + $0x290] sm:$0xff]
      %v1187 = vld [vmem:[%s3 + $0x298] sm:$0xff]
      %v1188 = vld [vmem:[%s3 + $0x2a0] sm:$0xff]
      %v1189 = vld [vmem:[%s3 + $0x2a8] sm:$0xff]
      %v1190 = vld [vmem:[%s3 + $0x2b0] sm:$0xff]
      %v1191 = vld [vmem:[%s3 + $0x2b8] sm:$0xff]
      %v1192 = vld [vmem:[%s3 + $0x2c0] sm:$0xff]
      %v1193 = vld [vmem:[%s3 + $0x2c8] sm:$0xff]
      %v1194 = vld [vmem:[%s3 + $0x2d0] sm:$0xff]
      %v1195 = vld [vmem:[%s3 + $0x2d8] sm:$0xff]
      %v1196 = vld [vmem:[%s3 + $0x2e0] sm:$0xff]
      %v1197 = vld [vmem:[%s3 + $0x2e8] sm:$0xff]
      %v1198 = vld [vmem:[%s3 + $0x2f0] sm:$0xff]
      %v1199 = vld [vmem:[%s3 + $0x2f8] sm:$0xff]
      %v1200 = vld [vmem:[%s3 + $0x300] sm:$0xff]
      %v1201 = vld [vmem:[%s3 + $0x308] sm:$0xff]
      %v1202 = vld [vmem:[%s3 + $0x310] sm:$0xff]
      %v1203 = vld [vmem:[%s3 + $0x318] sm:$0xff]
      %v1204 = vld [vmem:[%s3 + $0x320] sm:$0xff]
      %v1205 = vld [vmem:[%s3 + $0x328] sm:$0xff]
      %v1206 = vld [vmem:[%s3 + $0x330] sm:$0xff]
      %v1207 = vld [vmem:[%s3 + $0x338] sm:$0xff]
      %v1208 = vld [vmem:[%s3 + $0x340] sm:$0xff]
      %v1209 = vld [vmem:[%s3 + $0x348] sm:$0xff]
      %v1210 = vld [vmem:[%s3 + $0x350] sm:$0xff]
      %v1211 = vld [vmem:[%s3 + $0x358] sm:$0xff]
      %v1212 = vld [vmem:[%s3 + $0x360] sm:$0xff]
      %v1213 = vld [vmem:[%s3 + $0x368] sm:$0xff]
      %v1214 = vld [vmem:[%s3 + $0x370] sm:$0xff]
      %v1215 = vld [vmem:[%s3 + $0x378] sm:$0xff]
      %v1216 = vld [vmem:[%s3 + $0x380] sm:$0xff]
      %v1217 = vld [vmem:[%s3 + $0x388] sm:$0xff]
      %v1218 = vld [vmem:[%s3 + $0x390] sm:$0xff]
      %v1219 = vld [vmem:[%s3 + $0x398] sm:$0xff]
      %v1220 = vld [vmem:[%s3 + $0x3a0] sm:$0xff]
      %v1221 = vld [vmem:[%s3 + $0x3a8] sm:$0xff]
      %v1222 = vld [vmem:[%s3 + $0x3b0] sm:$0xff]
      %v1223 = vld [vmem:[%s3 + $0x3b8] sm:$0xff]
      %v1224 = vld [vmem:[%s3 + $0x3c0] sm:$0xff]
      %v1225 = vld [vmem:[%s3 + $0x3c8] sm:$0xff]
      %v1226 = vld [vmem:[%s3 + $0x3d0] sm:$0xff]
      %v1227 = vld [vmem:[%s3 + $0x3d8] sm:$0xff]
      %v1228 = vld [vmem:[%s3 + $0x3e0] sm:$0xff]
      %v1229 = vld [vmem:[%s3 + $0x3e8] sm:$0xff]
      %v1230 = vld [vmem:[%s3 + $0x3f0] sm:$0xff]
      %v1231 = vld [vmem:[%s3 + $0x3f8] sm:$0xff]
      %v1232 = vld [vmem:[%s3 + $0x400] sm:$0xff]
      %v1233 = vld [vmem:[%s3 + $0x408] sm:$0xff]
      %v1234 = vld [vmem:[%s3 + $0x410] sm:$0xff]
      %v1235 = vld [vmem:[%s3 + $0x418] sm:$0xff]
      %v1236 = vld [vmem:[%s3 + $0x420] sm:$0xff]
      %v1237 = vld [vmem:[%s3 + $0x428] sm:$0xff]
      %v1238 = vld [vmem:[%s3 + $0x430] sm:$0xff]
      %v1239 = vld [vmem:[%s3 + $0x438] sm:$0xff]
      %v1240 = vld [vmem:[%s3 + $0x440] sm:$0xff]
      %v1241 = vld [vmem:[%s3 + $0x448] sm:$0xff]
      %v1242 = vld [vmem:[%s3 + $0x450] sm:$0xff]
      %v1243 = vld [vmem:[%s3 + $0x458] sm:$0xff]
      %v1244 = vld [vmem:[%s3 + $0x460] sm:$0xff]
      %v1245 = vld [vmem:[%s3 + $0x468] sm:$0xff]
      %v1246 = vld [vmem:[%s3 + $0x470] sm:$0xff]
      %v1247 = vld [vmem:[%s3 + $0x478] sm:$0xff]
      %v1248 = vld [vmem:[%s4] sm:$0x1]
      %v1250 = vlaneseq
      %v1251 = vshrl.u32 %v1250, 7
      %v1252 = vsub.s32 0, %v1251
      %v1253 = vrot.slane %v1248, %v1252
      %1255 = vmatprep.subr.mxu0 0.0
      %1256 = vmatpush1.msra.mxu0 %v1119
      %1257 = vmatprep.subr.mxu0 0.0
      %1258 = vmatpush1.msra.mxu0 %v1118
      %1259 = vmatprep.subr.mxu0 0.0
      %1260 = vmatpush1.msra.mxu0 %v1117
      %1261 = vmatprep.subr.mxu0 0.0
      %1262 = vmatpush1.msra.mxu0 %v1116
      %1263 = vmatprep.subr.mxu0 0.0
      %1264 = vmatpush1.msra.mxu0 %v1115
      %1265 = vmatprep.subr.mxu0 0.0
      %1266 = vmatpush1.msra.mxu0 %v1114
      %1267 = vmatprep.subr.mxu0 0.0
      %1268 = vmatpush1.msra.mxu0 %v1113
      %1269 = vmatprep.subr.mxu0 0.0
      %1270 = vmatpush1.msra.mxu0 %v1112
      %1271 = vmatprep.subr.mxu0 0.0
      %1272 = vmatpush1.msra.mxu0 %v1111
      %1273 = vmatprep.subr.mxu0 0.0
      %1274 = vmatpush1.msra.mxu0 %v1110
      %1275 = vmatprep.subr.mxu0 0.0
      %1276 = vmatpush1.msra.mxu0 %v1109
      %1277 = vmatprep.subr.mxu0 0.0
      %1278 = vmatpush1.msra.mxu0 %v1108
      %1279 = vmatprep.subr.mxu0 0.0
      %1280 = vmatpush1.msra.mxu0 %v1107
      %1281 = vmatprep.subr.mxu0 0.0
      %1282 = vmatpush1.msra.mxu0 %v1106
      %1283 = vmatprep.subr.mxu0 0.0
      %1284 = vmatpush1.msra.mxu0 %v1105
      %1285 = vmatprep.subr.mxu0 0.0
      %1286 = vmatpush1.msra.mxu0 %v1104
      %1287 = vmatprep.subr.mxu0 0.0
      %1288 = vmatpush2.msra.mxu0 %v1135
      %1289 = vmatprep.subr.mxu0 0.0
      %1290 = vmatpush2.msra.mxu0 %v1134
      %1291 = vmatprep.subr.mxu0 0.0
      %1292 = vmatpush2.msra.mxu0 %v1133
      %1293 = vmatprep.subr.mxu0 0.0
      %1294 = vmatpush2.msra.mxu0 %v1132
      %1295 = vmatprep.subr.mxu0 0.0
      %1296 = vmatpush2.msra.mxu0 %v1131
      %1297 = vmatprep.subr.mxu0 0.0
      %1298 = vmatpush2.msra.mxu0 %v1130
      %1299 = vmatprep.subr.mxu0 0.0
      %1300 = vmatpush2.msra.mxu0 %v1129
      %1301 = vmatprep.subr.mxu0 0.0
      %1302 = vmatpush2.msra.mxu0 %v1128
      %1303 = vmatprep.subr.mxu0 0.0
      %1304 = vmatpush2.msra.mxu0 %v1127
      %1305 = vmatprep.subr.mxu0 0.0
      %1306 = vmatpush2.msra.mxu0 %v1126
      %1307 = vmatprep.subr.mxu0 0.0
      %1308 = vmatpush2.msra.mxu0 %v1125
      %1309 = vmatprep.subr.mxu0 0.0
      %1310 = vmatpush2.msra.mxu0 %v1124
      %1311 = vmatprep.subr.mxu0 0.0
      %1312 = vmatpush2.msra.mxu0 %v1123
      %1313 = vmatprep.subr.mxu0 0.0
      %1314 = vmatpush2.msra.mxu0 %v1122
      %1315 = vmatprep.subr.mxu0 0.0
      %1316 = vmatpush2.msra.mxu0 %v1121
      %1317 = vmatprep.subr.mxu0 0.0
      %1318 = vmatpush2.msra.mxu0 %v1120
      %1319 = vmatprep.mubr.f32.mxu0 %v961
      %1320 = vmatmul.mubr.f32.gmra.mxu0 %v960
      %v1321 = vpop.f32.mrf.mxu0
      %v1322 = vadd.f32 %v1253, %v1321
      %v1323 = vpop.f32.mrf.mxu0
      %1324 = vmatprep.mubr.f32.mxu0 %v970
      %1325 = vmatmul.mubr.f32.gmra.mxu0 %v969
      %v1326 = vpop.f32.mrf.mxu0
      %v1327 = vadd.f32 %v1253, %v1326
      %v1328 = vpop.f32.mrf.mxu0
      %1329 = vmatprep.mubr.f32.mxu0 %v979
      %1330 = vmatmul.mubr.f32.gmra.mxu0 %v978
      %v1331 = vpop.f32.mrf.mxu0
      %v1332 = vadd.f32 %v1253, %v1331
      %v1333 = vpop.f32.mrf.mxu0
      %1334 = vmatprep.mubr.f32.mxu0 %v988
      %1335 = vmatmul.mubr.f32.gmra.mxu0 %v987
      %v1336 = vpop.f32.mrf.mxu0
      %v1337 = vadd.f32 %v1253, %v1336
      %v1338 = vpop.f32.mrf.mxu0
      %1339 = vmatprep.mubr.f32.mxu0 %v997
      %1340 = vmatmul.mubr.f32.gmra.mxu0 %v996
      %v1341 = vpop.f32.mrf.mxu0
      %v1342 = vadd.f32 %v1253, %v1341
      %v1343 = vpop.f32.mrf.mxu0
      %1344 = vmatprep.mubr.f32.mxu0 %v1006
      %1345 = vmatmul.mubr.f32.gmra.mxu0 %v1005
      %v1346 = vpop.f32.mrf.mxu0
      %v1347 = vadd.f32 %v1253, %v1346
      %v1348 = vpop.f32.mrf.mxu0
      %1349 = vmatprep.mubr.f32.mxu0 %v1015
      %1350 = vmatmul.mubr.f32.gmra.mxu0 %v1014
      %v1351 = vpop.f32.mrf.mxu0
      %v1352 = vadd.f32 %v1253, %v1351
      %v1353 = vpop.f32.mrf.mxu0
      %1354 = vmatprep.mubr.f32.mxu0 %v1024
      %1355 = vmatmul.mubr.f32.gmra.mxu0 %v1023
      %v1356 = vpop.f32.mrf.mxu0
      %v1357 = vadd.f32 %v1253, %v1356
      %v1358 = vpop.f32.mrf.mxu0
      %1359 = vmatprep.mubr.f32.mxu0 %v1033
      %1360 = vmatmul.mubr.f32.gmra.mxu0 %v1032
      %v1361 = vpop.f32.mrf.mxu0
      %v1362 = vadd.f32 %v1253, %v1361
      %v1363 = vpop.f32.mrf.mxu0
      %1364 = vmatprep.mubr.f32.mxu0 %v1042
      %1365 = vmatmul.mubr.f32.gmra.mxu0 %v1041
      %v1366 = vpop.f32.mrf.mxu0
      %v1367 = vadd.f32 %v1253, %v1366
      %v1368 = vpop.f32.mrf.mxu0
      %1369 = vmatprep.mubr.f32.mxu0 %v1051
      %1370 = vmatmul.mubr.f32.gmra.mxu0 %v1050
      %v1371 = vpop.f32.mrf.mxu0
      %v1372 = vadd.f32 %v1253, %v1371
      %v1373 = vpop.f32.mrf.mxu0
      %1374 = vmatprep.mubr.f32.mxu0 %v1060
      %1375 = vmatmul.mubr.f32.gmra.mxu0 %v1059
      %v1376 = vpop.f32.mrf.mxu0
      %v1377 = vadd.f32 %v1253, %v1376
      %v1378 = vpop.f32.mrf.mxu0
      %1379 = vmatprep.mubr.f32.mxu0 %v1069
      %1380 = vmatmul.mubr.f32.gmra.mxu0 %v1068
      %v1381 = vpop.f32.mrf.mxu0
      %v1382 = vadd.f32 %v1253, %v1381
      %v1383 = vpop.f32.mrf.mxu0
      %1384 = vmatprep.mubr.f32.mxu0 %v1078
      %1385 = vmatmul.mubr.f32.gmra.mxu0 %v1077
      %v1386 = vpop.f32.mrf.mxu0
      %v1387 = vadd.f32 %v1253, %v1386
      %v1388 = vpop.f32.mrf.mxu0
      %1389 = vmatprep.mubr.f32.mxu0 %v1087
      %1390 = vmatmul.mubr.f32.gmra.mxu0 %v1086
      %v1391 = vpop.f32.mrf.mxu0
      %v1392 = vadd.f32 %v1253, %v1391
      %v1393 = vpop.f32.mrf.mxu0
      %1394 = vmatprep.mubr.f32.mxu0 %v1096
      %1395 = vmatmul.mubr.f32.gmra.mxu0 %v1095
      %v1396 = vpop.f32.mrf.mxu0
      %v1397 = vadd.f32 %v1253, %v1396
      %v1398 = vpop.f32.mrf.mxu0
      %1399 = vdwg.mxu0
      %1400 = vmatprep.subr.mxu0 0.0
      %1401 = vmatpush1.msra.mxu0 %v1151
      %1402 = vmatprep.subr.mxu0 0.0
      %1403 = vmatpush1.msra.mxu0 %v1150
      %1404 = vmatprep.subr.mxu0 0.0
      %1405 = vmatpush1.msra.mxu0 %v1149
      %1406 = vmatprep.subr.mxu0 0.0
      %1407 = vmatpush1.msra.mxu0 %v1148
      %1408 = vmatprep.subr.mxu0 0.0
      %1409 = vmatpush1.msra.mxu0 %v1147
      %1410 = vmatprep.subr.mxu0 0.0
      %1411 = vmatpush1.msra.mxu0 %v1146
      %1412 = vmatprep.subr.mxu0 0.0
      %1413 = vmatpush1.msra.mxu0 %v1145
      %1414 = vmatprep.subr.mxu0 0.0
      %1415 = vmatpush1.msra.mxu0 %v1144
      %1416 = vmatprep.subr.mxu0 0.0
      %1417 = vmatpush1.msra.mxu0 %v1143
      %1418 = vmatprep.subr.mxu0 0.0
      %1419 = vmatpush1.msra.mxu0 %v1142
      %1420 = vmatprep.subr.mxu0 0.0
      %1421 = vmatpush1.msra.mxu0 %v1141
      %1422 = vmatprep.subr.mxu0 0.0
      %1423 = vmatpush1.msra.mxu0 %v1140
      %1424 = vmatprep.subr.mxu0 0.0
      %1425 = vmatpush1.msra.mxu0 %v1139
      %1426 = vmatprep.subr.mxu0 0.0
      %1427 = vmatpush1.msra.mxu0 %v1138
      %1428 = vmatprep.subr.mxu0 0.0
      %1429 = vmatpush1.msra.mxu0 %v1137
      %1430 = vmatprep.subr.mxu0 0.0
      %1431 = vmatpush1.msra.mxu0 %v1136
      %1432 = vmatprep.subr.mxu0 0.0
      %1433 = vmatpush2.msra.mxu0 %v1167
      %1434 = vmatprep.subr.mxu0 0.0
      %1435 = vmatpush2.msra.mxu0 %v1166
      %1436 = vmatprep.subr.mxu0 0.0
      %1437 = vmatpush2.msra.mxu0 %v1165
      %1438 = vmatprep.subr.mxu0 0.0
      %1439 = vmatpush2.msra.mxu0 %v1164
      %1440 = vmatprep.subr.mxu0 0.0
      %1441 = vmatpush2.msra.mxu0 %v1163
      %1442 = vmatprep.subr.mxu0 0.0
      %1443 = vmatpush2.msra.mxu0 %v1162
      %1444 = vmatprep.subr.mxu0 0.0
      %1445 = vmatpush2.msra.mxu0 %v1161
      %1446 = vmatprep.subr.mxu0 0.0
      %1447 = vmatpush2.msra.mxu0 %v1160
      %1448 = vmatprep.subr.mxu0 0.0
      %1449 = vmatpush2.msra.mxu0 %v1159
      %1450 = vmatprep.subr.mxu0 0.0
      %1451 = vmatpush2.msra.mxu0 %v1158
      %1452 = vmatprep.subr.mxu0 0.0
      %1453 = vmatpush2.msra.mxu0 %v1157
      %1454 = vmatprep.subr.mxu0 0.0
      %1455 = vmatpush2.msra.mxu0 %v1156
      %1456 = vmatprep.subr.mxu0 0.0
      %1457 = vmatpush2.msra.mxu0 %v1155
      %1458 = vmatprep.subr.mxu0 0.0
      %1459 = vmatpush2.msra.mxu0 %v1154
      %1460 = vmatprep.subr.mxu0 0.0
      %1461 = vmatpush2.msra.mxu0 %v1153
      %1462 = vmatprep.subr.mxu0 0.0
      %1463 = vmatpush2.msra.mxu0 %v1152
      %1464 = vmatprep.mubr.f32.mxu0 %v963
      %1465 = vmatmul.mubr.f32.gmra.mxu0 %v962
      %v1466 = vpop.f32.mrf.mxu0
      %v1467 = vadd.f32 %v1322, %v1466
      %v1468 = vpop.f32.mrf.mxu0
      %1469 = vmatprep.mubr.f32.mxu0 %v972
      %1470 = vmatmul.mubr.f32.gmra.mxu0 %v971
      %v1471 = vpop.f32.mrf.mxu0
      %v1472 = vadd.f32 %v1327, %v1471
      %v1473 = vpop.f32.mrf.mxu0
      %1474 = vmatprep.mubr.f32.mxu0 %v981
      %1475 = vmatmul.mubr.f32.gmra.mxu0 %v980
      %v1476 = vpop.f32.mrf.mxu0
      %v1477 = vadd.f32 %v1332, %v1476
      %v1478 = vpop.f32.mrf.mxu0
      %1479 = vmatprep.mubr.f32.mxu0 %v990
      %1480 = vmatmul.mubr.f32.gmra.mxu0 %v989
      %v1481 = vpop.f32.mrf.mxu0
      %v1482 = vadd.f32 %v1337, %v1481
      %v1483 = vpop.f32.mrf.mxu0
      %1484 = vmatprep.mubr.f32.mxu0 %v999
      %1485 = vmatmul.mubr.f32.gmra.mxu0 %v998
      %v1486 = vpop.f32.mrf.mxu0
      %v1487 = vadd.f32 %v1342, %v1486
      %v1488 = vpop.f32.mrf.mxu0
      %1489 = vmatprep.mubr.f32.mxu0 %v1008
      %1490 = vmatmul.mubr.f32.gmra.mxu0 %v1007
      %v1491 = vpop.f32.mrf.mxu0
      %v1492 = vadd.f32 %v1347, %v1491
      %v1493 = vpop.f32.mrf.mxu0
      %1494 = vmatprep.mubr.f32.mxu0 %v1017
      %1495 = vmatmul.mubr.f32.gmra.mxu0 %v1016
      %v1496 = vpop.f32.mrf.mxu0
      %v1497 = vadd.f32 %v1352, %v1496
      %v1498 = vpop.f32.mrf.mxu0
      %1499 = vmatprep.mubr.f32.mxu0 %v1026
      %1500 = vmatmul.mubr.f32.gmra.mxu0 %v1025
      %v1501 = vpop.f32.mrf.mxu0
      %v1502 = vadd.f32 %v1357, %v1501
      %v1503 = vpop.f32.mrf.mxu0
      %1504 = vmatprep.mubr.f32.mxu0 %v1035
      %1505 = vmatmul.mubr.f32.gmra.mxu0 %v1034
      %v1506 = vpop.f32.mrf.mxu0
      %v1507 = vadd.f32 %v1362, %v1506
      %v1508 = vpop.f32.mrf.mxu0
      %1509 = vmatprep.mubr.f32.mxu0 %v1044
      %1510 = vmatmul.mubr.f32.gmra.mxu0 %v1043
      %v1511 = vpop.f32.mrf.mxu0
      %v1512 = vadd.f32 %v1367, %v1511
      %v1513 = vpop.f32.mrf.mxu0
      %1514 = vmatprep.mubr.f32.mxu0 %v1053
      %1515 = vmatmul.mubr.f32.gmra.mxu0 %v1052
      %v1516 = vpop.f32.mrf.mxu0
      %v1517 = vadd.f32 %v1372, %v1516
      %v1518 = vpop.f32.mrf.mxu0
      %1519 = vmatprep.mubr.f32.mxu0 %v1062
      %1520 = vmatmul.mubr.f32.gmra.mxu0 %v1061
      %v1521 = vpop.f32.mrf.mxu0
      %v1522 = vadd.f32 %v1377, %v1521
      %v1523 = vpop.f32.mrf.mxu0
      %1524 = vmatprep.mubr.f32.mxu0 %v1071
      %1525 = vmatmul.mubr.f32.gmra.mxu0 %v1070
      %v1526 = vpop.f32.mrf.mxu0
      %v1527 = vadd.f32 %v1382, %v1526
      %v1528 = vpop.f32.mrf.mxu0
      %1529 = vmatprep.mubr.f32.mxu0 %v1080
      %1530 = vmatmul.mubr.f32.gmra.mxu0 %v1079
      %v1531 = vpop.f32.mrf.mxu0
      %v1532 = vadd.f32 %v1387, %v1531
      %v1533 = vpop.f32.mrf.mxu0
      %1534 = vmatprep.mubr.f32.mxu0 %v1089
      %1535 = vmatmul.mubr.f32.gmra.mxu0 %v1088
      %v1536 = vpop.f32.mrf.mxu0
      %v1537 = vadd.f32 %v1392, %v1536
      %v1538 = vpop.f32.mrf.mxu0
      %1539 = vmatprep.mubr.f32.mxu0 %v1098
      %1540 = vmatmul.mubr.f32.gmra.mxu0 %v1097
      %v1541 = vpop.f32.mrf.mxu0
      %v1542 = vadd.f32 %v1397, %v1541
      %v1543 = vpop.f32.mrf.mxu0
      %1544 = vdwg.mxu0
      %1545 = vmatprep.subr.mxu0 0.0
      %1546 = vmatpush1.msra.mxu0 %v1183
      %1547 = vmatprep.subr.mxu0 0.0
      %1548 = vmatpush1.msra.mxu0 %v1182
      %1549 = vmatprep.subr.mxu0 0.0
      %1550 = vmatpush1.msra.mxu0 %v1181
      %1551 = vmatprep.subr.mxu0 0.0
      %1552 = vmatpush1.msra.mxu0 %v1180
      %1553 = vmatprep.subr.mxu0 0.0
      %1554 = vmatpush1.msra.mxu0 %v1179
      %1555 = vmatprep.subr.mxu0 0.0
      %1556 = vmatpush1.msra.mxu0 %v1178
      %1557 = vmatprep.subr.mxu0 0.0
      %1558 = vmatpush1.msra.mxu0 %v1177
      %1559 = vmatprep.subr.mxu0 0.0
      %1560 = vmatpush1.msra.mxu0 %v1176
      %1561 = vmatprep.subr.mxu0 0.0
      %1562 = vmatpush1.msra.mxu0 %v1175
      %1563 = vmatprep.subr.mxu0 0.0
      %1564 = vmatpush1.msra.mxu0 %v1174
      %1565 = vmatprep.subr.mxu0 0.0
      %1566 = vmatpush1.msra.mxu0 %v1173
      %1567 = vmatprep.subr.mxu0 0.0
      %1568 = vmatpush1.msra.mxu0 %v1172
      %1569 = vmatprep.subr.mxu0 0.0
      %1570 = vmatpush1.msra.mxu0 %v1171
      %1571 = vmatprep.subr.mxu0 0.0
      %1572 = vmatpush1.msra.mxu0 %v1170
      %1573 = vmatprep.subr.mxu0 0.0
      %1574 = vmatpush1.msra.mxu0 %v1169
      %1575 = vmatprep.subr.mxu0 0.0
      %1576 = vmatpush1.msra.mxu0 %v1168
      %1577 = vmatprep.subr.mxu0 0.0
      %1578 = vmatpush2.msra.mxu0 %v1199
      %1579 = vmatprep.subr.mxu0 0.0
      %1580 = vmatpush2.msra.mxu0 %v1198
      %1581 = vmatprep.subr.mxu0 0.0
      %1582 = vmatpush2.msra.mxu0 %v1197
      %1583 = vmatprep.subr.mxu0 0.0
      %1584 = vmatpush2.msra.mxu0 %v1196
      %1585 = vmatprep.subr.mxu0 0.0
      %1586 = vmatpush2.msra.mxu0 %v1195
      %1587 = vmatprep.subr.mxu0 0.0
      %1588 = vmatpush2.msra.mxu0 %v1194
      %1589 = vmatprep.subr.mxu0 0.0
      %1590 = vmatpush2.msra.mxu0 %v1193
      %1591 = vmatprep.subr.mxu0 0.0
      %1592 = vmatpush2.msra.mxu0 %v1192
      %1593 = vmatprep.subr.mxu0 0.0
      %1594 = vmatpush2.msra.mxu0 %v1191
      %1595 = vmatprep.subr.mxu0 0.0
      %1596 = vmatpush2.msra.mxu0 %v1190
      %1597 = vmatprep.subr.mxu0 0.0
      %1598 = vmatpush2.msra.mxu0 %v1189
      %1599 = vmatprep.subr.mxu0 0.0
      %1600 = vmatpush2.msra.mxu0 %v1188
      %1601 = vmatprep.subr.mxu0 0.0
      %1602 = vmatpush2.msra.mxu0 %v1187
      %1603 = vmatprep.subr.mxu0 0.0
      %1604 = vmatpush2.msra.mxu0 %v1186
      %1605 = vmatprep.subr.mxu0 0.0
      %1606 = vmatpush2.msra.mxu0 %v1185
      %1607 = vmatprep.subr.mxu0 0.0
      %1608 = vmatpush2.msra.mxu0 %v1184
      %1609 = vmatprep.mubr.f32.mxu0 %v965
      %1610 = vmatmul.mubr.f32.gmra.mxu0 %v964
      %v1611 = vpop.f32.mrf.mxu0
      %v1612 = vadd.f32 %v1467, %v1611
      %v1613 = vpop.f32.mrf.mxu0
      %1614 = vmatprep.mubr.f32.mxu0 %v974
      %1615 = vmatmul.mubr.f32.gmra.mxu0 %v973
      %v1616 = vpop.f32.mrf.mxu0
      %v1617 = vadd.f32 %v1472, %v1616
      %v1618 = vpop.f32.mrf.mxu0
      %1619 = vmatprep.mubr.f32.mxu0 %v983
      %1620 = vmatmul.mubr.f32.gmra.mxu0 %v982
      %v1621 = vpop.f32.mrf.mxu0
      %v1622 = vadd.f32 %v1477, %v1621
      %v1623 = vpop.f32.mrf.mxu0
      %1624 = vmatprep.mubr.f32.mxu0 %v992
      %1625 = vmatmul.mubr.f32.gmra.mxu0 %v991
      %v1626 = vpop.f32.mrf.mxu0
      %v1627 = vadd.f32 %v1482, %v1626
      %v1628 = vpop.f32.mrf.mxu0
      %1629 = vmatprep.mubr.f32.mxu0 %v1001
      %1630 = vmatmul.mubr.f32.gmra.mxu0 %v1000
      %v1631 = vpop.f32.mrf.mxu0
      %v1632 = vadd.f32 %v1487, %v1631
      %v1633 = vpop.f32.mrf.mxu0
      %1634 = vmatprep.mubr.f32.mxu0 %v1010
      %1635 = vmatmul.mubr.f32.gmra.mxu0 %v1009
      %v1636 = vpop.f32.mrf.mxu0
      %v1637 = vadd.f32 %v1492, %v1636
      %v1638 = vpop.f32.mrf.mxu0
      %1639 = vmatprep.mubr.f32.mxu0 %v1019
      %1640 = vmatmul.mubr.f32.gmra.mxu0 %v1018
      %v1641 = vpop.f32.mrf.mxu0
      %v1642 = vadd.f32 %v1497, %v1641
      %v1643 = vpop.f32.mrf.mxu0
      %1644 = vmatprep.mubr.f32.mxu0 %v1028
      %1645 = vmatmul.mubr.f32.gmra.mxu0 %v1027
      %v1646 = vpop.f32.mrf.mxu0
      %v1647 = vadd.f32 %v1502, %v1646
      %v1648 = vpop.f32.mrf.mxu0
      %1649 = vmatprep.mubr.f32.mxu0 %v1037
      %1650 = vmatmul.mubr.f32.gmra.mxu0 %v1036
      %v1651 = vpop.f32.mrf.mxu0
      %v1652 = vadd.f32 %v1507, %v1651
      %v1653 = vpop.f32.mrf.mxu0
      %1654 = vmatprep.mubr.f32.mxu0 %v1046
      %1655 = vmatmul.mubr.f32.gmra.mxu0 %v1045
      %v1656 = vpop.f32.mrf.mxu0
      %v1657 = vadd.f32 %v1512, %v1656
      %v1658 = vpop.f32.mrf.mxu0
      %1659 = vmatprep.mubr.f32.mxu0 %v1055
      %1660 = vmatmul.mubr.f32.gmra.mxu0 %v1054
      %v1661 = vpop.f32.mrf.mxu0
      %v1662 = vadd.f32 %v1517, %v1661
      %v1663 = vpop.f32.mrf.mxu0
      %1664 = vmatprep.mubr.f32.mxu0 %v1064
      %1665 = vmatmul.mubr.f32.gmra.mxu0 %v1063
      %v1666 = vpop.f32.mrf.mxu0
      %v1667 = vadd.f32 %v1522, %v1666
      %v1668 = vpop.f32.mrf.mxu0
      %1669 = vmatprep.mubr.f32.mxu0 %v1073
      %1670 = vmatmul.mubr.f32.gmra.mxu0 %v1072
      %v1671 = vpop.f32.mrf.mxu0
      %v1672 = vadd.f32 %v1527, %v1671
      %v1673 = vpop.f32.mrf.mxu0
      %1674 = vmatprep.mubr.f32.mxu0 %v1082
      %1675 = vmatmul.mubr.f32.gmra.mxu0 %v1081
      %v1676 = vpop.f32.mrf.mxu0
      %v1677 = vadd.f32 %v1532, %v1676
      %v1678 = vpop.f32.mrf.mxu0
      %1679 = vmatprep.mubr.f32.mxu0 %v1091
      %1680 = vmatmul.mubr.f32.gmra.mxu0 %v1090
      %v1681 = vpop.f32.mrf.mxu0
      %v1682 = vadd.f32 %v1537, %v1681
      %v1683 = vpop.f32.mrf.mxu0
      %1684 = vmatprep.mubr.f32.mxu0 %v1100
      %1685 = vmatmul.mubr.f32.gmra.mxu0 %v1099
      %v1686 = vpop.f32.mrf.mxu0
      %v1687 = vadd.f32 %v1542, %v1686
      %v1688 = vpop.f32.mrf.mxu0
      %1689 = vdwg.mxu0
      %1690 = vmatprep.subr.mxu0 0.0
      %1691 = vmatpush1.msra.mxu0 %v1215
      %1692 = vmatprep.subr.mxu0 0.0
      %1693 = vmatpush1.msra.mxu0 %v1214
      %1694 = vmatprep.subr.mxu0 0.0
      %1695 = vmatpush1.msra.mxu0 %v1213
      %1696 = vmatprep.subr.mxu0 0.0
      %1697 = vmatpush1.msra.mxu0 %v1212
      %1698 = vmatprep.subr.mxu0 0.0
      %1699 = vmatpush1.msra.mxu0 %v1211
      %1700 = vmatprep.subr.mxu0 0.0
      %1701 = vmatpush1.msra.mxu0 %v1210
      %1702 = vmatprep.subr.mxu0 0.0
      %1703 = vmatpush1.msra.mxu0 %v1209
      %1704 = vmatprep.subr.mxu0 0.0
      %1705 = vmatpush1.msra.mxu0 %v1208
      %1706 = vmatprep.subr.mxu0 0.0
      %1707 = vmatpush1.msra.mxu0 %v1207
      %1708 = vmatprep.subr.mxu0 0.0
      %1709 = vmatpush1.msra.mxu0 %v1206
      %1710 = vmatprep.subr.mxu0 0.0
      %1711 = vmatpush1.msra.mxu0 %v1205
      %1712 = vmatprep.subr.mxu0 0.0
      %1713 = vmatpush1.msra.mxu0 %v1204
      %1714 = vmatprep.subr.mxu0 0.0
      %1715 = vmatpush1.msra.mxu0 %v1203
      %1716 = vmatprep.subr.mxu0 0.0
      %1717 = vmatpush1.msra.mxu0 %v1202
      %1718 = vmatprep.subr.mxu0 0.0
      %1719 = vmatpush1.msra.mxu0 %v1201
      %1720 = vmatprep.subr.mxu0 0.0
      %1721 = vmatpush1.msra.mxu0 %v1200
      %1722 = vmatprep.subr.mxu0 0.0
      %1723 = vmatpush2.msra.mxu0 %v1231
      %1724 = vmatprep.subr.mxu0 0.0
      %1725 = vmatpush2.msra.mxu0 %v1230
      %1726 = vmatprep.subr.mxu0 0.0
      %1727 = vmatpush2.msra.mxu0 %v1229
      %1728 = vmatprep.subr.mxu0 0.0
      %1729 = vmatpush2.msra.mxu0 %v1228
      %1730 = vmatprep.subr.mxu0 0.0
      %1731 = vmatpush2.msra.mxu0 %v1227
      %1732 = vmatprep.subr.mxu0 0.0
      %1733 = vmatpush2.msra.mxu0 %v1226
      %1734 = vmatprep.subr.mxu0 0.0
      %1735 = vmatpush2.msra.mxu0 %v1225
      %1736 = vmatprep.subr.mxu0 0.0
      %1737 = vmatpush2.msra.mxu0 %v1224
      %1738 = vmatprep.subr.mxu0 0.0
      %1739 = vmatpush2.msra.mxu0 %v1223
      %1740 = vmatprep.subr.mxu0 0.0
      %1741 = vmatpush2.msra.mxu0 %v1222
      %1742 = vmatprep.subr.mxu0 0.0
      %1743 = vmatpush2.msra.mxu0 %v1221
      %1744 = vmatprep.subr.mxu0 0.0
      %1745 = vmatpush2.msra.mxu0 %v1220
      %1746 = vmatprep.subr.mxu0 0.0
      %1747 = vmatpush2.msra.mxu0 %v1219
      %1748 = vmatprep.subr.mxu0 0.0
      %1749 = vmatpush2.msra.mxu0 %v1218
      %1750 = vmatprep.subr.mxu0 0.0
      %1751 = vmatpush2.msra.mxu0 %v1217
      %1752 = vmatprep.subr.mxu0 0.0
      %1753 = vmatpush2.msra.mxu0 %v1216
      %1754 = vmatprep.mubr.f32.mxu0 %v967
      %1755 = vmatmul.mubr.f32.gmra.mxu0 %v966
      %v1756 = vpop.f32.mrf.mxu0
      %v1757 = vadd.f32 %v1612, %v1756
      %v1758 = vpop.f32.mrf.mxu0
      %1759 = vmatprep.mubr.f32.mxu0 %v976
      %1760 = vmatmul.mubr.f32.gmra.mxu0 %v975
      %v1761 = vpop.f32.mrf.mxu0
      %v1762 = vadd.f32 %v1617, %v1761
      %v1763 = vpop.f32.mrf.mxu0
      %1764 = vmatprep.mubr.f32.mxu0 %v985
      %1765 = vmatmul.mubr.f32.gmra.mxu0 %v984
      %v1766 = vpop.f32.mrf.mxu0
      %v1767 = vadd.f32 %v1622, %v1766
      %v1768 = vpop.f32.mrf.mxu0
      %1769 = vmatprep.mubr.f32.mxu0 %v994
      %1770 = vmatmul.mubr.f32.gmra.mxu0 %v993
      %v1771 = vpop.f32.mrf.mxu0
      %v1772 = vadd.f32 %v1627, %v1771
      %v1773 = vpop.f32.mrf.mxu0
      %1774 = vmatprep.mubr.f32.mxu0 %v1003
      %1775 = vmatmul.mubr.f32.gmra.mxu0 %v1002
      %v1776 = vpop.f32.mrf.mxu0
      %v1777 = vadd.f32 %v1632, %v1776
      %v1778 = vpop.f32.mrf.mxu0
      %1779 = vmatprep.mubr.f32.mxu0 %v1012
      %1780 = vmatmul.mubr.f32.gmra.mxu0 %v1011
      %v1781 = vpop.f32.mrf.mxu0
      %v1782 = vadd.f32 %v1637, %v1781
      %v1783 = vpop.f32.mrf.mxu0
      %1784 = vmatprep.mubr.f32.mxu0 %v1021
      %1785 = vmatmul.mubr.f32.gmra.mxu0 %v1020
      %v1786 = vpop.f32.mrf.mxu0
      %v1787 = vadd.f32 %v1642, %v1786
      %v1788 = vpop.f32.mrf.mxu0
      %1789 = vmatprep.mubr.f32.mxu0 %v1030
      %1790 = vmatmul.mubr.f32.gmra.mxu0 %v1029
      %v1791 = vpop.f32.mrf.mxu0
      %v1792 = vadd.f32 %v1647, %v1791
      %v1793 = vpop.f32.mrf.mxu0
      %1794 = vmatprep.mubr.f32.mxu0 %v1039
      %1795 = vmatmul.mubr.f32.gmra.mxu0 %v1038
      %v1796 = vpop.f32.mrf.mxu0
      %v1797 = vadd.f32 %v1652, %v1796
      %v1798 = vpop.f32.mrf.mxu0
      %1799 = vmatprep.mubr.f32.mxu0 %v1048
      %1800 = vmatmul.mubr.f32.gmra.mxu0 %v1047
      %v1801 = vpop.f32.mrf.mxu0
      %v1802 = vadd.f32 %v1657, %v1801
      %v1803 = vpop.f32.mrf.mxu0
      %1804 = vmatprep.mubr.f32.mxu0 %v1057
      %1805 = vmatmul.mubr.f32.gmra.mxu0 %v1056
      %v1806 = vpop.f32.mrf.mxu0
      %v1807 = vadd.f32 %v1662, %v1806
      %v1808 = vpop.f32.mrf.mxu0
      %1809 = vmatprep.mubr.f32.mxu0 %v1066
      %1810 = vmatmul.mubr.f32.gmra.mxu0 %v1065
      %v1811 = vpop.f32.mrf.mxu0
      %v1812 = vadd.f32 %v1667, %v1811
      %v1813 = vpop.f32.mrf.mxu0
      %1814 = vmatprep.mubr.f32.mxu0 %v1075
      %1815 = vmatmul.mubr.f32.gmra.mxu0 %v1074
      %v1816 = vpop.f32.mrf.mxu0
      %v1817 = vadd.f32 %v1672, %v1816
      %v1818 = vpop.f32.mrf.mxu0
      %1819 = vmatprep.mubr.f32.mxu0 %v1084
      %1820 = vmatmul.mubr.f32.gmra.mxu0 %v1083
      %v1821 = vpop.f32.mrf.mxu0
      %v1822 = vadd.f32 %v1677, %v1821
      %v1823 = vpop.f32.mrf.mxu0
      %1824 = vmatprep.mubr.f32.mxu0 %v1093
      %1825 = vmatmul.mubr.f32.gmra.mxu0 %v1092
      %v1826 = vpop.f32.mrf.mxu0
      %v1827 = vadd.f32 %v1682, %v1826
      %v1828 = vpop.f32.mrf.mxu0
      %1829 = vmatprep.mubr.f32.mxu0 %v1102
      %1830 = vmatmul.mubr.f32.gmra.mxu0 %v1101
      %v1831 = vpop.f32.mrf.mxu0
      %v1832 = vadd.f32 %v1687, %v1831
      %v1833 = vpop.f32.mrf.mxu0
      %1834 = vdwg.mxu0
      %1835 = vmatprep.subr.mxu0 0.0
      %1836 = vmatpush1.msra.mxu0 %v1247
      %1837 = vmatprep.subr.mxu0 0.0
      %1838 = vmatpush1.msra.mxu0 %v1246
      %1839 = vmatprep.subr.mxu0 0.0
      %1840 = vmatpush1.msra.mxu0 %v1245
      %1841 = vmatprep.subr.mxu0 0.0
      %1842 = vmatpush1.msra.mxu0 %v1244
      %1843 = vmatprep.subr.mxu0 0.0
      %1844 = vmatpush1.msra.mxu0 %v1243
      %1845 = vmatprep.subr.mxu0 0.0
      %1846 = vmatpush1.msra.mxu0 %v1242
      %1847 = vmatprep.subr.mxu0 0.0
      %1848 = vmatpush1.msra.mxu0 %v1241
      %1849 = vmatprep.subr.mxu0 0.0
      %1850 = vmatpush1.msra.mxu0 %v1240
      %1851 = vmatprep.subr.mxu0 0.0
      %1852 = vmatpush1.msra.mxu0 %v1239
      %1853 = vmatprep.subr.mxu0 0.0
      %1854 = vmatpush1.msra.mxu0 %v1238
      %1855 = vmatprep.subr.mxu0 0.0
      %1856 = vmatpush1.msra.mxu0 %v1237
      %1857 = vmatprep.subr.mxu0 0.0
      %1858 = vmatpush1.msra.mxu0 %v1236
      %1859 = vmatprep.subr.mxu0 0.0
      %1860 = vmatpush1.msra.mxu0 %v1235
      %1861 = vmatprep.subr.mxu0 0.0
      %1862 = vmatpush1.msra.mxu0 %v1234
      %1863 = vmatprep.subr.mxu0 0.0
      %1864 = vmatpush1.msra.mxu0 %v1233
      %1865 = vmatprep.subr.mxu0 0.0
      %1866 = vmatpush1.msra.mxu0 %v1232
      %1867 = vmatprep.subr.mxu0 0.0
      %1868 = vmatpush2.msra.mxu0 0.0
      %1869 = vmatprep.subr.mxu0 0.0
      %1870 = vmatpush2.msra.mxu0 0.0
      %1871 = vmatprep.subr.mxu0 0.0
      %1872 = vmatpush2.msra.mxu0 0.0
      %1873 = vmatprep.subr.mxu0 0.0
      %1874 = vmatpush2.msra.mxu0 0.0
      %1875 = vmatprep.subr.mxu0 0.0
      %1876 = vmatpush2.msra.mxu0 0.0
      %1877 = vmatprep.subr.mxu0 0.0
      %1878 = vmatpush2.msra.mxu0 0.0
      %1879 = vmatprep.subr.mxu0 0.0
      %1880 = vmatpush2.msra.mxu0 0.0
      %1881 = vmatprep.subr.mxu0 0.0
      %1882 = vmatpush2.msra.mxu0 0.0
      %1883 = vmatprep.subr.mxu0 0.0
      %1884 = vmatpush2.msra.mxu0 0.0
      %1885 = vmatprep.subr.mxu0 0.0
      %1886 = vmatpush2.msra.mxu0 0.0
      %1887 = vmatprep.subr.mxu0 0.0
      %1888 = vmatpush2.msra.mxu0 0.0
      %1889 = vmatprep.subr.mxu0 0.0
      %1890 = vmatpush2.msra.mxu0 0.0
      %1891 = vmatprep.subr.mxu0 0.0
      %1892 = vmatpush2.msra.mxu0 0.0
      %1893 = vmatprep.subr.mxu0 0.0
      %1894 = vmatpush2.msra.mxu0 0.0
      %1895 = vmatprep.subr.mxu0 0.0
      %1896 = vmatpush2.msra.mxu0 0.0
      %1897 = vmatprep.subr.mxu0 0.0
      %1898 = vmatpush2.msra.mxu0 0.0
      %1899 = vmatprep.mubr.f32.mxu0 0.0
      %1900 = vmatmul.mubr.f32.gmra.mxu0 %v968
      %v1901 = vpop.f32.mrf.mxu0
      %v1902 = vadd.f32 %v1757, %v1901
      %v1903 = vpop.f32.mrf.mxu0
      %1904 = vmatprep.mubr.f32.mxu0 0.0
      %1905 = vmatmul.mubr.f32.gmra.mxu0 %v977
      %v1906 = vpop.f32.mrf.mxu0
      %v1907 = vadd.f32 %v1762, %v1906
      %v1908 = vpop.f32.mrf.mxu0
      %1909 = vmatprep.mubr.f32.mxu0 0.0
      %1910 = vmatmul.mubr.f32.gmra.mxu0 %v986
      %v1911 = vpop.f32.mrf.mxu0
      %v1912 = vadd.f32 %v1767, %v1911
      %v1913 = vpop.f32.mrf.mxu0
      %1914 = vmatprep.mubr.f32.mxu0 0.0
      %1915 = vmatmul.mubr.f32.gmra.mxu0 %v995
      %v1916 = vpop.f32.mrf.mxu0
      %v1917 = vadd.f32 %v1772, %v1916
      %v1918 = vpop.f32.mrf.mxu0
      %1919 = vmatprep.mubr.f32.mxu0 0.0
      %1920 = vmatmul.mubr.f32.gmra.mxu0 %v1004
      %v1921 = vpop.f32.mrf.mxu0
      %v1922 = vadd.f32 %v1777, %v1921
      %v1923 = vpop.f32.mrf.mxu0
      %1924 = vmatprep.mubr.f32.mxu0 0.0
      %1925 = vmatmul.mubr.f32.gmra.mxu0 %v1013
      %v1926 = vpop.f32.mrf.mxu0
      %v1927 = vadd.f32 %v1782, %v1926
      %v1928 = vpop.f32.mrf.mxu0
      %1929 = vmatprep.mubr.f32.mxu0 0.0
      %1930 = vmatmul.mubr.f32.gmra.mxu0 %v1022
      %v1931 = vpop.f32.mrf.mxu0
      %v1932 = vadd.f32 %v1787, %v1931
      %v1933 = vpop.f32.mrf.mxu0
      %1934 = vmatprep.mubr.f32.mxu0 0.0
      %1935 = vmatmul.mubr.f32.gmra.mxu0 %v1031
      %v1936 = vpop.f32.mrf.mxu0
      %v1937 = vadd.f32 %v1792, %v1936
      %v1938 = vpop.f32.mrf.mxu0
      %1939 = vmatprep.mubr.f32.mxu0 0.0
      %1940 = vmatmul.mubr.f32.gmra.mxu0 %v1040
      %v1941 = vpop.f32.mrf.mxu0
      %v1942 = vadd.f32 %v1797, %v1941
      %v1943 = vpop.f32.mrf.mxu0
      %1944 = vmatprep.mubr.f32.mxu0 0.0
      %1945 = vmatmul.mubr.f32.gmra.mxu0 %v1049
      %v1946 = vpop.f32.mrf.mxu0
      %v1947 = vadd.f32 %v1802, %v1946
      %v1948 = vpop.f32.mrf.mxu0
      %1949 = vmatprep.mubr.f32.mxu0 0.0
      %1950 = vmatmul.mubr.f32.gmra.mxu0 %v1058
      %v1951 = vpop.f32.mrf.mxu0
      %v1952 = vadd.f32 %v1807, %v1951
      %v1953 = vpop.f32.mrf.mxu0
      %1954 = vmatprep.mubr.f32.mxu0 0.0
      %1955 = vmatmul.mubr.f32.gmra.mxu0 %v1067
      %v1956 = vpop.f32.mrf.mxu0
      %v1957 = vadd.f32 %v1812, %v1956
      %v1958 = vpop.f32.mrf.mxu0
      %1959 = vmatprep.mubr.f32.mxu0 0.0
      %1960 = vmatmul.mubr.f32.gmra.mxu0 %v1076
      %v1961 = vpop.f32.mrf.mxu0
      %v1962 = vadd.f32 %v1817, %v1961
      %v1963 = vpop.f32.mrf.mxu0
      %1964 = vmatprep.mubr.f32.mxu0 0.0
      %1965 = vmatmul.mubr.f32.gmra.mxu0 %v1085
      %v1966 = vpop.f32.mrf.mxu0
      %v1967 = vadd.f32 %v1822, %v1966
      %v1968 = vpop.f32.mrf.mxu0
      %1969 = vmatprep.mubr.f32.mxu0 0.0
      %1970 = vmatmul.mubr.f32.gmra.mxu0 %v1094
      %v1971 = vpop.f32.mrf.mxu0
      %v1972 = vadd.f32 %v1827, %v1971
      %v1973 = vpop.f32.mrf.mxu0
      %1974 = vmatprep.mubr.f32.mxu0 0.0
      %1975 = vmatmul.mubr.f32.gmra.mxu0 %v1103
      %v1976 = vpop.f32.mrf.mxu0
      %v1977 = vadd.f32 %v1832, %v1976
      %v1978 = vpop.f32.mrf.mxu0
      %1979 = vdwg.mxu0
      %v1980 = vadd.f32 %v1902, %v1907
      %v1981 = vadd.f32 %v1980, %v1912
      %v1982 = vadd.f32 %v1981, %v1917
      %v1983 = vadd.f32 %v1982, %v1922
      %v1984 = vadd.f32 %v1983, %v1927
      %v1985 = vadd.f32 %v1984, %v1932
      %v1986 = vadd.f32 %v1985, %v1937
      %v1987 = vadd.f32 %v1986, %v1942
      %v1988 = vadd.f32 %v1987, %v1947
      %v1989 = vadd.f32 %v1988, %v1952
      %v1990 = vadd.f32 %v1989, %v1957
      %v1991 = vadd.f32 %v1990, %v1962
      %v1992 = vadd.f32 %v1991, %v1967
      %v1993 = vadd.f32 %v1992, %v1972
      %v1994 = vadd.f32 %v1993, %v1977
      %v1995 = vrot.slane %v1994, 4
      %v1996 = vadd.f32 %v1994, %v1995
      %v1997 = vrot.slane %v1996, 2
      %v1998 = vadd.f32 %v1996, %v1997
      %v1999 = vrot.slane %v1998, 1
      %v2000 = vadd.f32 %v1998, %v1999
      %v2001 = vmul.f32 %v1902, %v1902
      %v2002 = vmul.f32 %v1907, %v1907
      %v2003 = vmul.f32 %v1912, %v1912
      %v2004 = vmul.f32 %v1917, %v1917
      %v2005 = vmul.f32 %v1922, %v1922
      %v2006 = vmul.f32 %v1927, %v1927
      %v2007 = vmul.f32 %v1932, %v1932
      %v2008 = vmul.f32 %v1937, %v1937
      %v2009 = vmul.f32 %v1942, %v1942
      %v2010 = vmul.f32 %v1947, %v1947
      %v2011 = vmul.f32 %v1952, %v1952
      %v2012 = vmul.f32 %v1957, %v1957
      %v2013 = vmul.f32 %v1962, %v1962
      %v2014 = vmul.f32 %v1967, %v1967
      %v2015 = vmul.f32 %v1972, %v1972
      %v2016 = vmul.f32 %v1977, %v1977
      %v2017 = vadd.f32 %v2001, %v2002
      %v2018 = vadd.f32 %v2017, %v2003
      %v2019 = vadd.f32 %v2018, %v2004
      %v2020 = vadd.f32 %v2019, %v2005
      %v2021 = vadd.f32 %v2020, %v2006
      %v2022 = vadd.f32 %v2021, %v2007
      %v2023 = vadd.f32 %v2022, %v2008
      %v2024 = vadd.f32 %v2023, %v2009
      %v2025 = vadd.f32 %v2024, %v2010
      %v2026 = vadd.f32 %v2025, %v2011
      %v2027 = vadd.f32 %v2026, %v2012
      %v2028 = vadd.f32 %v2027, %v2013
      %v2029 = vadd.f32 %v2028, %v2014
      %v2030 = vadd.f32 %v2029, %v2015
      %v2031 = vadd.f32 %v2030, %v2016
      %v2032 = vrot.slane %v2031, 4
      %v2033 = vadd.f32 %v2031, %v2032
      %v2034 = vrot.slane %v2033, 2
      %v2035 = vadd.f32 %v2033, %v2034
      %v2036 = vrot.slane %v2035, 1
      %v2037 = vadd.f32 %v2035, %v2036
      %2038 = vst [vmem:[%s494] sm:$0x1] %v2000
      %2039 = vst [vmem:[%s494 + $0x1] sm:$0x1] %v2037
      %2040 = vst [vmem:[%s485] sm:$0xff] %v1902
      %2041 = vst [vmem:[%s485 + $0x8] sm:$0xff] %v1907
      %2042 = vst [vmem:[%s485 + $0x10] sm:$0xff] %v1912
      %2043 = vst [vmem:[%s485 + $0x18] sm:$0xff] %v1917
      %2044 = vst [vmem:[%s485 + $0x20] sm:$0xff] %v1922
      %2045 = vst [vmem:[%s485 + $0x28] sm:$0xff] %v1927
      %2046 = vst [vmem:[%s485 + $0x30] sm:$0xff] %v1932
      %2047 = vst [vmem:[%s485 + $0x38] sm:$0xff] %v1937
      %2048 = vst [vmem:[%s485 + $0x40] sm:$0xff] %v1942
      %2049 = vst [vmem:[%s485 + $0x48] sm:$0xff] %v1947
      %2050 = vst [vmem:[%s485 + $0x50] sm:$0xff] %v1952
      %2051 = vst [vmem:[%s485 + $0x58] sm:$0xff] %v1957
      %2052 = vst [vmem:[%s485 + $0x60] sm:$0xff] %v1962
      %2053 = vst [vmem:[%s485 + $0x68] sm:$0xff] %v1967
      %2054 = vst [vmem:[%s485 + $0x70] sm:$0xff] %v1972
      %2055 = vst [vmem:[%s485 + $0x78] sm:$0xff] %v1977
      %s2056 = smul.u32 8, %s25
      %p2057 = scmp.lt.s32.totalorder %s24, 1
      %s2058 = scalar_select %p2057, %s24, 1
      %p2059 = scmp.lt.s32.totalorder %s2056, 15
      %s2060 = scalar_select %p2059, %s2056, 15
      %s2061 = smul.addr %s2060, 2
      %s2062 = smul.addr %s2058, 32
      %s2063 = sadd.s32 %s2061, %s2062
      %s2064 = smul.addr %s2063, 8
      %s2065 = scalar_lea.vmem %s7, %s2064
      %p2066 = scmp.lt.s32.totalorder %s24, 1
      %s2067 = scalar_select %p2066, %s24, 1
      %p2068 = scmp.lt.s32.totalorder %s25, 1
      %s2069 = scalar_select %p2068, %s25, 1
      %s2070 = smul.addr %s2067, 2
      %s2071 = sadd.s32 %s2069, %s2070
      %s2072 = smul.addr %s2071, 2
      %s2073 = scalar_lea.vmem %s8, %s2072
      // Predicated region
      $region49: #{conv_block_forward.4} parent=47 // pred_check
        %p2074 = pneg %p236
      $region50: #{conv_block_forward.4} parent=47 // pred_check_branch
        %2076 = sbr.rel (%p2074) target = $region52
      $region51: #{conv_block_forward.4} parent=47 // pred_region
        %s2077 = smul.u32 8, %s25
      $region52: #{conv_block_forward.4} parent=47 // pred_fallthru
        _
      // Predicated region
      $region53: #{conv_block_forward.4} parent=47 // pred_check
        %p2078 = pneg %p264
      $region54: #{conv_block_forward.4} parent=47 // pred_check_branch
        %2080 = sbr.rel (%p2078) target = $region56
      $region55: #{conv_block_forward.4} parent=47 // pred_region
        _
      $region56: #{conv_block_forward.4} parent=47 // pred_fallthru
        _
    $region48: #{conv_block_forward.4} parent=5 // pred_fallthru
      _
    %p2081 = scmp.le.s32.totalorder 2, %s15
    // Predicated region
    $region57: #{conv_block_forward.4} parent=5 // pred_check
      %p2082 = pneg %p2081
    $region58: #{conv_block_forward.4} parent=5 // pred_check_branch
      %2084 = sbr.rel (%p2082) target = $region60
    $region59: #{conv_block_forward.4} parent=5 // pred_region
      %s2085 = ssub.s32 %s15, 2
      // Predicated region
      $region61: #{conv_block_forward.4} parent=59 // pred_check
        %p2086 = pneg %p242
      $region62: #{conv_block_forward.4} parent=59 // pred_check_branch
        %2088 = sbr.rel (%p2086) target = $region64
      $region63: #{conv_block_forward.4} parent=59 // pred_region
        %s2089 = smul.u32 8, %s27
        %p2090 = scmp.lt.s32.totalorder %s26, 1
        %s2091 = scalar_select %p2090, %s26, 1
        %p2092 = scmp.lt.s32.totalorder %s2089, 15
        %s2093 = scalar_select %p2092, %s2089, 15
        %s2094 = smul.addr %s2093, 2
        %s2095 = smul.addr %s2091, 32
        %s2096 = sadd.s32 %s2094, %s2095
        %s2097 = smul.addr %s2096, 8
        %s2098 = scalar_lea.vmem %s7, %s2097
      $region64: #{conv_block_forward.4} parent=59 // pred_fallthru
        _
      // Predicated region
      $region65: #{conv_block_forward.4} parent=59 // pred_check
        %p2099 = pneg %p270
      $region66: #{conv_block_forward.4} parent=59 // pred_check_branch
        %2101 = sbr.rel (%p2099) target = $region68
      $region67: #{conv_block_forward.4} parent=59 // pred_region
        %p2102 = scmp.lt.s32.totalorder %s26, 1
        %s2103 = scalar_select %p2102, %s26, 1
        %p2104 = scmp.lt.s32.totalorder %s27, 1
        %s2105 = scalar_select %p2104, %s27, 1
        %s2106 = smul.addr %s2103, 2
        %s2107 = sadd.s32 %s2105, %s2106
        %s2108 = smul.addr %s2107, 2
        %s2109 = scalar_lea.vmem %s8, %s2108
      $region68: #{conv_block_forward.4} parent=59 // pred_fallthru
        _
    $region60: #{conv_block_forward.4} parent=5 // pred_fallthru
      _
  $region6: #{conv_block_forward.4} parent=0 // loop_footer
    %s19 = sadd.s32 1, %s15
  $region7: #{conv_block_forward.4} parent=0 // loop_footer_branch
    %14 = sbr.rel target = $region3
  $region8: #{conv_block_forward.4} parent=0 // loop_exit
    _

</llo_original>
